<compile_context>
chip_gen: v7x
topology: tpu7x:2x2x1
jax: 0.10.0
libtpu: 0.0.40
codegen_flags: <defaults>
</compile_context>

<pallas_src>
import functools

import jax
import jax.numpy as jnp
from jax import lax
from jax.experimental import pallas as pl
from jax.experimental.pallas import tpu as pltpu


LOGIT_PAD = 128                      # lane-dense padded width for generator logits
VMEM_LIMIT = 32 * 1024 * 1024        # explicit scoped-VMEM limit (safe on v5e/v6e/v7x)


def _lstm_cell(gates, c, H):
    """Standard LSTM cell nonlinearity.  gates: (B, 4H) pre-activations."""
    i_g = jax.nn.sigmoid(gates[:, 0 * H:1 * H])
    f_g = jax.nn.sigmoid(gates[:, 1 * H:2 * H])
    g_g = jnp.tanh(gates[:, 2 * H:3 * H])
    o_g = jax.nn.sigmoid(gates[:, 3 * H:4 * H])
    c_new = f_g * c + i_g * g_g
    h_new = o_g * jnp.tanh(c_new)
    return h_new, c_new


# --------------------------------------------------------------------------
# Unidirectional LSTM layer: ONE kernel invocation, whole sequence resident in
# VMEM, x@Wih hoisted out of the recurrence, time loop via lax.fori_loop.
# --------------------------------------------------------------------------
def _make_lstm_layer_kernel(H):
    def kernel(x_ref, h0_ref, c0_ref, wih_ref, whh_ref, b_ref, ys_ref, g_sc):
        B, T, _ = x_ref.shape
        wih = wih_ref[...]
        whh = whh_ref[...]
        bias = b_ref[...]
        # Hoisted input projection: one (T, I) @ (I, 4H) MXU matmul per batch
        # row covering ALL timesteps (instead of one M=B matmul per step).
        for bb in range(B):
            g_sc[bb] = jnp.dot(x_ref[bb], wih,
                               preferred_element_type=jnp.float32) + bias

        def step(t, carry):
            h, c = carry
            g = (g_sc[:, pl.ds(t, 1), :].reshape(B, 4 * H)
                 + jnp.dot(h, whh, preferred_element_type=jnp.float32))
            h_new, c_new = _lstm_cell(g, c, H)
            ys_ref[:, pl.ds(t, 1), :] = h_new.reshape(B, 1, H)
            return (h_new, c_new)

        lax.fori_loop(0, T, step, (h0_ref[...], c0_ref[...]))

    return kernel


def lstm_layer(x, h0, c0, wih, whh, b):
    """One unidirectional LSTM layer over the full sequence.  x: (B, T, I)."""
    B, T, I = x.shape
    H = h0.shape[-1]
    return pl.pallas_call(
        _make_lstm_layer_kernel(H),
        grid=(1,),
        in_specs=[
            pl.BlockSpec((B, T, I), lambda i: (0, 0, 0)),
            pl.BlockSpec((B, H), lambda i: (0, 0)),
            pl.BlockSpec((B, H), lambda i: (0, 0)),
            pl.BlockSpec((I, 4 * H), lambda i: (0, 0)),
            pl.BlockSpec((H, 4 * H), lambda i: (0, 0)),
            pl.BlockSpec((1, 4 * H), lambda i: (0, 0)),
        ],
        out_specs=pl.BlockSpec((B, T, H), lambda i: (0, 0, 0)),
        out_shape=jax.ShapeDtypeStruct((B, T, H), jnp.float32),
        scratch_shapes=[pltpu.VMEM((B, T, 4 * H), jnp.float32)],
        compiler_params=pltpu.CompilerParams(
            dimension_semantics=("arbitrary",),
            vmem_limit_bytes=VMEM_LIMIT),
    )(x, h0, c0, wih, whh, b)


def run_lstm(x, layers, h0, c0):
    """Multi-layer unidirectional LSTM; batch-first I/O.  Finals discarded."""
    outs = x
    for li, (wih, whh, b) in enumerate(layers):
        outs = lstm_layer(outs, h0[li], c0[li], wih, whh, b)
    return outs


# --------------------------------------------------------------------------
# Bidirectional encoder layer: grid=(2,) over directions only ("parallel" so
# v7x can put one direction per TensorCore); the full time scan runs inside
# each grid step with the hoisted x@Wih and a fori_loop.  Final h/c written
# once after the loop.
# --------------------------------------------------------------------------
def _make_bilstm_kernel(Hh):
    def kernel(x_ref, wih_ref, whh_ref, b_ref, ys_ref, hT_ref, cT_ref, g_sc):
        d = pl.program_id(0)                    # 0 = forward, 1 = backward
        B, T, _ = x_ref.shape
        wih = wih_ref[...]
        whh = whh_ref[...]
        bias = b_ref[...]
        for bb in range(B):
            g_sc[bb] = jnp.dot(x_ref[bb], wih,
                               preferred_element_type=jnp.float32) + bias

        def step(t, carry):
            h, c = carry
            tt = t + d * (T - 1 - 2 * t)        # t (fwd) or T-1-t (bwd)
            g = (g_sc[:, pl.ds(tt, 1), :].reshape(B, 4 * Hh)
                 + jnp.dot(h, whh, preferred_element_type=jnp.float32))
            h_new, c_new = _lstm_cell(g, c, Hh)
            ys_ref[:, pl.ds(tt, 1), :] = h_new.reshape(B, 1, Hh)
            return (h_new, c_new)

        zero = jnp.zeros((B, Hh), jnp.float32)
        h_fin, c_fin = lax.fori_loop(0, T, step, (zero, zero))
        hT_ref[...] = h_fin                      # written once, after the scan
        cT_ref[...] = c_fin

    return kernel


def bilstm_layer(x, wih, whh, b):
    """x (B,T,I); wih (2,I,4Hh), whh (2,Hh,4Hh), b (2,1,4Hh).
    Returns ys (2,B,T,Hh), hT (2,B,Hh), cT (2,B,Hh); index 0 = forward."""
    B, T, I = x.shape
    Hh = whh.shape[1]
    return pl.pallas_call(
        _make_bilstm_kernel(Hh),
        grid=(2,),
        in_specs=[
            pl.BlockSpec((B, T, I), lambda d: (0, 0, 0)),        # resident
            pl.BlockSpec((None, I, 4 * Hh), lambda d: (d, 0, 0)),
            pl.BlockSpec((None, Hh, 4 * Hh), lambda d: (d, 0, 0)),
            pl.BlockSpec((None, 1, 4 * Hh), lambda d: (d, 0, 0)),
        ],
        out_specs=(
            pl.BlockSpec((None, B, T, Hh), lambda d: (d, 0, 0, 0)),
            pl.BlockSpec((None, B, Hh), lambda d: (d, 0, 0)),
            pl.BlockSpec((None, B, Hh), lambda d: (d, 0, 0)),
        ),
        out_shape=(
            jax.ShapeDtypeStruct((2, B, T, Hh), jnp.float32),
            jax.ShapeDtypeStruct((2, B, Hh), jnp.float32),
            jax.ShapeDtypeStruct((2, B, Hh), jnp.float32),
        ),
        scratch_shapes=[pltpu.VMEM((B, T, 4 * Hh), jnp.float32)],
        compiler_params=pltpu.CompilerParams(
            dimension_semantics=("parallel",),
            vmem_limit_bytes=VMEM_LIMIT),
    )(x, wih, whh, b)


def encode(x, enc_layers):
    outs = x
    hs, cs = [], []
    for (wih, whh, b) in enc_layers:
        ys, hT, cT = bilstm_layer(outs, wih, whh, b)
        outs = jnp.concatenate([ys[0], ys[1]], axis=-1)       # (B, T, 2Hh)
        hs.append(jnp.concatenate([hT[0], hT[1]], axis=-1))
        cs.append(jnp.concatenate([cT[0], cT[1]], axis=-1))
    return outs, jnp.stack(hs), jnp.stack(cs)                 # h/c: (L, B, H)


# --------------------------------------------------------------------------
# Verb decoder post-path, batched over all teacher-forced timesteps:
# vlinin -> attention over enc -> vlinout+tanh -> vgen, one kernel, grid=(B,)
# so everything inside is a plain 2-D MXU matmul.  Exact softmax (its argmax
# selects the verbs that are re-encoded).  Output lane-dense (128).
# --------------------------------------------------------------------------
def _make_verb_post_kernel(H):
    def kernel(d_ref, enc_ref, wq_ref, wo_ref, wg_ref, bg_ref, out_ref):
        d = d_ref[0]                                     # (Tv, H)
        enc = enc_ref[0]                                 # (S, H)
        q = jnp.dot(d, wq_ref[...], preferred_element_type=jnp.float32)
        s = lax.dot_general(q, enc, (((1,), (1,)), ((), ())),
                            preferred_element_type=jnp.float32)   # (Tv, S)
        s = s - jnp.max(s, axis=-1, keepdims=True)
        e = jnp.exp(s)
        w = e / jnp.sum(e, axis=-1, keepdims=True)       # exact division
        cc = jnp.dot(w, enc, preferred_element_type=jnp.float32)  # (Tv, H)
        # vlinout([cc | d]) as two MXU dots (no in-kernel lane concat needed)
        op = jnp.tanh(
            jnp.dot(cc, wo_ref[0:H, :], preferred_element_type=jnp.float32)
            + jnp.dot(d, wo_ref[H:2 * H, :],
                      preferred_element_type=jnp.float32))
        out_ref[0] = (jnp.dot(op, wg_ref[...],
                              preferred_element_type=jnp.float32) + bg_ref[...])

    return kernel


def verb_post(decout, enc, wq, wo, wg, bg):
    """decout (B,Tv,H), enc (B,S,H) -> padded verb logits (B,Tv,LOGIT_PAD)."""
    B, Tv, H = decout.shape
    S = enc.shape[1]
    Vp = wg.shape[1]
    return pl.pallas_call(
        _make_verb_post_kernel(H),
        grid=(B,),
        in_specs=[
            pl.BlockSpec((1, Tv, H), lambda b: (b, 0, 0)),
            pl.BlockSpec((1, S, H), lambda b: (b, 0, 0)),
            pl.BlockSpec((H, H), lambda b: (0, 0)),
            pl.BlockSpec((2 * H, H), lambda b: (0, 0)),
            pl.BlockSpec((H, Vp), lambda b: (0, 0)),
            pl.BlockSpec((1, Vp), lambda b: (0, 0)),
        ],
        out_specs=pl.BlockSpec((1, Tv, Vp), lambda b: (b, 0, 0)),
        out_shape=jax.ShapeDtypeStruct((B, Tv, Vp), jnp.float32),
        compiler_params=pltpu.CompilerParams(
            dimension_semantics=("parallel",),
            vmem_limit_bytes=VMEM_LIMIT),
    )(decout, enc, wq, wo, wg, bg)


# --------------------------------------------------------------------------
# Main decoder: ONE kernel invocation for ALL decode steps.  The true
# recurrence (through h/c and `op`) runs in a lax.fori_loop; the teacher-forced
# (demb) half of the layer-0 input projection is hoisted over all steps into
# VMEM scratch; vencoding and all weights are resident; attention uses
# flash-style batched MXU einsums; per-step logits (lane-dense 128) are stored
# into the batch-first output with pl.ds on the time axis.
# --------------------------------------------------------------------------
def _make_dec_kernel(L, H, Vp):
    def kernel(demb_ref, venc_ref, h0_ref, c0_ref, *rest):
        lw = rest[:3 * L]
        wq_ref, wo_ref, wg_ref, bg_ref, out_ref, g_sc = rest[3 * L:]
        B, To, _ = demb_ref.shape

        w_all = [r[...] for r in lw]               # layer weights, resident
        wih0, whh0, b0 = w_all[0], w_all[1], w_all[2]
        wih0_demb = wih0[0:H, :]                   # rows for the demb half
        wih0_op = wih0[H:2 * H, :]                 # rows for the op_prev half
        venc = venc_ref[...]                       # (B, Tv, H)
        wq = wq_ref[...]
        wo_d = wo_ref[0:H, :]
        wo_v = wo_ref[H:2 * H, :]
        wg = wg_ref[...]
        bg = bg_ref[...]

        # Hoist the teacher-forced (demb) half of the layer-0 input projection
        # (+ bias) over ALL decode steps: one MXU matmul per batch row.
        for bb in range(B):
            g_sc[bb] = jnp.dot(demb_ref[bb], wih0_demb,
                               preferred_element_type=jnp.float32) + b0

        hs0 = tuple(h0_ref[l] for l in range(L))
        cs0 = tuple(c0_ref[l] for l in range(L))
        op0 = jnp.zeros((B, H), jnp.float32)

        def step(t, carry):
            hs, cs, op_prev = carry
            new_hs, new_cs = [], []
            x = None
            for l in range(L):
                h, c = hs[l], cs[l]
                if l == 0:
                    g = (g_sc[:, pl.ds(t, 1), :].reshape(B, 4 * H)
                         + jnp.dot(op_prev, wih0_op,
                                   preferred_element_type=jnp.float32)
                         + jnp.dot(h, whh0,
                                   preferred_element_type=jnp.float32))
                else:
                    g = (jnp.dot(x, w_all[3 * l],
                                 preferred_element_type=jnp.float32)
                         + jnp.dot(h, w_all[3 * l + 1],
                                   preferred_element_type=jnp.float32)
                         + w_all[3 * l + 2])
                h_new, c_new = _lstm_cell(g, c, H)
                new_hs.append(h_new)
                new_cs.append(c_new)
                x = h_new
            dvec = x                                      # (B, H)

            # attention over vencoding (flash-style batched MXU dots)
            q3 = jnp.dot(dvec, wq,
                         preferred_element_type=jnp.float32).reshape(B, 1, H)
            s3 = jnp.einsum('bqh,bkh->bqk', q3, venc,
                            preferred_element_type=jnp.float32)   # (B, 1, Tv)
            s3 = s3 - jnp.max(s3, axis=-1, keepdims=True)
            e3 = jnp.exp(s3)
            w3 = e3 * pl.reciprocal(jnp.sum(e3, axis=-1, keepdims=True),
                                    approx=True)
            vcc = jnp.einsum('bqk,bkh->bqh', w3, venc,
                             preferred_element_type=jnp.float32
                             ).reshape(B, H)

            # linout([decout | vcc]) + tanh, then generator (lane-dense)
            op_new = jnp.tanh(
                jnp.dot(dvec, wo_d, preferred_element_type=jnp.float32)
                + jnp.dot(vcc, wo_v, preferred_element_type=jnp.float32))
            logits = jnp.dot(op_new, wg,
                             preferred_element_type=jnp.float32) + bg
            out_ref[:, pl.ds(t, 1), :] = logits.reshape(B, 1, Vp)
            return (tuple(new_hs), tuple(new_cs), op_new)

        lax.fori_loop(0, To, step, (hs0, cs0, op0))

    return kernel


def dec_fused(demb, venc, h0, c0, dec_layers, wq, wo, wg, bg):
    """demb (B,To,H), venc (B,Tv,H), h0/c0 (L,B,H) -> logits (B,To,LOGIT_PAD)."""
    B, To, H = demb.shape
    L = h0.shape[0]
    Tv = venc.shape[1]
    Vp = wg.shape[1]

    layer_args, layer_specs = [], []
    for (wih, whh, b) in dec_layers:
        layer_args += [wih, whh, b]
        layer_specs += [
            pl.BlockSpec(wih.shape, lambda i: (0, 0)),
            pl.BlockSpec(whh.shape, lambda i: (0, 0)),
            pl.BlockSpec(b.shape, lambda i: (0, 0)),
        ]

    return pl.pallas_call(
        _make_dec_kernel(L, H, Vp),
        grid=(1,),
        in_specs=[
            pl.BlockSpec((B, To, H), lambda i: (0, 0, 0)),      # demb (all steps)
            pl.BlockSpec((B, Tv, H), lambda i: (0, 0, 0)),      # vencoding
            pl.BlockSpec((L, B, H), lambda i: (0, 0, 0)),       # h0
            pl.BlockSpec((L, B, H), lambda i: (0, 0, 0)),       # c0
            *layer_specs,
            pl.BlockSpec((H, H), lambda i: (0, 0)),             # dvlinin
            pl.BlockSpec((2 * H, H), lambda i: (0, 0)),         # linout
            pl.BlockSpec((H, Vp), lambda i: (0, 0)),            # gen W (padded)
            pl.BlockSpec((1, Vp), lambda i: (0, 0)),            # gen b (padded)
        ],
        out_specs=pl.BlockSpec((B, To, Vp), lambda i: (0, 0, 0)),
        out_shape=jax.ShapeDtypeStruct((B, To, Vp), jnp.float32),
        scratch_shapes=[pltpu.VMEM((B, To, 4 * H), jnp.float32)],
        compiler_params=pltpu.CompilerParams(
            dimension_semantics=("arbitrary",),
            vmem_limit_bytes=VMEM_LIMIT),
    )(demb, venc, h0, c0, *layer_args, wq, wo, wg, bg)


# ----------------------------- parameter init ------------------------------
def init_params(key, args):
    H = args['hsz']
    L = args['layers']
    keys = iter(jax.random.split(key, 512))

    def uni(shape, scale=0.1):
        return jax.random.uniform(next(keys), shape, jnp.float32,
                                  -scale, scale)

    def emb(vsz):
        return uni((vsz, H)).at[0].set(0.0)              # padding_idx=0

    p = {}
    p['encemb'] = emb(args['svsz'])
    p['decemb'] = emb(args['vsz'])
    p['vemb'] = emb(args['verbvsz'])

    # bidirectional encoder LSTM: hidden = H // 2, weights stacked per direction
    Hh = H // 2
    enc_layers = []
    for l in range(L):
        insz = H if l == 0 else 2 * Hh
        wih = jnp.stack([uni((insz, 4 * Hh)) for _ in range(2)])
        whh = jnp.stack([uni((Hh, 4 * Hh)) for _ in range(2)])
        b = jnp.stack([uni((1, 4 * Hh)) for _ in range(2)])
        enc_layers.append((wih, whh, b))
    p['enc'] = enc_layers

    def uni_lstm(in0, hid, n_layers):
        out = []
        for l in range(n_layers):
            insz = in0 if l == 0 else hid
            out.append((uni((insz, 4 * hid)), uni((hid, 4 * hid)),
                        uni((1, 4 * hid))))
        return out

    p['vdec'] = uni_lstm(H, H, L)        # LSTM(hsz, hsz)
    p['dec'] = uni_lstm(2 * H, H, L)     # LSTM(2*hsz, hsz)

    def pad_cols(w):                     # lane-dense generator outputs
        return jnp.pad(w, ((0, 0), (0, LOGIT_PAD - w.shape[1])))

    p['gen_w'] = pad_cols(uni((H, args['vsz'])))
    p['gen_b'] = pad_cols(uni((1, args['vsz'])))
    p['vgen_w'] = pad_cols(uni((H, args['verbvsz'])))
    p['vgen_b'] = pad_cols(uni((1, args['verbvsz'])))
    p['vlinin_w'] = uni((H, H))          # bias=False
    p['vlinout_w'] = uni((2 * H, H))     # bias=False
    p['dvlinin_w'] = uni((H, H))         # bias=False
    p['linout_w'] = uni((2 * H, H))      # bias=False
    return p


# -------------------------------- forward ----------------------------------
def forward(params, inp, out_tokens, verbs, args):
    """Teacher-forced forward pass (out and verbs provided), eval mode."""
    B = inp.shape[0]

    # ---- bidirectional encoder: direction-parallel kernel, in-kernel scan ----
    encenc = params['encemb'][inp]                       # (B, S, H)
    enc, h, c = encode(encenc, params['enc'])            # (B,S,H), (L,B,H)x2

    # ---- verb decoder (teacher forced): fused LSTM layer kernel(s) + one
    #      batched attention/projection kernel across all timesteps ----
    start = jnp.full((B, 1), 3, dtype=jnp.int32)
    vprev = jnp.concatenate([start, verbs[:, :-1]], axis=1)     # (B, Tv)
    vdecin = params['vemb'][vprev]                              # (B, Tv, H)
    vdecout = run_lstm(vdecin, params['vdec'], h, c)            # (B, Tv, H)
    vlogits = verb_post(vdecout, enc, params['vlinin_w'],
                        params['vlinout_w'], params['vgen_w'],
                        params['vgen_b'])                       # (B,Tv,128)
    voutputs = vlogits[:, :, :args['verbvsz']]                  # (B,Tv,verbvsz)

    # ---- re-encode predicted verbs through vdec (init from encoder state) ----
    vidxs = jnp.argmax(voutputs, axis=2)
    vembedding = params['vemb'][vidxs]                          # (B, Tv, H)
    vencoding = run_lstm(vembedding, params['vdec'], h, c)      # (B, Tv, H)

    # ---- main decoder: single fused kernel over all decode steps ----
    dprev = jnp.concatenate([start, out_tokens[:, :-1]], axis=1)  # (B, To)
    demb = params['decemb'][dprev]                                # (B, To, H)
    logits = dec_fused(demb, vencoding, h, c,
                       params['dec'], params['dvlinin_w'],
                       params['linout_w'], params['gen_w'],
                       params['gen_b'])                           # (B,To,128)
    return logits[:, :, :args['vsz']]                             # (B,To,vsz)
    # TODO(synk): beamsearch() is host-side Python beam bookkeeping; not a kernel.


# --------------------------------- main -------------------------------------
if __name__ == "__main__":
    args = dict(svsz=20, vsz=18, verbvsz=14, hsz=32, layers=1,
                drop=0.0, beamsize=4, vmaxlen=4, maxlen=5)

    key = jax.random.PRNGKey(0)
    kp, k1, k2, k3 = jax.random.split(key, 4)
    params = init_params(kp, args)

    B, S = 2, 8
    inp = jax.random.randint(k1, (B, S), 1, args['svsz'], dtype=jnp.int32)
    verbs = jax.random.randint(k2, (B, args['vmaxlen']), 1,
                               args['verbvsz'], dtype=jnp.int32)
    out_toks = jax.random.randint(k3, (B, args['maxlen']), 1,
                                  args['vsz'], dtype=jnp.int32)

    fwd = jax.jit(functools.partial(forward, args=args))
    res = fwd(params, inp, out_toks, verbs)
    jax.block_until_ready(res)
    assert res.shape == (B, args['maxlen'], args['vsz'])
    assert res.dtype == jnp.float32
    print("KERNEL_OK")
</pallas_src>

<mosaic_0001>
module attributes {stable_mosaic.version = 11 : i64} {
  func.func @kernel(%arg0: i32, %arg1: memref<2x8x32xf32, #tpu.memory_space<vmem>>, %arg2: memref<1x32x64xf32, #tpu.memory_space<vmem>>, %arg3: memref<1x16x64xf32, #tpu.memory_space<vmem>>, %arg4: memref<1x1x64xf32, #tpu.memory_space<vmem>>, %arg5: memref<1x2x8x16xf32, #tpu.memory_space<vmem>>, %arg6: memref<1x2x16xf32, #tpu.memory_space<vmem>>, %arg7: memref<1x2x16xf32, #tpu.memory_space<vmem>>, %arg8: memref<2x8x64xf32, #tpu.memory_space<vmem>>) attributes {dimension_semantics = [#tpu.dimension_semantics<parallel>], iteration_bounds = array<i64: 2>, scalar_prefetch = 0 : i64, scratch_operands = 1 : i64, tpu.core_type = #tpu.core_type<tc>, window_params = [{pipeline_mode = #tpu.pipeline_mode<synchronous>, transform_indices = @transform_0, window_bounds = array<i64: 2, 8, 32>}, {transform_indices = @transform_1, window_bounds = array<i64: 1, 32, 64>}, {transform_indices = @transform_2, window_bounds = array<i64: 1, 16, 64>}, {transform_indices = @transform_3, window_bounds = array<i64: 1, 1, 64>}, {transform_indices = @transform_4, window_bounds = array<i64: 1, 2, 8, 16>}, {transform_indices = @transform_5, window_bounds = array<i64: 1, 2, 16>}, {transform_indices = @transform_6, window_bounds = array<i64: 1, 2, 16>}]} {
    %c0 = arith.constant 0 : index
    %c0_0 = arith.constant 0 : index
    %c0_1 = arith.constant 0 : index
    %0 = vector.load %arg2[%c0, %c0_0, %c0_1] : memref<1x32x64xf32, #tpu.memory_space<vmem>>, vector<1x32x64xf32>
    %1 = vector.shape_cast %0 : vector<1x32x64xf32> to vector<32x64xf32>
    %c0_2 = arith.constant 0 : index
    %c0_3 = arith.constant 0 : index
    %c0_4 = arith.constant 0 : index
    %2 = vector.load %arg3[%c0_2, %c0_3, %c0_4] : memref<1x16x64xf32, #tpu.memory_space<vmem>>, vector<1x16x64xf32>
    %3 = vector.shape_cast %2 : vector<1x16x64xf32> to vector<16x64xf32>
    %c0_5 = arith.constant 0 : index
    %c0_6 = arith.constant 0 : index
    %c0_7 = arith.constant 0 : index
    %4 = vector.load %arg4[%c0_5, %c0_6, %c0_7] : memref<1x1x64xf32, #tpu.memory_space<vmem>>, vector<1x1x64xf32>
    %5 = vector.shape_cast %4 : vector<1x1x64xf32> to vector<1x64xf32>
    %c0_8 = arith.constant 0 : index
    %c0_9 = arith.constant 0 : index
    %c0_10 = arith.constant 0 : index
    %6 = vector.load %arg1[%c0_8, %c0_9, %c0_10] : memref<2x8x32xf32, #tpu.memory_space<vmem>>, vector<1x8x32xf32>
    %7 = vector.shape_cast %6 : vector<1x8x32xf32> to vector<8x32xf32>
    %cst = arith.constant dense<0.000000e+00> : vector<8x64xf32>
    %8 = tpu.matmul %7, %1, %cst {dimension_numbers = #tpu.dot_dimension_numbers<[1], [0], [0], [1], [0, 0, 1, 1], [], []>} : vector<8x32xf32>, vector<32x64xf32>, vector<8x64xf32> -> vector<8x64xf32>
    %9 = vector.broadcast %5 : vector<1x64xf32> to vector<8x64xf32>
    %10 = arith.addf %8, %9 : vector<8x64xf32>
    %c0_11 = arith.constant 0 : index
    %c0_12 = arith.constant 0 : index
    %c0_13 = arith.constant 0 : index
    %11 = vector.load %arg8[%c0_11, %c0_12, %c0_13] : memref<2x8x64xf32, #tpu.memory_space<vmem>>, vector<1x8x64xf32>
    %12 = vector.shape_cast %11 : vector<1x8x64xf32> to vector<8x64xf32>
    %13 = vector.shape_cast %10 : vector<8x64xf32> to vector<1x8x64xf32>
    tpu.vector_store %arg8[%c0_11, %c0_12, %c0_13], %13 {strides = array<i32>} : memref<2x8x64xf32, #tpu.memory_space<vmem>>, vector<1x8x64xf32>,
    %c1 = arith.constant 1 : index
    %c0_14 = arith.constant 0 : index
    %c0_15 = arith.constant 0 : index
    %14 = vector.load %arg1[%c1, %c0_14, %c0_15] : memref<2x8x32xf32, #tpu.memory_space<vmem>>, vector<1x8x32xf32>
    %15 = vector.shape_cast %14 : vector<1x8x32xf32> to vector<8x32xf32>
    %cst_16 = arith.constant dense<0.000000e+00> : vector<8x64xf32>
    %16 = tpu.matmul %15, %1, %cst_16 {dimension_numbers = #tpu.dot_dimension_numbers<[1], [0], [0], [1], [0, 0, 1, 1], [], []>} : vector<8x32xf32>, vector<32x64xf32>, vector<8x64xf32> -> vector<8x64xf32>
    %17 = vector.broadcast %5 : vector<1x64xf32> to vector<8x64xf32>
    %18 = arith.addf %16, %17 : vector<8x64xf32>
    %c1_17 = arith.constant 1 : index
    %c0_18 = arith.constant 0 : index
    %c0_19 = arith.constant 0 : index
    %19 = vector.load %arg8[%c1_17, %c0_18, %c0_19] : memref<2x8x64xf32, #tpu.memory_space<vmem>>, vector<1x8x64xf32>
    %20 = vector.shape_cast %19 : vector<1x8x64xf32> to vector<8x64xf32>
    %21 = vector.shape_cast %18 : vector<8x64xf32> to vector<1x8x64xf32>
    tpu.vector_store %arg8[%c1_17, %c0_18, %c0_19], %21 {strides = array<i32>} : memref<2x8x64xf32, #tpu.memory_space<vmem>>, vector<1x8x64xf32>,
    %cst_20 = arith.constant 0.000000e+00 : f32
    %22 = vector.broadcast %cst_20 : f32 to vector<2x16xf32>
    %c0_i32 = arith.constant 0 : i32
    %c8_i32 = arith.constant 8 : i32
    %23 = arith.addi %c0_i32, %c8_i32 : i32
    %c1_i32 = arith.constant 1 : i32
    %24:2 = scf.for %arg9 = %c0_i32 to %23 step %c1_i32 iter_args(%arg10 = %22, %arg11 = %22) -> (vector<2x16xf32>, vector<2x16xf32>)  : i32 {
      %c2_i32 = arith.constant 2 : i32
      %31 = arith.muli %c2_i32, %arg9 : i32
      %c7_i32 = arith.constant 7 : i32
      %32 = arith.subi %c7_i32, %31 : i32
      %33 = arith.muli %arg0, %32 : i32
      %34 = arith.addi %arg9, %33 : i32
      %c0_28 = arith.constant 0 : index
      %35 = arith.index_cast %34 : i32 to index
      %c0_29 = arith.constant 0 : index
      %36 = vector.load %arg8[%c0_28, %35, %c0_29] : memref<2x8x64xf32, #tpu.memory_space<vmem>>, vector<2x1x64xf32>
      %37 = vector.shape_cast %36 : vector<2x1x64xf32> to vector<2x64xf32>
      %cst_30 = arith.constant dense<0.000000e+00> : vector<2x64xf32>
      %38 = tpu.matmul %arg10, %3, %cst_30 {dimension_numbers = #tpu.dot_dimension_numbers<[1], [0], [0], [1], [0, 0, 1, 1], [], []>} : vector<2x16xf32>, vector<16x64xf32>, vector<2x64xf32> -> vector<2x64xf32>
      %39 = arith.addf %37, %38 : vector<2x64xf32>
      %40 = vector.extract_strided_slice %39 {offsets = [0, 0], sizes = [2, 16], strides = [1, 1]} : vector<2x64xf32> to vector<2x16xf32>
      %41 = arith.negf %40 : vector<2x16xf32>
      %42 = math.exp %41 : vector<2x16xf32>
      %cst_31 = arith.constant 1.000000e+00 : f32
      %43 = vector.broadcast %cst_31 : f32 to vector<2x16xf32>
      %44 = arith.addf %43, %42 : vector<2x16xf32>
      %45 = arith.divf %43, %44 : vector<2x16xf32>
      %46 = vector.extract_strided_slice %39 {offsets = [0, 16], sizes = [2, 16], strides = [1, 1]} : vector<2x64xf32> to vector<2x16xf32>
      %47 = arith.negf %46 : vector<2x16xf32>
      %48 = math.exp %47 : vector<2x16xf32>
      %cst_32 = arith.constant 1.000000e+00 : f32
      %49 = vector.broadcast %cst_32 : f32 to vector<2x16xf32>
      %50 = arith.addf %49, %48 : vector<2x16xf32>
      %51 = arith.divf %49, %50 : vector<2x16xf32>
      %52 = vector.extract_strided_slice %39 {offsets = [0, 32], sizes = [2, 16], strides = [1, 1]} : vector<2x64xf32> to vector<2x16xf32>
      %53 = math.tanh %52 : vector<2x16xf32>
      %54 = vector.extract_strided_slice %39 {offsets = [0, 48], sizes = [2, 16], strides = [1, 1]} : vector<2x64xf32> to vector<2x16xf32>
      %55 = arith.negf %54 : vector<2x16xf32>
      %56 = math.exp %55 : vector<2x16xf32>
      %cst_33 = arith.constant 1.000000e+00 : f32
      %57 = vector.broadcast %cst_33 : f32 to vector<2x16xf32>
      %58 = arith.addf %57, %56 : vector<2x16xf32>
      %59 = arith.divf %57, %58 : vector<2x16xf32>
      %60 = arith.mulf %51, %arg11 : vector<2x16xf32>
      %61 = arith.mulf %45, %53 : vector<2x16xf32>
      %62 = arith.addf %60, %61 : vector<2x16xf32>
      %63 = math.tanh %62 : vector<2x16xf32>
      %64 = arith.mulf %59, %63 : vector<2x16xf32>
      %65 = vector.shape_cast %64 : vector<2x16xf32> to vector<2x1x16xf32>
      %c0_34 = arith.constant 0 : index
      %c0_35 = arith.constant 0 : index
      %66 = arith.index_cast %34 : i32 to index
      %c0_36 = arith.constant 0 : index
      %67 = vector.load %arg5[%c0_34, %c0_35, %66, %c0_36] : memref<1x2x8x16xf32, #tpu.memory_space<vmem>>, vector<1x2x1x16xf32>
      %68 = vector.shape_cast %67 : vector<1x2x1x16xf32> to vector<2x1x16xf32>
      %69 = vector.shape_cast %65 : vector<2x1x16xf32> to vector<1x2x1x16xf32>
      tpu.vector_store %arg5[%c0_34, %c0_35, %66, %c0_36], %69 {strides = array<i32>} : memref<1x2x8x16xf32, #tpu.memory_space<vmem>>, vector<1x2x1x16xf32>,
      scf.yield %64, %62 : vector<2x16xf32>, vector<2x16xf32>
    }
    %c8_i32_21 = arith.constant 8 : i32
    %c0_22 = arith.constant 0 : index
    %c0_23 = arith.constant 0 : index
    %c0_24 = arith.constant 0 : index
    %25 = vector.load %arg6[%c0_22, %c0_23, %c0_24] : memref<1x2x16xf32, #tpu.memory_space<vmem>>, vector<1x2x16xf32>
    %26 = vector.shape_cast %25 : vector<1x2x16xf32> to vector<2x16xf32>
    %27 = vector.shape_cast %24#0 : vector<2x16xf32> to vector<1x2x16xf32>
    tpu.vector_store %arg6[%c0_22, %c0_23, %c0_24], %27 {strides = array<i32>} : memref<1x2x16xf32, #tpu.memory_space<vmem>>, vector<1x2x16xf32>,
    %c0_25 = arith.constant 0 : index
    %c0_26 = arith.constant 0 : index
    %c0_27 = arith.constant 0 : index
    %28 = vector.load %arg7[%c0_25, %c0_26, %c0_27] : memref<1x2x16xf32, #tpu.memory_space<vmem>>, vector<1x2x16xf32>
    %29 = vector.shape_cast %28 : vector<1x2x16xf32> to vector<2x16xf32>
    %30 = vector.shape_cast %24#1 : vector<2x16xf32> to vector<1x2x16xf32>
    tpu.vector_store %arg7[%c0_25, %c0_26, %c0_27], %30 {strides = array<i32>} : memref<1x2x16xf32, #tpu.memory_space<vmem>>, vector<1x2x16xf32>,
    return
  }
  func.func @transform_0(%arg0: i32) -> (i32, i32, i32) {
    %c0_i32 = arith.constant 0 : i32
    %c0_i32_0 = arith.constant 0 : i32
    %c0_i32_1 = arith.constant 0 : i32
    %c0_i32_2 = arith.constant 0 : i32
    return %c0_i32, %c0_i32_0, %c0_i32_1 : i32, i32, i32
  }
  func.func @transform_1(%arg0: i32) -> (i32, i32, i32) {
    %c0_i32 = arith.constant 0 : i32
    %c0_i32_0 = arith.constant 0 : i32
    %c0_i32_1 = arith.constant 0 : i32
    return %arg0, %c0_i32, %c0_i32_0 : i32, i32, i32
  }
  func.func @transform_2(%arg0: i32) -> (i32, i32, i32) {
    %c0_i32 = arith.constant 0 : i32
    %c0_i32_0 = arith.constant 0 : i32
    %c0_i32_1 = arith.constant 0 : i32
    return %arg0, %c0_i32, %c0_i32_0 : i32, i32, i32
  }
  func.func @transform_3(%arg0: i32) -> (i32, i32, i32) {
    %c0_i32 = arith.constant 0 : i32
    %c0_i32_0 = arith.constant 0 : i32
    %c0_i32_1 = arith.constant 0 : i32
    return %arg0, %c0_i32, %c0_i32_0 : i32, i32, i32
  }
  func.func @transform_4(%arg0: i32) -> (i32, i32, i32, i32) {
    %c0_i32 = arith.constant 0 : i32
    %c0_i32_0 = arith.constant 0 : i32
    %c0_i32_1 = arith.constant 0 : i32
    %c0_i32_2 = arith.constant 0 : i32
    return %arg0, %c0_i32, %c0_i32_0, %c0_i32_1 : i32, i32, i32, i32
  }
  func.func @transform_5(%arg0: i32) -> (i32, i32, i32) {
    %c0_i32 = arith.constant 0 : i32
    %c0_i32_0 = arith.constant 0 : i32
    %c0_i32_1 = arith.constant 0 : i32
    return %arg0, %c0_i32, %c0_i32_0 : i32, i32, i32
  }
  func.func @transform_6(%arg0: i32) -> (i32, i32, i32) {
    %c0_i32 = arith.constant 0 : i32
    %c0_i32_0 = arith.constant 0 : i32
    %c0_i32_1 = arith.constant 0 : i32
    return %arg0, %c0_i32, %c0_i32_0 : i32, i32, i32
  }
}

module attributes {stable_mosaic.version = 11 : i64} {
  func.func @kernel(%arg0: i32, %arg1: memref<2x4x32xf32, #tpu.memory_space<vmem>>, %arg2: memref<2x32xf32, #tpu.memory_space<vmem>>, %arg3: memref<2x32xf32, #tpu.memory_space<vmem>>, %arg4: memref<32x128xf32, #tpu.memory_space<vmem>>, %arg5: memref<32x128xf32, #tpu.memory_space<vmem>>, %arg6: memref<1x128xf32, #tpu.memory_space<vmem>>, %arg7: memref<2x4x32xf32, #tpu.memory_space<vmem>>, %arg8: memref<2x4x128xf32, #tpu.memory_space<vmem>>) attributes {dimension_semantics = [#tpu.dimension_semantics<arbitrary>], iteration_bounds = array<i64: 1>, scalar_prefetch = 0 : i64, scratch_operands = 1 : i64, tpu.core_type = #tpu.core_type<tc>, window_params = [{pipeline_mode = #tpu.pipeline_mode<synchronous>, transform_indices = @transform_0, window_bounds = array<i64: 2, 4, 32>}, {pipeline_mode = #tpu.pipeline_mode<synchronous>, transform_indices = @transform_1, window_bounds = array<i64: 2, 32>}, {pipeline_mode = #tpu.pipeline_mode<synchronous>, transform_indices = @transform_2, window_bounds = array<i64: 2, 32>}, {pipeline_mode = #tpu.pipeline_mode<synchronous>, transform_indices = @transform_3, window_bounds = array<i64: 32, 128>}, {pipeline_mode = #tpu.pipeline_mode<synchronous>, transform_indices = @transform_4, window_bounds = array<i64: 32, 128>}, {pipeline_mode = #tpu.pipeline_mode<synchronous>, transform_indices = @transform_5, window_bounds = array<i64: 1, 128>}, {pipeline_mode = #tpu.pipeline_mode<synchronous>, transform_indices = @transform_6, window_bounds = array<i64: 2, 4, 32>}]} {
    %c0 = arith.constant 0 : index
    %c0_0 = arith.constant 0 : index
    %0 = vector.load %arg4[%c0, %c0_0] : memref<32x128xf32, #tpu.memory_space<vmem>>, vector<32x128xf32>
    %c0_1 = arith.constant 0 : index
    %c0_2 = arith.constant 0 : index
    %1 = vector.load %arg5[%c0_1, %c0_2] : memref<32x128xf32, #tpu.memory_space<vmem>>, vector<32x128xf32>
    %c0_3 = arith.constant 0 : index
    %c0_4 = arith.constant 0 : index
    %2 = vector.load %arg6[%c0_3, %c0_4] : memref<1x128xf32, #tpu.memory_space<vmem>>, vector<1x128xf32>
    %c0_5 = arith.constant 0 : index
    %c0_6 = arith.constant 0 : index
    %c0_7 = arith.constant 0 : index
    %3 = vector.load %arg1[%c0_5, %c0_6, %c0_7] : memref<2x4x32xf32, #tpu.memory_space<vmem>>, vector<1x4x32xf32>
    %4 = vector.shape_cast %3 : vector<1x4x32xf32> to vector<4x32xf32>
    %cst = arith.constant dense<0.000000e+00> : vector<4x128xf32>
    %5 = tpu.matmul %4, %0, %cst {dimension_numbers = #tpu.dot_dimension_numbers<[1], [0], [0], [1], [0, 0, 1, 1], [], []>} : vector<4x32xf32>, vector<32x128xf32>, vector<4x128xf32> -> vector<4x128xf32>
    %6 = vector.broadcast %2 : vector<1x128xf32> to vector<4x128xf32>
    %7 = arith.addf %5, %6 : vector<4x128xf32>
    %c0_8 = arith.constant 0 : index
    %c0_9 = arith.constant 0 : index
    %c0_10 = arith.constant 0 : index
    %8 = vector.load %arg8[%c0_8, %c0_9, %c0_10] : memref<2x4x128xf32, #tpu.memory_space<vmem>>, vector<1x4x128xf32>
    %9 = vector.shape_cast %8 : vector<1x4x128xf32> to vector<4x128xf32>
    %10 = vector.shape_cast %7 : vector<4x128xf32> to vector<1x4x128xf32>
    tpu.vector_store %arg8[%c0_8, %c0_9, %c0_10], %10 {strides = array<i32>} : memref<2x4x128xf32, #tpu.memory_space<vmem>>, vector<1x4x128xf32>,
    %c1 = arith.constant 1 : index
    %c0_11 = arith.constant 0 : index
    %c0_12 = arith.constant 0 : index
    %11 = vector.load %arg1[%c1, %c0_11, %c0_12] : memref<2x4x32xf32, #tpu.memory_space<vmem>>, vector<1x4x32xf32>
    %12 = vector.shape_cast %11 : vector<1x4x32xf32> to vector<4x32xf32>
    %cst_13 = arith.constant dense<0.000000e+00> : vector<4x128xf32>
    %13 = tpu.matmul %12, %0, %cst_13 {dimension_numbers = #tpu.dot_dimension_numbers<[1], [0], [0], [1], [0, 0, 1, 1], [], []>} : vector<4x32xf32>, vector<32x128xf32>, vector<4x128xf32> -> vector<4x128xf32>
    %14 = vector.broadcast %2 : vector<1x128xf32> to vector<4x128xf32>
    %15 = arith.addf %13, %14 : vector<4x128xf32>
    %c1_14 = arith.constant 1 : index
    %c0_15 = arith.constant 0 : index
    %c0_16 = arith.constant 0 : index
    %16 = vector.load %arg8[%c1_14, %c0_15, %c0_16] : memref<2x4x128xf32, #tpu.memory_space<vmem>>, vector<1x4x128xf32>
    %17 = vector.shape_cast %16 : vector<1x4x128xf32> to vector<4x128xf32>
    %18 = vector.shape_cast %15 : vector<4x128xf32> to vector<1x4x128xf32>
    tpu.vector_store %arg8[%c1_14, %c0_15, %c0_16], %18 {strides = array<i32>} : memref<2x4x128xf32, #tpu.memory_space<vmem>>, vector<1x4x128xf32>,
    %c0_17 = arith.constant 0 : index
    %c0_18 = arith.constant 0 : index
    %19 = vector.load %arg2[%c0_17, %c0_18] : memref<2x32xf32, #tpu.memory_space<vmem>>, vector<2x32xf32>
    %c0_19 = arith.constant 0 : index
    %c0_20 = arith.constant 0 : index
    %20 = vector.load %arg3[%c0_19, %c0_20] : memref<2x32xf32, #tpu.memory_space<vmem>>, vector<2x32xf32>
    %c0_i32 = arith.constant 0 : i32
    %c4_i32 = arith.constant 4 : i32
    %21 = arith.addi %c0_i32, %c4_i32 : i32
    %c1_i32 = arith.constant 1 : i32
    %22:2 = scf.for %arg9 = %c0_i32 to %21 step %c1_i32 iter_args(%arg10 = %19, %arg11 = %20) -> (vector<2x32xf32>, vector<2x32xf32>)  : i32 {
      %c0_22 = arith.constant 0 : index
      %23 = arith.index_cast %arg9 : i32 to index
      %c0_23 = arith.constant 0 : index
      %24 = vector.load %arg8[%c0_22, %23, %c0_23] : memref<2x4x128xf32, #tpu.memory_space<vmem>>, vector<2x1x128xf32>
      %25 = vector.shape_cast %24 : vector<2x1x128xf32> to vector<2x128xf32>
      %cst_24 = arith.constant dense<0.000000e+00> : vector<2x128xf32>
      %26 = tpu.matmul %arg10, %1, %cst_24 {dimension_numbers = #tpu.dot_dimension_numbers<[1], [0], [0], [1], [0, 0, 1, 1], [], []>} : vector<2x32xf32>, vector<32x128xf32>, vector<2x128xf32> -> vector<2x128xf32>
      %27 = arith.addf %25, %26 : vector<2x128xf32>
      %28 = vector.extract_strided_slice %27 {offsets = [0, 0], sizes = [2, 32], strides = [1, 1]} : vector<2x128xf32> to vector<2x32xf32>
      %29 = arith.negf %28 : vector<2x32xf32>
      %30 = math.exp %29 : vector<2x32xf32>
      %cst_25 = arith.constant 1.000000e+00 : f32
      %31 = vector.broadcast %cst_25 : f32 to vector<2x32xf32>
      %32 = arith.addf %31, %30 : vector<2x32xf32>
      %33 = arith.divf %31, %32 : vector<2x32xf32>
      %34 = vector.extract_strided_slice %27 {offsets = [0, 32], sizes = [2, 32], strides = [1, 1]} : vector<2x128xf32> to vector<2x32xf32>
      %35 = arith.negf %34 : vector<2x32xf32>
      %36 = math.exp %35 : vector<2x32xf32>
      %cst_26 = arith.constant 1.000000e+00 : f32
      %37 = vector.broadcast %cst_26 : f32 to vector<2x32xf32>
      %38 = arith.addf %37, %36 : vector<2x32xf32>
      %39 = arith.divf %37, %38 : vector<2x32xf32>
      %40 = vector.extract_strided_slice %27 {offsets = [0, 64], sizes = [2, 32], strides = [1, 1]} : vector<2x128xf32> to vector<2x32xf32>
      %41 = math.tanh %40 : vector<2x32xf32>
      %42 = vector.extract_strided_slice %27 {offsets = [0, 96], sizes = [2, 32], strides = [1, 1]} : vector<2x128xf32> to vector<2x32xf32>
      %43 = arith.negf %42 : vector<2x32xf32>
      %44 = math.exp %43 : vector<2x32xf32>
      %cst_27 = arith.constant 1.000000e+00 : f32
      %45 = vector.broadcast %cst_27 : f32 to vector<2x32xf32>
      %46 = arith.addf %45, %44 : vector<2x32xf32>
      %47 = arith.divf %45, %46 : vector<2x32xf32>
      %48 = arith.mulf %39, %arg11 : vector<2x32xf32>
      %49 = arith.mulf %33, %41 : vector<2x32xf32>
      %50 = arith.addf %48, %49 : vector<2x32xf32>
      %51 = math.tanh %50 : vector<2x32xf32>
      %52 = arith.mulf %47, %51 : vector<2x32xf32>
      %53 = vector.shape_cast %52 : vector<2x32xf32> to vector<2x1x32xf32>
      %c0_28 = arith.constant 0 : index
      %54 = arith.index_cast %arg9 : i32 to index
      %c0_29 = arith.constant 0 : index
      %55 = vector.load %arg7[%c0_28, %54, %c0_29] : memref<2x4x32xf32, #tpu.memory_space<vmem>>, vector<2x1x32xf32>
      tpu.vector_store %arg7[%c0_28, %54, %c0_29], %53 {strides = array<i32>} : memref<2x4x32xf32, #tpu.memory_space<vmem>>, vector<2x1x32xf32>,
      scf.yield %52, %50 : vector<2x32xf32>, vector<2x32xf32>
    }
    %c4_i32_21 = arith.constant 4 : i32
    return
  }
  func.func @transform_0(%arg0: i32) -> (i32, i32, i32) {
    %c0_i32 = arith.constant 0 : i32
    %c0_i32_0 = arith.constant 0 : i32
    %c0_i32_1 = arith.constant 0 : i32
    %c0_i32_2 = arith.constant 0 : i32
    return %c0_i32, %c0_i32_0, %c0_i32_1 : i32, i32, i32
  }
  func.func @transform_1(%arg0: i32) -> (i32, i32) {
    %c0_i32 = arith.constant 0 : i32
    %c0_i32_0 = arith.constant 0 : i32
    %c0_i32_1 = arith.constant 0 : i32
    return %c0_i32, %c0_i32_0 : i32, i32
  }
  func.func @transform_2(%arg0: i32) -> (i32, i32) {
    %c0_i32 = arith.constant 0 : i32
    %c0_i32_0 = arith.constant 0 : i32
    %c0_i32_1 = arith.constant 0 : i32
    return %c0_i32, %c0_i32_0 : i32, i32
  }
  func.func @transform_3(%arg0: i32) -> (i32, i32) {
    %c0_i32 = arith.constant 0 : i32
    %c0_i32_0 = arith.constant 0 : i32
    %c0_i32_1 = arith.constant 0 : i32
    return %c0_i32, %c0_i32_0 : i32, i32
  }
  func.func @transform_4(%arg0: i32) -> (i32, i32) {
    %c0_i32 = arith.constant 0 : i32
    %c0_i32_0 = arith.constant 0 : i32
    %c0_i32_1 = arith.constant 0 : i32
    return %c0_i32, %c0_i32_0 : i32, i32
  }
  func.func @transform_5(%arg0: i32) -> (i32, i32) {
    %c0_i32 = arith.constant 0 : i32
    %c0_i32_0 = arith.constant 0 : i32
    %c0_i32_1 = arith.constant 0 : i32
    return %c0_i32, %c0_i32_0 : i32, i32
  }
  func.func @transform_6(%arg0: i32) -> (i32, i32, i32) {
    %c0_i32 = arith.constant 0 : i32
    %c0_i32_0 = arith.constant 0 : i32
    %c0_i32_1 = arith.constant 0 : i32
    %c0_i32_2 = arith.constant 0 : i32
    return %c0_i32, %c0_i32_0, %c0_i32_1 : i32, i32, i32
  }
}

module attributes {stable_mosaic.version = 11 : i64} {
  func.func @kernel(%arg0: i32, %arg1: memref<1x4x32xf32, #tpu.memory_space<vmem>>, %arg2: memref<1x8x32xf32, #tpu.memory_space<vmem>>, %arg3: memref<32x32xf32, #tpu.memory_space<vmem>>, %arg4: memref<64x32xf32, #tpu.memory_space<vmem>>, %arg5: memref<32x128xf32, #tpu.memory_space<vmem>>, %arg6: memref<1x128xf32, #tpu.memory_space<vmem>>, %arg7: memref<1x4x128xf32, #tpu.memory_space<vmem>>) attributes {dimension_semantics = [#tpu.dimension_semantics<parallel>], iteration_bounds = array<i64: 2>, scalar_prefetch = 0 : i64, scratch_operands = 0 : i64, tpu.core_type = #tpu.core_type<tc>, window_params = [{transform_indices = @transform_0, window_bounds = array<i64: 1, 4, 32>}, {transform_indices = @transform_1, window_bounds = array<i64: 1, 8, 32>}, {pipeline_mode = #tpu.pipeline_mode<synchronous>, transform_indices = @transform_2, window_bounds = array<i64: 32, 32>}, {pipeline_mode = #tpu.pipeline_mode<synchronous>, transform_indices = @transform_3, window_bounds = array<i64: 64, 32>}, {pipeline_mode = #tpu.pipeline_mode<synchronous>, transform_indices = @transform_4, window_bounds = array<i64: 32, 128>}, {pipeline_mode = #tpu.pipeline_mode<synchronous>, transform_indices = @transform_5, window_bounds = array<i64: 1, 128>}, {transform_indices = @transform_6, window_bounds = array<i64: 1, 4, 128>}]} {
    %c0 = arith.constant 0 : index
    %c0_0 = arith.constant 0 : index
    %c0_1 = arith.constant 0 : index
    %0 = vector.load %arg1[%c0, %c0_0, %c0_1] : memref<1x4x32xf32, #tpu.memory_space<vmem>>, vector<1x4x32xf32>
    %1 = vector.shape_cast %0 : vector<1x4x32xf32> to vector<4x32xf32>
    %c0_2 = arith.constant 0 : index
    %c0_3 = arith.constant 0 : index
    %c0_4 = arith.constant 0 : index
    %2 = vector.load %arg2[%c0_2, %c0_3, %c0_4] : memref<1x8x32xf32, #tpu.memory_space<vmem>>, vector<1x8x32xf32>
    %3 = vector.shape_cast %2 : vector<1x8x32xf32> to vector<8x32xf32>
    %c0_5 = arith.constant 0 : index
    %c0_6 = arith.constant 0 : index
    %4 = vector.load %arg3[%c0_5, %c0_6] : memref<32x32xf32, #tpu.memory_space<vmem>>, vector<32x32xf32>
    %cst = arith.constant dense<0.000000e+00> : vector<4x32xf32>
    %5 = tpu.matmul %1, %4, %cst {dimension_numbers = #tpu.dot_dimension_numbers<[1], [0], [0], [1], [0, 0, 1, 1], [], []>} : vector<4x32xf32>, vector<32x32xf32>, vector<4x32xf32> -> vector<4x32xf32>
    %cst_7 = arith.constant dense<0.000000e+00> : vector<4x8xf32>
    %6 = tpu.matmul %5, %3, %cst_7 {dimension_numbers = #tpu.dot_dimension_numbers<[1], [1], [0], [0], [0, 0, 1, 0], [], []>} : vector<4x32xf32>, vector<8x32xf32>, vector<4x8xf32> -> vector<4x8xf32>
    %cst_8 = arith.constant dense<0xFF800000> : vector<4xf32>
    %7 = vector.multi_reduction <maximumf>, %6, %cst_8 [1] : vector<4x8xf32> to vector<4xf32>
    %8 = vector.shape_cast %7 : vector<4xf32> to vector<4x1xf32>
    %9 = vector.broadcast %8 : vector<4x1xf32> to vector<4x8xf32>
    %10 = arith.subf %6, %9 : vector<4x8xf32>
    %11 = math.exp %10 : vector<4x8xf32>
    %cst_9 = arith.constant dense<0.000000e+00> : vector<4xf32>
    %12 = vector.multi_reduction <add>, %11, %cst_9 [1] : vector<4x8xf32> to vector<4xf32>
    %13 = vector.shape_cast %12 : vector<4xf32> to vector<4x1xf32>
    %14 = vector.broadcast %13 : vector<4x1xf32> to vector<4x8xf32>
    %15 = arith.divf %11, %14 : vector<4x8xf32>
    %cst_10 = arith.constant dense<0.000000e+00> : vector<4x32xf32>
    %16 = tpu.matmul %15, %3, %cst_10 {dimension_numbers = #tpu.dot_dimension_numbers<[1], [0], [0], [1], [0, 0, 1, 1], [], []>} : vector<4x8xf32>, vector<8x32xf32>, vector<4x32xf32> -> vector<4x32xf32>
    %c0_11 = arith.constant 0 : index
    %c0_12 = arith.constant 0 : index
    %17 = vector.load %arg4[%c0_11, %c0_12] : memref<64x32xf32, #tpu.memory_space<vmem>>, vector<32x32xf32>
    %cst_13 = arith.constant dense<0.000000e+00> : vector<4x32xf32>
    %18 = tpu.matmul %16, %17, %cst_13 {dimension_numbers = #tpu.dot_dimension_numbers<[1], [0], [0], [1], [0, 0, 1, 1], [], []>} : vector<4x32xf32>, vector<32x32xf32>, vector<4x32xf32> -> vector<4x32xf32>
    %c32 = arith.constant 32 : index
    %c0_14 = arith.constant 0 : index
    %19 = vector.load %arg4[%c32, %c0_14] : memref<64x32xf32, #tpu.memory_space<vmem>>, vector<32x32xf32>
    %cst_15 = arith.constant dense<0.000000e+00> : vector<4x32xf32>
    %20 = tpu.matmul %1, %19, %cst_15 {dimension_numbers = #tpu.dot_dimension_numbers<[1], [0], [0], [1], [0, 0, 1, 1], [], []>} : vector<4x32xf32>, vector<32x32xf32>, vector<4x32xf32> -> vector<4x32xf32>
    %21 = arith.addf %18, %20 : vector<4x32xf32>
    %22 = math.tanh %21 : vector<4x32xf32>
    %c0_16 = arith.constant 0 : index
    %c0_17 = arith.constant 0 : index
    %23 = vector.load %arg5[%c0_16, %c0_17] : memref<32x128xf32, #tpu.memory_space<vmem>>, vector<32x128xf32>
    %cst_18 = arith.constant dense<0.000000e+00> : vector<4x128xf32>
    %24 = tpu.matmul %22, %23, %cst_18 {dimension_numbers = #tpu.dot_dimension_numbers<[1], [0], [0], [1], [0, 0, 1, 1], [], []>} : vector<4x32xf32>, vector<32x128xf32>, vector<4x128xf32> -> vector<4x128xf32>
    %c0_19 = arith.constant 0 : index
    %c0_20 = arith.constant 0 : index
    %25 = vector.load %arg6[%c0_19, %c0_20] : memref<1x128xf32, #tpu.memory_space<vmem>>, vector<1x128xf32>
    %26 = vector.broadcast %25 : vector<1x128xf32> to vector<4x128xf32>
    %27 = arith.addf %24, %26 : vector<4x128xf32>
    %c0_21 = arith.constant 0 : index
    %c0_22 = arith.constant 0 : index
    %c0_23 = arith.constant 0 : index
    %28 = vector.load %arg7[%c0_21, %c0_22, %c0_23] : memref<1x4x128xf32, #tpu.memory_space<vmem>>, vector<1x4x128xf32>
    %29 = vector.shape_cast %28 : vector<1x4x128xf32> to vector<4x128xf32>
    %30 = vector.shape_cast %27 : vector<4x128xf32> to vector<1x4x128xf32>
    tpu.vector_store %arg7[%c0_21, %c0_22, %c0_23], %30 {strides = array<i32>} : memref<1x4x128xf32, #tpu.memory_space<vmem>>, vector<1x4x128xf32>,
    return
  }
  func.func @transform_0(%arg0: i32) -> (i32, i32, i32) {
    %c0_i32 = arith.constant 0 : i32
    %c0_i32_0 = arith.constant 0 : i32
    %c0_i32_1 = arith.constant 0 : i32
    return %arg0, %c0_i32, %c0_i32_0 : i32, i32, i32
  }
  func.func @transform_1(%arg0: i32) -> (i32, i32, i32) {
    %c0_i32 = arith.constant 0 : i32
    %c0_i32_0 = arith.constant 0 : i32
    %c0_i32_1 = arith.constant 0 : i32
    return %arg0, %c0_i32, %c0_i32_0 : i32, i32, i32
  }
  func.func @transform_2(%arg0: i32) -> (i32, i32) {
    %c0_i32 = arith.constant 0 : i32
    %c0_i32_0 = arith.constant 0 : i32
    %c0_i32_1 = arith.constant 0 : i32
    return %c0_i32, %c0_i32_0 : i32, i32
  }
  func.func @transform_3(%arg0: i32) -> (i32, i32) {
    %c0_i32 = arith.constant 0 : i32
    %c0_i32_0 = arith.constant 0 : i32
    %c0_i32_1 = arith.constant 0 : i32
    return %c0_i32, %c0_i32_0 : i32, i32
  }
  func.func @transform_4(%arg0: i32) -> (i32, i32) {
    %c0_i32 = arith.constant 0 : i32
    %c0_i32_0 = arith.constant 0 : i32
    %c0_i32_1 = arith.constant 0 : i32
    return %c0_i32, %c0_i32_0 : i32, i32
  }
  func.func @transform_5(%arg0: i32) -> (i32, i32) {
    %c0_i32 = arith.constant 0 : i32
    %c0_i32_0 = arith.constant 0 : i32
    %c0_i32_1 = arith.constant 0 : i32
    return %c0_i32, %c0_i32_0 : i32, i32
  }
  func.func @transform_6(%arg0: i32) -> (i32, i32, i32) {
    %c0_i32 = arith.constant 0 : i32
    %c0_i32_0 = arith.constant 0 : i32
    %c0_i32_1 = arith.constant 0 : i32
    return %arg0, %c0_i32, %c0_i32_0 : i32, i32, i32
  }
}

module attributes {stable_mosaic.version = 11 : i64} {
  func.func @kernel(%arg0: i32, %arg1: memref<2x5x32xf32, #tpu.memory_space<vmem>>, %arg2: memref<2x4x32xf32, #tpu.memory_space<vmem>>, %arg3: memref<1x2x32xf32, #tpu.memory_space<vmem>>, %arg4: memref<1x2x32xf32, #tpu.memory_space<vmem>>, %arg5: memref<64x128xf32, #tpu.memory_space<vmem>>, %arg6: memref<32x128xf32, #tpu.memory_space<vmem>>, %arg7: memref<1x128xf32, #tpu.memory_space<vmem>>, %arg8: memref<32x32xf32, #tpu.memory_space<vmem>>, %arg9: memref<64x32xf32, #tpu.memory_space<vmem>>, %arg10: memref<32x128xf32, #tpu.memory_space<vmem>>, %arg11: memref<1x128xf32, #tpu.memory_space<vmem>>, %arg12: memref<2x5x128xf32, #tpu.memory_space<vmem>>, %arg13: memref<2x5x128xf32, #tpu.memory_space<vmem>>) attributes {dimension_semantics = [#tpu.dimension_semantics<arbitrary>], iteration_bounds = array<i64: 1>, scalar_prefetch = 0 : i64, scratch_operands = 1 : i64, tpu.core_type = #tpu.core_type<tc>, window_params = [{pipeline_mode = #tpu.pipeline_mode<synchronous>, transform_indices = @transform_0, window_bounds = array<i64: 2, 5, 32>}, {pipeline_mode = #tpu.pipeline_mode<synchronous>, transform_indices = @transform_1, window_bounds = array<i64: 2, 4, 32>}, {pipeline_mode = #tpu.pipeline_mode<synchronous>, transform_indices = @transform_2, window_bounds = array<i64: 1, 2, 32>}, {pipeline_mode = #tpu.pipeline_mode<synchronous>, transform_indices = @transform_3, window_bounds = array<i64: 1, 2, 32>}, {pipeline_mode = #tpu.pipeline_mode<synchronous>, transform_indices = @transform_4, window_bounds = array<i64: 64, 128>}, {pipeline_mode = #tpu.pipeline_mode<synchronous>, transform_indices = @transform_5, window_bounds = array<i64: 32, 128>}, {pipeline_mode = #tpu.pipeline_mode<synchronous>, transform_indices = @transform_6, window_bounds = array<i64: 1, 128>}, {pipeline_mode = #tpu.pipeline_mode<synchronous>, transform_indices = @transform_7, window_bounds = array<i64: 32, 32>}, {pipeline_mode = #tpu.pipeline_mode<synchronous>, transform_indices = @transform_8, window_bounds = array<i64: 64, 32>}, {pipeline_mode = #tpu.pipeline_mode<synchronous>, transform_indices = @transform_9, window_bounds = array<i64: 32, 128>}, {pipeline_mode = #tpu.pipeline_mode<synchronous>, transform_indices = @transform_10, window_bounds = array<i64: 1, 128>}, {pipeline_mode = #tpu.pipeline_mode<synchronous>, transform_indices = @transform_11, window_bounds = array<i64: 2, 5, 128>}]} {
    %c0 = arith.constant 0 : index
    %c0_0 = arith.constant 0 : index
    %0 = vector.load %arg5[%c0, %c0_0] : memref<64x128xf32, #tpu.memory_space<vmem>>, vector<64x128xf32>
    %c0_1 = arith.constant 0 : index
    %c0_2 = arith.constant 0 : index
    %1 = vector.load %arg6[%c0_1, %c0_2] : memref<32x128xf32, #tpu.memory_space<vmem>>, vector<32x128xf32>
    %c0_3 = arith.constant 0 : index
    %c0_4 = arith.constant 0 : index
    %2 = vector.load %arg7[%c0_3, %c0_4] : memref<1x128xf32, #tpu.memory_space<vmem>>, vector<1x128xf32>
    %3 = vector.extract_strided_slice %0 {offsets = [0, 0], sizes = [32, 128], strides = [1, 1]} : vector<64x128xf32> to vector<32x128xf32>
    %4 = vector.extract_strided_slice %0 {offsets = [32, 0], sizes = [32, 128], strides = [1, 1]} : vector<64x128xf32> to vector<32x128xf32>
    %c0_5 = arith.constant 0 : index
    %c0_6 = arith.constant 0 : index
    %c0_7 = arith.constant 0 : index
    %5 = vector.load %arg2[%c0_5, %c0_6, %c0_7] : memref<2x4x32xf32, #tpu.memory_space<vmem>>, vector<2x4x32xf32>
    %c0_8 = arith.constant 0 : index
    %c0_9 = arith.constant 0 : index
    %6 = vector.load %arg8[%c0_8, %c0_9] : memref<32x32xf32, #tpu.memory_space<vmem>>, vector<32x32xf32>
    %c0_10 = arith.constant 0 : index
    %c0_11 = arith.constant 0 : index
    %7 = vector.load %arg9[%c0_10, %c0_11] : memref<64x32xf32, #tpu.memory_space<vmem>>, vector<32x32xf32>
    %c32 = arith.constant 32 : index
    %c0_12 = arith.constant 0 : index
    %8 = vector.load %arg9[%c32, %c0_12] : memref<64x32xf32, #tpu.memory_space<vmem>>, vector<32x32xf32>
    %c0_13 = arith.constant 0 : index
    %c0_14 = arith.constant 0 : index
    %9 = vector.load %arg10[%c0_13, %c0_14] : memref<32x128xf32, #tpu.memory_space<vmem>>, vector<32x128xf32>
    %c0_15 = arith.constant 0 : index
    %c0_16 = arith.constant 0 : index
    %10 = vector.load %arg11[%c0_15, %c0_16] : memref<1x128xf32, #tpu.memory_space<vmem>>, vector<1x128xf32>
    %c0_17 = arith.constant 0 : index
    %c0_18 = arith.constant 0 : index
    %c0_19 = arith.constant 0 : index
    %11 = vector.load %arg1[%c0_17, %c0_18, %c0_19] : memref<2x5x32xf32, #tpu.memory_space<vmem>>, vector<1x5x32xf32>
    %12 = vector.shape_cast %11 : vector<1x5x32xf32> to vector<5x32xf32>
    %cst = arith.constant dense<0.000000e+00> : vector<5x128xf32>
    %13 = tpu.matmul %12, %3, %cst {dimension_numbers = #tpu.dot_dimension_numbers<[1], [0], [0], [1], [0, 0, 1, 1], [], []>} : vector<5x32xf32>, vector<32x128xf32>, vector<5x128xf32> -> vector<5x128xf32>
    %14 = vector.broadcast %2 : vector<1x128xf32> to vector<5x128xf32>
    %15 = arith.addf %13, %14 : vector<5x128xf32>
    %c0_20 = arith.constant 0 : index
    %c0_21 = arith.constant 0 : index
    %c0_22 = arith.constant 0 : index
    %16 = vector.load %arg13[%c0_20, %c0_21, %c0_22] : memref<2x5x128xf32, #tpu.memory_space<vmem>>, vector<1x5x128xf32>
    %17 = vector.shape_cast %16 : vector<1x5x128xf32> to vector<5x128xf32>
    %18 = vector.shape_cast %15 : vector<5x128xf32> to vector<1x5x128xf32>
    tpu.vector_store %arg13[%c0_20, %c0_21, %c0_22], %18 {strides = array<i32>} : memref<2x5x128xf32, #tpu.memory_space<vmem>>, vector<1x5x128xf32>,
    %c1 = arith.constant 1 : index
    %c0_23 = arith.constant 0 : index
    %c0_24 = arith.constant 0 : index
    %19 = vector.load %arg1[%c1, %c0_23, %c0_24] : memref<2x5x32xf32, #tpu.memory_space<vmem>>, vector<1x5x32xf32>
    %20 = vector.shape_cast %19 : vector<1x5x32xf32> to vector<5x32xf32>
    %cst_25 = arith.constant dense<0.000000e+00> : vector<5x128xf32>
    %21 = tpu.matmul %20, %3, %cst_25 {dimension_numbers = #tpu.dot_dimension_numbers<[1], [0], [0], [1], [0, 0, 1, 1], [], []>} : vector<5x32xf32>, vector<32x128xf32>, vector<5x128xf32> -> vector<5x128xf32>
    %22 = vector.broadcast %2 : vector<1x128xf32> to vector<5x128xf32>
    %23 = arith.addf %21, %22 : vector<5x128xf32>
    %c1_26 = arith.constant 1 : index
    %c0_27 = arith.constant 0 : index
    %c0_28 = arith.constant 0 : index
    %24 = vector.load %arg13[%c1_26, %c0_27, %c0_28] : memref<2x5x128xf32, #tpu.memory_space<vmem>>, vector<1x5x128xf32>
    %25 = vector.shape_cast %24 : vector<1x5x128xf32> to vector<5x128xf32>
    %26 = vector.shape_cast %23 : vector<5x128xf32> to vector<1x5x128xf32>
    tpu.vector_store %arg13[%c1_26, %c0_27, %c0_28], %26 {strides = array<i32>} : memref<2x5x128xf32, #tpu.memory_space<vmem>>, vector<1x5x128xf32>,
    %c0_29 = arith.constant 0 : index
    %c0_30 = arith.constant 0 : index
    %c0_31 = arith.constant 0 : index
    %27 = vector.load %arg3[%c0_29, %c0_30, %c0_31] : memref<1x2x32xf32, #tpu.memory_space<vmem>>, vector<1x2x32xf32>
    %28 = vector.shape_cast %27 : vector<1x2x32xf32> to vector<2x32xf32>
    %c0_32 = arith.constant 0 : index
    %c0_33 = arith.constant 0 : index
    %c0_34 = arith.constant 0 : index
    %29 = vector.load %arg4[%c0_32, %c0_33, %c0_34] : memref<1x2x32xf32, #tpu.memory_space<vmem>>, vector<1x2x32xf32>
    %30 = vector.shape_cast %29 : vector<1x2x32xf32> to vector<2x32xf32>
    %cst_35 = arith.constant 0.000000e+00 : f32
    %31 = vector.broadcast %cst_35 : f32 to vector<2x32xf32>
    %c0_i32 = arith.constant 0 : i32
    %c5_i32 = arith.constant 5 : i32
    %32 = arith.addi %c0_i32, %c5_i32 : i32
    %c1_i32 = arith.constant 1 : i32
    %33:3 = scf.for %arg14 = %c0_i32 to %32 step %c1_i32 iter_args(%arg15 = %28, %arg16 = %30, %arg17 = %31) -> (vector<2x32xf32>, vector<2x32xf32>, vector<2x32xf32>)  : i32 {
      %c0_37 = arith.constant 0 : index
      %34 = arith.index_cast %arg14 : i32 to index
      %c0_38 = arith.constant 0 : index
      %35 = vector.load %arg13[%c0_37, %34, %c0_38] : memref<2x5x128xf32, #tpu.memory_space<vmem>>, vector<2x1x128xf32>
      %36 = vector.shape_cast %35 : vector<2x1x128xf32> to vector<2x128xf32>
      %cst_39 = arith.constant dense<0.000000e+00> : vector<2x128xf32>
      %37 = tpu.matmul %arg17, %4, %cst_39 {dimension_numbers = #tpu.dot_dimension_numbers<[1], [0], [0], [1], [0, 0, 1, 1], [], []>} : vector<2x32xf32>, vector<32x128xf32>, vector<2x128xf32> -> vector<2x128xf32>
      %38 = arith.addf %36, %37 : vector<2x128xf32>
      %cst_40 = arith.constant dense<0.000000e+00> : vector<2x128xf32>
      %39 = tpu.matmul %arg15, %1, %cst_40 {dimension_numbers = #tpu.dot_dimension_numbers<[1], [0], [0], [1], [0, 0, 1, 1], [], []>} : vector<2x32xf32>, vector<32x128xf32>, vector<2x128xf32> -> vector<2x128xf32>
      %40 = arith.addf %38, %39 : vector<2x128xf32>
      %41 = vector.extract_strided_slice %40 {offsets = [0, 0], sizes = [2, 32], strides = [1, 1]} : vector<2x128xf32> to vector<2x32xf32>
      %42 = arith.negf %41 : vector<2x32xf32>
      %43 = math.exp %42 : vector<2x32xf32>
      %cst_41 = arith.constant 1.000000e+00 : f32
      %44 = vector.broadcast %cst_41 : f32 to vector<2x32xf32>
      %45 = arith.addf %44, %43 : vector<2x32xf32>
      %46 = arith.divf %44, %45 : vector<2x32xf32>
      %47 = vector.extract_strided_slice %40 {offsets = [0, 32], sizes = [2, 32], strides = [1, 1]} : vector<2x128xf32> to vector<2x32xf32>
      %48 = arith.negf %47 : vector<2x32xf32>
      %49 = math.exp %48 : vector<2x32xf32>
      %cst_42 = arith.constant 1.000000e+00 : f32
      %50 = vector.broadcast %cst_42 : f32 to vector<2x32xf32>
      %51 = arith.addf %50, %49 : vector<2x32xf32>
      %52 = arith.divf %50, %51 : vector<2x32xf32>
      %53 = vector.extract_strided_slice %40 {offsets = [0, 64], sizes = [2, 32], strides = [1, 1]} : vector<2x128xf32> to vector<2x32xf32>
      %54 = math.tanh %53 : vector<2x32xf32>
      %55 = vector.extract_strided_slice %40 {offsets = [0, 96], sizes = [2, 32], strides = [1, 1]} : vector<2x128xf32> to vector<2x32xf32>
      %56 = arith.negf %55 : vector<2x32xf32>
      %57 = math.exp %56 : vector<2x32xf32>
      %cst_43 = arith.constant 1.000000e+00 : f32
      %58 = vector.broadcast %cst_43 : f32 to vector<2x32xf32>
      %59 = arith.addf %58, %57 : vector<2x32xf32>
      %60 = arith.divf %58, %59 : vector<2x32xf32>
      %61 = arith.mulf %52, %arg16 : vector<2x32xf32>
      %62 = arith.mulf %46, %54 : vector<2x32xf32>
      %63 = arith.addf %61, %62 : vector<2x32xf32>
      %64 = math.tanh %63 : vector<2x32xf32>
      %65 = arith.mulf %60, %64 : vector<2x32xf32>
      %cst_44 = arith.constant dense<0.000000e+00> : vector<2x32xf32>
      %66 = tpu.matmul %65, %6, %cst_44 {dimension_numbers = #tpu.dot_dimension_numbers<[1], [0], [0], [1], [0, 0, 1, 1], [], []>} : vector<2x32xf32>, vector<32x32xf32>, vector<2x32xf32> -> vector<2x32xf32>
      %67 = vector.shape_cast %66 : vector<2x32xf32> to vector<2x1x32xf32>
      "tpu.trace_start"() <{level = 10 : i32, message = "bqh,bkh->bqk"}> : () -> ()
      %cst_45 = arith.constant dense<0.000000e+00> : vector<2x1x4xf32>
      %68 = tpu.matmul %67, %5, %cst_45 {dimension_numbers = #tpu.dot_dimension_numbers<[2], [2], [1], [1], [0, 0, 0, 1, 1, 1], [0], [0]>} : vector<2x1x32xf32>, vector<2x4x32xf32>, vector<2x1x4xf32> -> vector<2x1x4xf32>
      "tpu.trace_stop"() : () -> ()
      %cst_46 = arith.constant dense<0xFF800000> : vector<2x1xf32>
      %69 = vector.multi_reduction <maximumf>, %68, %cst_46 [2] : vector<2x1x4xf32> to vector<2x1xf32>
      %70 = vector.shape_cast %69 : vector<2x1xf32> to vector<2x1x1xf32>
      %71 = vector.broadcast %70 : vector<2x1x1xf32> to vector<2x1x4xf32>
      %72 = arith.subf %68, %71 : vector<2x1x4xf32>
      %73 = math.exp %72 : vector<2x1x4xf32>
      %cst_47 = arith.constant dense<0.000000e+00> : vector<2x1xf32>
      %74 = vector.multi_reduction <add>, %73, %cst_47 [2] : vector<2x1x4xf32> to vector<2x1xf32>
      %75 = vector.shape_cast %74 : vector<2x1xf32> to vector<2x1x1xf32>
      %76 = tpu.reciprocal %75 {approx = true} : vector<2x1x1xf32> -> vector<2x1x1xf32>
      %77 = vector.broadcast %76 : vector<2x1x1xf32> to vector<2x1x4xf32>
      %78 = arith.mulf %73, %77 : vector<2x1x4xf32>
      "tpu.trace_start"() <{level = 10 : i32, message = "bqk,bkh->bqh"}> : () -> ()
      %cst_48 = arith.constant dense<0.000000e+00> : vector<2x1x32xf32>
      %79 = tpu.matmul %78, %5, %cst_48 {dimension_numbers = #tpu.dot_dimension_numbers<[2], [1], [1], [2], [0, 0, 0, 1, 1, 2], [0], [0]>} : vector<2x1x4xf32>, vector<2x4x32xf32>, vector<2x1x32xf32> -> vector<2x1x32xf32>
      "tpu.trace_stop"() : () -> ()
      %80 = vector.shape_cast %79 : vector<2x1x32xf32> to vector<2x32xf32>
      %cst_49 = arith.constant dense<0.000000e+00> : vector<2x32xf32>
      %81 = tpu.matmul %65, %7, %cst_49 {dimension_numbers = #tpu.dot_dimension_numbers<[1], [0], [0], [1], [0, 0, 1, 1], [], []>} : vector<2x32xf32>, vector<32x32xf32>, vector<2x32xf32> -> vector<2x32xf32>
      %cst_50 = arith.constant dense<0.000000e+00> : vector<2x32xf32>
      %82 = tpu.matmul %80, %8, %cst_50 {dimension_numbers = #tpu.dot_dimension_numbers<[1], [0], [0], [1], [0, 0, 1, 1], [], []>} : vector<2x32xf32>, vector<32x32xf32>, vector<2x32xf32> -> vector<2x32xf32>
      %83 = arith.addf %81, %82 : vector<2x32xf32>
      %84 = math.tanh %83 : vector<2x32xf32>
      %cst_51 = arith.constant dense<0.000000e+00> : vector<2x128xf32>
      %85 = tpu.matmul %84, %9, %cst_51 {dimension_numbers = #tpu.dot_dimension_numbers<[1], [0], [0], [1], [0, 0, 1, 1], [], []>} : vector<2x32xf32>, vector<32x128xf32>, vector<2x128xf32> -> vector<2x128xf32>
      %86 = vector.broadcast %10 : vector<1x128xf32> to vector<2x128xf32>
      %87 = arith.addf %85, %86 : vector<2x128xf32>
      %88 = vector.shape_cast %87 : vector<2x128xf32> to vector<2x1x128xf32>
      %c0_52 = arith.constant 0 : index
      %89 = arith.index_cast %arg14 : i32 to index
      %c0_53 = arith.constant 0 : index
      %90 = vector.load %arg12[%c0_52, %89, %c0_53] : memref<2x5x128xf32, #tpu.memory_space<vmem>>, vector<2x1x128xf32>
      tpu.vector_store %arg12[%c0_52, %89, %c0_53], %88 {strides = array<i32>} : memref<2x5x128xf32, #tpu.memory_space<vmem>>, vector<2x1x128xf32>,
      scf.yield %65, %63, %84 : vector<2x32xf32>, vector<2x32xf32>, vector<2x32xf32>
    }
    %c5_i32_36 = arith.constant 5 : i32
    return
  }
  func.func @transform_0(%arg0: i32) -> (i32, i32, i32) {
    %c0_i32 = arith.constant 0 : i32
    %c0_i32_0 = arith.constant 0 : i32
    %c0_i32_1 = arith.constant 0 : i32
    %c0_i32_2 = arith.constant 0 : i32
    return %c0_i32, %c0_i32_0, %c0_i32_1 : i32, i32, i32
  }
  func.func @transform_1(%arg0: i32) -> (i32, i32, i32) {
    %c0_i32 = arith.constant 0 : i32
    %c0_i32_0 = arith.constant 0 : i32
    %c0_i32_1 = arith.constant 0 : i32
    %c0_i32_2 = arith.constant 0 : i32
    return %c0_i32, %c0_i32_0, %c0_i32_1 : i32, i32, i32
  }
  func.func @transform_2(%arg0: i32) -> (i32, i32, i32) {
    %c0_i32 = arith.constant 0 : i32
    %c0_i32_0 = arith.constant 0 : i32
    %c0_i32_1 = arith.constant 0 : i32
    %c0_i32_2 = arith.constant 0 : i32
    return %c0_i32, %c0_i32_0, %c0_i32_1 : i32, i32, i32
  }
  func.func @transform_3(%arg0: i32) -> (i32, i32, i32) {
    %c0_i32 = arith.constant 0 : i32
    %c0_i32_0 = arith.constant 0 : i32
    %c0_i32_1 = arith.constant 0 : i32
    %c0_i32_2 = arith.constant 0 : i32
    return %c0_i32, %c0_i32_0, %c0_i32_1 : i32, i32, i32
  }
  func.func @transform_4(%arg0: i32) -> (i32, i32) {
    %c0_i32 = arith.constant 0 : i32
    %c0_i32_0 = arith.constant 0 : i32
    %c0_i32_1 = arith.constant 0 : i32
    return %c0_i32, %c0_i32_0 : i32, i32
  }
  func.func @transform_5(%arg0: i32) -> (i32, i32) {
    %c0_i32 = arith.constant 0 : i32
    %c0_i32_0 = arith.constant 0 : i32
    %c0_i32_1 = arith.constant 0 : i32
    return %c0_i32, %c0_i32_0 : i32, i32
  }
  func.func @transform_6(%arg0: i32) -> (i32, i32) {
    %c0_i32 = arith.constant 0 : i32
    %c0_i32_0 = arith.constant 0 : i32
    %c0_i32_1 = arith.constant 0 : i32
    return %c0_i32, %c0_i32_0 : i32, i32
  }
  func.func @transform_7(%arg0: i32) -> (i32, i32) {
    %c0_i32 = arith.constant 0 : i32
    %c0_i32_0 = arith.constant 0 : i32
    %c0_i32_1 = arith.constant 0 : i32
    return %c0_i32, %c0_i32_0 : i32, i32
  }
  func.func @transform_8(%arg0: i32) -> (i32, i32) {
    %c0_i32 = arith.constant 0 : i32
    %c0_i32_0 = arith.constant 0 : i32
    %c0_i32_1 = arith.constant 0 : i32
    return %c0_i32, %c0_i32_0 : i32, i32
  }
  func.func @transform_9(%arg0: i32) -> (i32, i32) {
    %c0_i32 = arith.constant 0 : i32
    %c0_i32_0 = arith.constant 0 : i32
    %c0_i32_1 = arith.constant 0 : i32
    return %c0_i32, %c0_i32_0 : i32, i32
  }
  func.func @transform_10(%arg0: i32) -> (i32, i32) {
    %c0_i32 = arith.constant 0 : i32
    %c0_i32_0 = arith.constant 0 : i32
    %c0_i32_1 = arith.constant 0 : i32
    return %c0_i32, %c0_i32_0 : i32, i32
  }
  func.func @transform_11(%arg0: i32) -> (i32, i32, i32) {
    %c0_i32 = arith.constant 0 : i32
    %c0_i32_0 = arith.constant 0 : i32
    %c0_i32_1 = arith.constant 0 : i32
    %c0_i32_2 = arith.constant 0 : i32
    return %c0_i32, %c0_i32_0, %c0_i32_1 : i32, i32, i32
  }
}

</mosaic_0001>

<llo_original>
// kernel: forward.7
$region0: #{forward.7}
  #allocation0 [shape = 'u32[]', space=smem, size = 0x4, offset = 0x4, fixed_abs, tag = 'smem constant byte address 0x4 - core index']
  #allocation1 [shape = 'u32[144,128]{1,0:T(1,128)}', space=vmem, size = 0x12000, scoped, tag = 'internal scratch']
  %s0 = inlined_call_operand.vmem [shape: f32[2,4,32], index: 0, kind: input, shape index: {}]
  %s1 = inlined_call_operand.vmem [shape: f32[2,8,32], index: 1, kind: input, shape index: {}]
  %s2 = inlined_call_operand.vmem [shape: f32[32,32], index: 2, kind: input, shape index: {}]
  %s3 = inlined_call_operand.vmem [shape: f32[64,32], index: 3, kind: input, shape index: {}]
  %s4 = inlined_call_operand.vmem [shape: f32[32,128], index: 4, kind: input, shape index: {}]
  %s5 = inlined_call_operand.vmem [shape: f32[1,128], index: 5, kind: input, shape index: {}]
  %s6 = inlined_call_operand.vmem [shape: f32[2,4,128], index: 6, kind: output, shape index: {}]
  %s7 = sld [smem:[#allocation0]]
  $region57: #{forward.7} parent=0
    _
  %s9 = ssub.s32 1, %s7
  %s10 = scalar_select 0, %s9, %s7
  loop: start=0, step=1, limit=4
  $region2: #{forward.7} parent=0 // loop_pre_header
    _
  $region3: #{forward.7} parent=0 // loop_header
    %s12 = sphi 0, %s16
    %p13 = scmp.ge.s32.totalorder %s12, 4
    %s22 = sphi 0, %s24
    %s25 = sphi 0, %s22
    %s26 = sphi 0, %s25
    %s42 = sphi 0, %s26
    %s48 = sphi 0, %s50
    %s51 = sphi 0, %s48
    %s52 = sphi 0, %s51
    %s68 = sphi 0, %s52
    %s72 = sphi 0, %s72
    %s74 = sphi 0, %s72
    %s75 = sphi 0, %s74
    %s89 = sphi 0, %s75
    %s93 = sphi 0, %s93
    %s95 = sphi 0, %s93
    %s96 = sphi 0, %s95
    %s110 = sphi 0, %s96
    %s114 = sphi 0, %s114
    %s116 = sphi 0, %s114
    %s117 = sphi 0, %s116
    %s131 = sphi 0, %s117
    %s135 = sphi 0, %s135
    %s137 = sphi 0, %s135
    %s138 = sphi 0, %s137
    %s152 = sphi 0, %s138
    %s158 = sphi 0, %s160
    %s161 = sphi 0, %s158
    %s162 = sphi 0, %s161
    %s178 = sphi 0, %s162
  $region4: #{forward.7} parent=0 // loop_header_branch
    %15 = sbr.rel (%p13) target = $region8
  $region5: #{forward.7} parent=0 // loop_body
    %s17 = ssub.s32 %s12, 1
    %s18 = ssub.s32 %s12, 2
    %s19 = sadd.s32 %s12, 1
    %s20 = ssub.s32 %s12, %s19
    %p21 = scmp.eq.s32.totalorder %s20, 0
    %s23 = sadd.s32 %s22, 1
    %s24 = scalar_select %p21, %s22, %s23
    %p27 = pneg %p21
    %p28 = scmp.eq.s32.totalorder %s12, 1
    %p29 = por %p27, %p28
    %p30 = scmp.ne.s32.totalorder %s22, %s25
    %p31 = scmp.eq.s32.totalorder %s12, 0
    %p32 = por %p30, %p31
    %p33 = scmp.ne.s32.totalorder %s22, %s25
    %p34 = scmp.eq.s32.totalorder %s17, 1
    %p35 = por %p33, %p34
    %p36 = scmp.ne.s32.totalorder %s25, %s26
    %p37 = scmp.eq.s32.totalorder %s17, 0
    %p38 = por %p36, %p37
    %p39 = scmp.ne.s32.totalorder %s25, %s26
    %p40 = scmp.eq.s32.totalorder %s18, 1
    %p41 = por %p39, %p40
    %p43 = scmp.ne.s32.totalorder %s26, %s42
    %p44 = scmp.eq.s32.totalorder %s18, 0
    %p45 = por %p43, %p44
    %s46 = ssub.s32 %s12, %s19
    %p47 = scmp.eq.s32.totalorder %s46, 0
    %s49 = sadd.s32 %s48, 1
    %s50 = scalar_select %p47, %s48, %s49
    %p53 = pneg %p47
    %p54 = scmp.eq.s32.totalorder %s12, 1
    %p55 = por %p53, %p54
    %p56 = scmp.ne.s32.totalorder %s48, %s51
    %p57 = scmp.eq.s32.totalorder %s12, 0
    %p58 = por %p56, %p57
    %p59 = scmp.ne.s32.totalorder %s48, %s51
    %p60 = scmp.eq.s32.totalorder %s17, 1
    %p61 = por %p59, %p60
    %p62 = scmp.ne.s32.totalorder %s51, %s52
    %p63 = scmp.eq.s32.totalorder %s17, 0
    %p64 = por %p62, %p63
    %p65 = scmp.ne.s32.totalorder %s51, %s52
    %p66 = scmp.eq.s32.totalorder %s18, 1
    %p67 = por %p65, %p66
    %p69 = scmp.ne.s32.totalorder %s52, %s68
    %p70 = scmp.eq.s32.totalorder %s18, 0
    %p71 = por %p69, %p70
    %s73 = sadd.s32 %s72, 1
    %p76 = scmp.eq.s32.totalorder %s12, 1
    %p77 = scmp.ne.s32.totalorder %s72, %s74
    %p78 = scmp.eq.s32.totalorder %s12, 0
    %p79 = por %p77, %p78
    %p80 = scmp.ne.s32.totalorder %s72, %s74
    %p81 = scmp.eq.s32.totalorder %s17, 1
    %p82 = por %p80, %p81
    %p83 = scmp.ne.s32.totalorder %s74, %s75
    %p84 = scmp.eq.s32.totalorder %s17, 0
    %p85 = por %p83, %p84
    %p86 = scmp.ne.s32.totalorder %s74, %s75
    %p87 = scmp.eq.s32.totalorder %s18, 1
    %p88 = por %p86, %p87
    %p90 = scmp.ne.s32.totalorder %s75, %s89
    %p91 = scmp.eq.s32.totalorder %s18, 0
    %p92 = por %p90, %p91
    %s94 = sadd.s32 %s93, 1
    %p97 = scmp.eq.s32.totalorder %s12, 1
    %p98 = scmp.ne.s32.totalorder %s93, %s95
    %p99 = scmp.eq.s32.totalorder %s12, 0
    %p100 = por %p98, %p99
    %p101 = scmp.ne.s32.totalorder %s93, %s95
    %p102 = scmp.eq.s32.totalorder %s17, 1
    %p103 = por %p101, %p102
    %p104 = scmp.ne.s32.totalorder %s95, %s96
    %p105 = scmp.eq.s32.totalorder %s17, 0
    %p106 = por %p104, %p105
    %p107 = scmp.ne.s32.totalorder %s95, %s96
    %p108 = scmp.eq.s32.totalorder %s18, 1
    %p109 = por %p107, %p108
    %p111 = scmp.ne.s32.totalorder %s96, %s110
    %p112 = scmp.eq.s32.totalorder %s18, 0
    %p113 = por %p111, %p112
    %s115 = sadd.s32 %s114, 1
    %p118 = scmp.eq.s32.totalorder %s12, 1
    %p119 = scmp.ne.s32.totalorder %s114, %s116
    %p120 = scmp.eq.s32.totalorder %s12, 0
    %p121 = por %p119, %p120
    %p122 = scmp.ne.s32.totalorder %s114, %s116
    %p123 = scmp.eq.s32.totalorder %s17, 1
    %p124 = por %p122, %p123
    %p125 = scmp.ne.s32.totalorder %s116, %s117
    %p126 = scmp.eq.s32.totalorder %s17, 0
    %p127 = por %p125, %p126
    %p128 = scmp.ne.s32.totalorder %s116, %s117
    %p129 = scmp.eq.s32.totalorder %s18, 1
    %p130 = por %p128, %p129
    %p132 = scmp.ne.s32.totalorder %s117, %s131
    %p133 = scmp.eq.s32.totalorder %s18, 0
    %p134 = por %p132, %p133
    %s136 = sadd.s32 %s135, 1
    %p139 = scmp.eq.s32.totalorder %s12, 1
    %p140 = scmp.ne.s32.totalorder %s135, %s137
    %p141 = scmp.eq.s32.totalorder %s12, 0
    %p142 = por %p140, %p141
    %p143 = scmp.ne.s32.totalorder %s135, %s137
    %p144 = scmp.eq.s32.totalorder %s17, 1
    %p145 = por %p143, %p144
    %p146 = scmp.ne.s32.totalorder %s137, %s138
    %p147 = scmp.eq.s32.totalorder %s17, 0
    %p148 = por %p146, %p147
    %p149 = scmp.ne.s32.totalorder %s137, %s138
    %p150 = scmp.eq.s32.totalorder %s18, 1
    %p151 = por %p149, %p150
    %p153 = scmp.ne.s32.totalorder %s138, %s152
    %p154 = scmp.eq.s32.totalorder %s18, 0
    %p155 = por %p153, %p154
    %s156 = ssub.s32 %s12, %s19
    %p157 = scmp.eq.s32.totalorder %s156, 0
    %s159 = sadd.s32 %s158, 1
    %s160 = scalar_select %p157, %s158, %s159
    %p163 = pneg %p157
    %p164 = scmp.eq.s32.totalorder %s12, 1
    %p165 = por %p163, %p164
    %p166 = scmp.ne.s32.totalorder %s158, %s161
    %p167 = scmp.eq.s32.totalorder %s12, 0
    %p168 = por %p166, %p167
    %p169 = scmp.ne.s32.totalorder %s158, %s161
    %p170 = scmp.eq.s32.totalorder %s17, 1
    %p171 = por %p169, %p170
    %p172 = scmp.ne.s32.totalorder %s161, %s162
    %p173 = scmp.eq.s32.totalorder %s17, 0
    %p174 = por %p172, %p173
    %p175 = scmp.ne.s32.totalorder %s161, %s162
    %p176 = scmp.eq.s32.totalorder %s18, 1
    %p177 = por %p175, %p176
    %p179 = scmp.ne.s32.totalorder %s162, %s178
    %p180 = scmp.eq.s32.totalorder %s18, 0
    %p181 = por %p179, %p180
    %p182 = scmp.le.s32.totalorder 1, %s12
    %p183 = scmp.lt.s32.totalorder %s12, 3
    %p184 = pnand %p182, %p183
    %p185 = pneg %p184
    // Predicated region
    $region9: #{forward.7} parent=5 // pred_check
      _
    $region10: #{forward.7} parent=5 // pred_check_branch
      %187 = sbr.rel (%p184) target = $region12
    $region11: #{forward.7} parent=5 // pred_region
      %s188 = ssub.s32 %s12, 1
      // Predicated region
      $region13: #{forward.7} parent=11 // pred_check
        %p189 = pneg %p85
      $region14: #{forward.7} parent=11 // pred_check_branch
        %191 = sbr.rel (%p189) target = $region16
      $region15: #{forward.7} parent=11 // pred_region
        _
      $region16: #{forward.7} parent=11 // pred_fallthru
        _
      // Predicated region
      $region17: #{forward.7} parent=11 // pred_check
        %p192 = pneg %p106
      $region18: #{forward.7} parent=11 // pred_check_branch
        %194 = sbr.rel (%p192) target = $region20
      $region19: #{forward.7} parent=11 // pred_region
        _
      $region20: #{forward.7} parent=11 // pred_fallthru
        _
      // Predicated region
      $region21: #{forward.7} parent=11 // pred_check
        %p195 = pneg %p127
      $region22: #{forward.7} parent=11 // pred_check_branch
        %197 = sbr.rel (%p195) target = $region24
      $region23: #{forward.7} parent=11 // pred_region
        _
      $region24: #{forward.7} parent=11 // pred_fallthru
        _
      // Predicated region
      $region25: #{forward.7} parent=11 // pred_check
        %p198 = pneg %p148
      $region26: #{forward.7} parent=11 // pred_check_branch
        %200 = sbr.rel (%p198) target = $region28
      $region27: #{forward.7} parent=11 // pred_region
        _
      $region28: #{forward.7} parent=11 // pred_fallthru
        _
    $region12: #{forward.7} parent=5 // pred_fallthru
      _
    %p201 = scmp.lt.s32.totalorder %s12, 2
    // Predicated region
    $region29: #{forward.7} parent=5 // pred_check
      %p202 = pneg %p201
    $region30: #{forward.7} parent=5 // pred_check_branch
      %204 = sbr.rel (%p202) target = $region32
    $region31: #{forward.7} parent=5 // pred_region
      // Predicated region
      $region33: #{forward.7} parent=31 // pred_check
        %p205 = pneg %p32
      $region34: #{forward.7} parent=31 // pred_check_branch
        %207 = sbr.rel (%p205) target = $region36
      $region35: #{forward.7} parent=31 // pred_region
        %p208 = scmp.lt.s32.totalorder %s12, 1
        %s209 = scalar_select %p208, %s12, 1
        %s210 = smul.addr %s209, 4
        %s211 = scalar_lea.vmem %s0, %s210
      $region36: #{forward.7} parent=31 // pred_fallthru
        _
      // Predicated region
      $region37: #{forward.7} parent=31 // pred_check
        %p212 = pneg %p58
      $region38: #{forward.7} parent=31 // pred_check_branch
        %214 = sbr.rel (%p212) target = $region40
      $region39: #{forward.7} parent=31 // pred_region
        %p215 = scmp.lt.s32.totalorder %s12, 1
        %s216 = scalar_select %p215, %s12, 1
        %s217 = smul.addr %s216, 8
        %s218 = scalar_lea.vmem %s1, %s217
      $region40: #{forward.7} parent=31 // pred_fallthru
        _
    $region32: #{forward.7} parent=5 // pred_fallthru
      _
    %p219 = scmp.le.s32.totalorder 1, %s12
    %p220 = scmp.lt.s32.totalorder %s12, 3
    %p221 = pnand %p219, %p220
    %p222 = pneg %p221
    // Predicated region
    $region41: #{forward.7} parent=5 // pred_check
      _
    $region42: #{forward.7} parent=5 // pred_check_branch
      %224 = sbr.rel (%p221) target = $region44
    $region43: #{forward.7} parent=5 // pred_region
      %s225 = ssub.s32 %s12, 1
      %p226 = scmp.lt.s32.totalorder %s17, 1
      %s227 = scalar_select %p226, %s17, 1
      %s228 = smul.addr %s227, 4
      %s229 = scalar_lea.vmem %s0, %s228
      %p230 = pneg %p38
      %p231 = pneg %p35
      %p232 = scmp.lt.s32.totalorder %s17, 1
      %s233 = scalar_select %p232, %s17, 1
      %s234 = smul.addr %s233, 8
      %s235 = scalar_lea.vmem %s1, %s234
      %p236 = pneg %p64
      %p237 = pneg %p61
      %p238 = pneg %p85
      %p239 = pneg %p82
      %p240 = pneg %p106
      %p241 = pneg %p103
      %p242 = pneg %p127
      %p243 = pneg %p124
      %p244 = pneg %p148
      %p245 = pneg %p145
      %p246 = pneg %p174
      %p247 = pneg %p171
      %p248 = scmp.lt.s32.totalorder %s17, 1
      %s249 = scalar_select %p248, %s17, 1
      %s250 = smul.addr %s249, 4
      %s251 = scalar_lea.vmem %s6, %s250
      %p252 = scmp.lt.s32.totalorder %s17, 1
      %s253 = scalar_select %p252, %s17, 1
      %s254 = smul.addr %s253, 4
      %s255 = scalar_lea.vmem %s0, %s254
      %p256 = scmp.lt.s32.totalorder %s17, 1
      %s257 = scalar_select %p256, %s17, 1
      %s258 = smul.addr %s257, 8
      %s259 = scalar_lea.vmem %s1, %s258
      %p260 = scmp.lt.s32.totalorder %s17, 1
      %s261 = scalar_select %p260, %s17, 1
      %s262 = smul.addr %s261, 4
      %s263 = scalar_lea.vmem %s6, %s262
      %v264 = vld [vmem:[%s255] sm:$0xf]
      %v265 = vld [vmem:[%s259] sm:$0xff]
      %v266 = vld [vmem:[%s2] sm:$0xff]
      %v267 = vld [vmem:[%s2 + $0x8] sm:$0xff]
      %v268 = vld [vmem:[%s2 + $0x10] sm:$0xff]
      %v269 = vld [vmem:[%s2 + $0x18] sm:$0xff]
      %vm270 = vcmask 261120
      %v272 = vsel %vm270, %v264, 0
      %274 = vmatprep.subr.mxu0 0.0
      %275 = vmatpush1.msra.mxu0 %v266
      %276 = vmatprep.subr.mxu0 0.0
      %277 = vmatpush1.msra.mxu0 %v267
      %278 = vmatprep.subr.mxu0 0.0
      %279 = vmatpush1.msra.mxu0 %v268
      %280 = vmatprep.subr.mxu0 0.0
      %281 = vmatpush1.msra.mxu0 %v269
      %282 = vmatprep.subr.mxu0 0.0
      %283 = vmatpush1.msra.mxu0 0.0
      %284 = vmatprep.subr.mxu0 0.0
      %285 = vmatpush1.msra.mxu0 0.0
      %286 = vmatprep.subr.mxu0 0.0
      %287 = vmatpush1.msra.mxu0 0.0
      %288 = vmatprep.subr.mxu0 0.0
      %289 = vmatpush1.msra.mxu0 0.0
      %290 = vmatprep.subr.mxu0 0.0
      %291 = vmatpush1.msra.mxu0 0.0
      %292 = vmatprep.subr.mxu0 0.0
      %293 = vmatpush1.msra.mxu0 0.0
      %294 = vmatprep.subr.mxu0 0.0
      %295 = vmatpush1.msra.mxu0 0.0
      %296 = vmatprep.subr.mxu0 0.0
      %297 = vmatpush1.msra.mxu0 0.0
      %298 = vmatprep.subr.mxu0 0.0
      %299 = vmatpush1.msra.mxu0 0.0
      %300 = vmatprep.subr.mxu0 0.0
      %301 = vmatpush1.msra.mxu0 0.0
      %302 = vmatprep.subr.mxu0 0.0
      %303 = vmatpush1.msra.mxu0 0.0
      %304 = vmatprep.subr.mxu0 0.0
      %305 = vmatpush1.msra.mxu0 0.0
      %306 = vmatprep.subr.mxu0 0.0
      %307 = vmatpush1.msra.mxu0 0.0
      %308 = vmatprep.subr.mxu0 0.0
      %309 = vmatpush1.msra.mxu0 0.0
      %310 = vmatprep.subr.mxu0 0.0
      %311 = vmatpush1.msra.mxu0 0.0
      %312 = vmatprep.subr.mxu0 0.0
      %313 = vmatpush1.msra.mxu0 0.0
      %314 = vmatprep.subr.mxu0 0.0
      %315 = vmatpush1.msra.mxu0 0.0
      %316 = vmatprep.subr.mxu0 0.0
      %317 = vmatpush1.msra.mxu0 0.0
      %318 = vmatprep.subr.mxu0 0.0
      %319 = vmatpush1.msra.mxu0 0.0
      %320 = vmatprep.subr.mxu0 0.0
      %321 = vmatpush1.msra.mxu0 0.0
      %322 = vmatprep.subr.mxu0 0.0
      %323 = vmatpush1.msra.mxu0 0.0
      %324 = vmatprep.subr.mxu0 0.0
      %325 = vmatpush1.msra.mxu0 0.0
      %326 = vmatprep.subr.mxu0 0.0
      %327 = vmatpush1.msra.mxu0 0.0
      %328 = vmatprep.subr.mxu0 0.0
      %329 = vmatpush1.msra.mxu0 0.0
      %330 = vmatprep.subr.mxu0 0.0
      %331 = vmatpush1.msra.mxu0 0.0
      %332 = vmatprep.subr.mxu0 0.0
      %333 = vmatpush1.msra.mxu0 0.0
      %334 = vmatprep.subr.mxu0 0.0
      %335 = vmatpush1.msra.mxu0 0.0
      %336 = vmatprep.subr.mxu0 0.0
      %337 = vmatpush1.msra.mxu0 0.0
      %338 = vmatprep.mubr.f32.mxu0 0.0
      %339 = vmatmul.mubr.f32.gmra.mrb[0].mxu0 %v272
      %v340 = vpop.f32.mrb[0].mxu0
      %v341 = vadd.f32 0.0, %v340
      %v342 = vpop.f32.mrb[0].mxu0
      %343 = vdwg.mxu0
      %v345 = vsel %vm270, %v341, 0
      %v348 = vsel %vm270, %v265, 0
      %350 = vmatprep.subr.mxu0 0.0
      %351 = vmatpush1.xpose.msra.mxu0 %v348
      %352 = vmatprep.subr.mxu0 0.0
      %353 = vmatpush1.xpose.msra.mxu0 0.0
      %354 = vmatprep.subr.mxu0 0.0
      %355 = vmatpush1.xpose.msra.mxu0 0.0
      %356 = vmatprep.subr.mxu0 0.0
      %357 = vmatpush1.xpose.msra.mxu0 0.0
      %358 = vmatprep.subr.mxu0 0.0
      %359 = vmatpush1.xpose.msra.mxu0 0.0
      %360 = vmatprep.subr.mxu0 0.0
      %361 = vmatpush1.xpose.msra.mxu0 0.0
      %362 = vmatprep.subr.mxu0 0.0
      %363 = vmatpush1.xpose.msra.mxu0 0.0
      %364 = vmatprep.subr.mxu0 0.0
      %365 = vmatpush1.xpose.msra.mxu0 0.0
      %366 = vmatprep.subr.mxu0 0.0
      %367 = vmatpush1.xpose.msra.mxu0 0.0
      %368 = vmatprep.subr.mxu0 0.0
      %369 = vmatpush1.xpose.msra.mxu0 0.0
      %370 = vmatprep.subr.mxu0 0.0
      %371 = vmatpush1.xpose.msra.mxu0 0.0
      %372 = vmatprep.subr.mxu0 0.0
      %373 = vmatpush1.xpose.msra.mxu0 0.0
      %374 = vmatprep.subr.mxu0 0.0
      %375 = vmatpush1.xpose.msra.mxu0 0.0
      %376 = vmatprep.subr.mxu0 0.0
      %377 = vmatpush1.xpose.msra.mxu0 0.0
      %378 = vmatprep.subr.mxu0 0.0
      %379 = vmatpush1.xpose.msra.mxu0 0.0
      %380 = vmatprep.subr.mxu0 0.0
      %381 = vmatpush1.xpose.msra.mxu0 0.0
      %382 = vmatprep.subr.mxu0 0.0
      %383 = vmatpush1.xpose.msra.mxu0 0.0
      %384 = vmatprep.subr.mxu0 0.0
      %385 = vmatpush1.xpose.msra.mxu0 0.0
      %386 = vmatprep.subr.mxu0 0.0
      %387 = vmatpush1.xpose.msra.mxu0 0.0
      %388 = vmatprep.subr.mxu0 0.0
      %389 = vmatpush1.xpose.msra.mxu0 0.0
      %390 = vmatprep.subr.mxu0 0.0
      %391 = vmatpush1.xpose.msra.mxu0 0.0
      %392 = vmatprep.subr.mxu0 0.0
      %393 = vmatpush1.xpose.msra.mxu0 0.0
      %394 = vmatprep.subr.mxu0 0.0
      %395 = vmatpush1.xpose.msra.mxu0 0.0
      %396 = vmatprep.subr.mxu0 0.0
      %397 = vmatpush1.xpose.msra.mxu0 0.0
      %398 = vmatprep.subr.mxu0 0.0
      %399 = vmatpush1.xpose.msra.mxu0 0.0
      %400 = vmatprep.subr.mxu0 0.0
      %401 = vmatpush1.xpose.msra.mxu0 0.0
      %402 = vmatprep.subr.mxu0 0.0
      %403 = vmatpush1.xpose.msra.mxu0 0.0
      %404 = vmatprep.subr.mxu0 0.0
      %405 = vmatpush1.xpose.msra.mxu0 0.0
      %406 = vmatprep.subr.mxu0 0.0
      %407 = vmatpush1.xpose.msra.mxu0 0.0
      %408 = vmatprep.subr.mxu0 0.0
      %409 = vmatpush1.xpose.msra.mxu0 0.0
      %410 = vmatprep.subr.mxu0 0.0
      %411 = vmatpush1.xpose.msra.mxu0 0.0
      %412 = vmatprep.subr.mxu0 0.0
      %413 = vmatpush1.xpose.msra.mxu0 0.0
      %414 = vmatprep.mubr.f32.mxu0 0.0
      %415 = vmatmul.mubr.f32.gmra.mrb[0].mxu0 %v345
      %v416 = vpop.f32.mrb[0].mxu0
      %v417 = vadd.f32 0.0, %v416
      %v418 = vpop.f32.mrb[0].mxu0
      %419 = vdwg.mxu0
      %vm420 = vcmask 60416
      %v421 = vsel %vm420, %v417, -inf
      %422 = vmax.xlane.f32.xlu0 %v421
      %v423 = vpop.xlane.xlu0 %422
      %v424 = vsub.f32 %v417, %v423
      %v425 = vmul.f32 %v424, 1.442695
      %v426 = vpow.pop %v425
      %v427 = vsel %vm420, %v426, 0.0
      %428 = vadd.xlane.f32.xlu0 %v427
      %v429 = vpop.xlane.xlu0 %428
      %v430 = vrcp.pop %v429
      %v431 = vmul.f32 %v426, %v430
      %vm432 = vcmask 64512
      %v434 = vsel %vm432, %v431, 0
      %436 = vmatprep.subr.mxu0 0.0
      %437 = vmatpush1.msra.mxu0 %v265
      %438 = vmatprep.subr.mxu0 0.0
      %439 = vmatpush1.msra.mxu0 0.0
      %440 = vmatprep.subr.mxu0 0.0
      %441 = vmatpush1.msra.mxu0 0.0
      %442 = vmatprep.subr.mxu0 0.0
      %443 = vmatpush1.msra.mxu0 0.0
      %444 = vmatprep.subr.mxu0 0.0
      %445 = vmatpush1.msra.mxu0 0.0
      %446 = vmatprep.subr.mxu0 0.0
      %447 = vmatpush1.msra.mxu0 0.0
      %448 = vmatprep.subr.mxu0 0.0
      %449 = vmatpush1.msra.mxu0 0.0
      %450 = vmatprep.subr.mxu0 0.0
      %451 = vmatpush1.msra.mxu0 0.0
      %452 = vmatprep.subr.mxu0 0.0
      %453 = vmatpush1.msra.mxu0 0.0
      %454 = vmatprep.subr.mxu0 0.0
      %455 = vmatpush1.msra.mxu0 0.0
      %456 = vmatprep.subr.mxu0 0.0
      %457 = vmatpush1.msra.mxu0 0.0
      %458 = vmatprep.subr.mxu0 0.0
      %459 = vmatpush1.msra.mxu0 0.0
      %460 = vmatprep.subr.mxu0 0.0
      %461 = vmatpush1.msra.mxu0 0.0
      %462 = vmatprep.subr.mxu0 0.0
      %463 = vmatpush1.msra.mxu0 0.0
      %464 = vmatprep.subr.mxu0 0.0
      %465 = vmatpush1.msra.mxu0 0.0
      %466 = vmatprep.subr.mxu0 0.0
      %467 = vmatpush1.msra.mxu0 0.0
      %468 = vmatprep.subr.mxu0 0.0
      %469 = vmatpush1.msra.mxu0 0.0
      %470 = vmatprep.subr.mxu0 0.0
      %471 = vmatpush1.msra.mxu0 0.0
      %472 = vmatprep.subr.mxu0 0.0
      %473 = vmatpush1.msra.mxu0 0.0
      %474 = vmatprep.subr.mxu0 0.0
      %475 = vmatpush1.msra.mxu0 0.0
      %476 = vmatprep.subr.mxu0 0.0
      %477 = vmatpush1.msra.mxu0 0.0
      %478 = vmatprep.subr.mxu0 0.0
      %479 = vmatpush1.msra.mxu0 0.0
      %480 = vmatprep.subr.mxu0 0.0
      %481 = vmatpush1.msra.mxu0 0.0
      %482 = vmatprep.subr.mxu0 0.0
      %483 = vmatpush1.msra.mxu0 0.0
      %484 = vmatprep.subr.mxu0 0.0
      %485 = vmatpush1.msra.mxu0 0.0
      %486 = vmatprep.subr.mxu0 0.0
      %487 = vmatpush1.msra.mxu0 0.0
      %488 = vmatprep.subr.mxu0 0.0
      %489 = vmatpush1.msra.mxu0 0.0
      %490 = vmatprep.subr.mxu0 0.0
      %491 = vmatpush1.msra.mxu0 0.0
      %492 = vmatprep.subr.mxu0 0.0
      %493 = vmatpush1.msra.mxu0 0.0
      %494 = vmatprep.subr.mxu0 0.0
      %495 = vmatpush1.msra.mxu0 0.0
      %496 = vmatprep.subr.mxu0 0.0
      %497 = vmatpush1.msra.mxu0 0.0
      %498 = vmatprep.subr.mxu0 0.0
      %499 = vmatpush1.msra.mxu0 0.0
      %500 = vmatprep.mubr.f32.mxu0 0.0
      %501 = vmatmul.mubr.f32.gmra.mrb[0].mxu0 %v434
      %v502 = vpop.f32.mrb[0].mxu0
      %v503 = vadd.f32 0.0, %v502
      %v504 = vpop.f32.mrb[0].mxu0
      %505 = vdwg.mxu0
      %v506 = vld [vmem:[%s3] sm:$0xff]
      %v507 = vld [vmem:[%s3 + $0x8] sm:$0xff]
      %v508 = vld [vmem:[%s3 + $0x10] sm:$0xff]
      %v509 = vld [vmem:[%s3 + $0x18] sm:$0xff]
      %v510 = vld [vmem:[%s3 + $0x20] sm:$0xff]
      %v511 = vld [vmem:[%s3 + $0x28] sm:$0xff]
      %v512 = vld [vmem:[%s3 + $0x30] sm:$0xff]
      %v513 = vld [vmem:[%s3 + $0x38] sm:$0xff]
      %514 = vmatprep.subr.mxu0 0.0
      %515 = vmatpush1.msra.mxu0 %v510
      %516 = vmatprep.subr.mxu0 0.0
      %517 = vmatpush1.msra.mxu0 %v511
      %518 = vmatprep.subr.mxu0 0.0
      %519 = vmatpush1.msra.mxu0 %v512
      %520 = vmatprep.subr.mxu0 0.0
      %521 = vmatpush1.msra.mxu0 %v513
      %522 = vmatprep.subr.mxu0 0.0
      %523 = vmatpush1.msra.mxu0 0.0
      %524 = vmatprep.subr.mxu0 0.0
      %525 = vmatpush1.msra.mxu0 0.0
      %526 = vmatprep.subr.mxu0 0.0
      %527 = vmatpush1.msra.mxu0 0.0
      %528 = vmatprep.subr.mxu0 0.0
      %529 = vmatpush1.msra.mxu0 0.0
      %530 = vmatprep.subr.mxu0 0.0
      %531 = vmatpush1.msra.mxu0 0.0
      %532 = vmatprep.subr.mxu0 0.0
      %533 = vmatpush1.msra.mxu0 0.0
      %534 = vmatprep.subr.mxu0 0.0
      %535 = vmatpush1.msra.mxu0 0.0
      %536 = vmatprep.subr.mxu0 0.0
      %537 = vmatpush1.msra.mxu0 0.0
      %538 = vmatprep.subr.mxu0 0.0
      %539 = vmatpush1.msra.mxu0 0.0
      %540 = vmatprep.subr.mxu0 0.0
      %541 = vmatpush1.msra.mxu0 0.0
      %542 = vmatprep.subr.mxu0 0.0
      %543 = vmatpush1.msra.mxu0 0.0
      %544 = vmatprep.subr.mxu0 0.0
      %545 = vmatpush1.msra.mxu0 0.0
      %546 = vmatprep.subr.mxu0 0.0
      %547 = vmatpush1.msra.mxu0 0.0
      %548 = vmatprep.subr.mxu0 0.0
      %549 = vmatpush1.msra.mxu0 0.0
      %550 = vmatprep.subr.mxu0 0.0
      %551 = vmatpush1.msra.mxu0 0.0
      %552 = vmatprep.subr.mxu0 0.0
      %553 = vmatpush1.msra.mxu0 0.0
      %554 = vmatprep.subr.mxu0 0.0
      %555 = vmatpush1.msra.mxu0 0.0
      %556 = vmatprep.subr.mxu0 0.0
      %557 = vmatpush1.msra.mxu0 0.0
      %558 = vmatprep.subr.mxu0 0.0
      %559 = vmatpush1.msra.mxu0 0.0
      %560 = vmatprep.subr.mxu0 0.0
      %561 = vmatpush1.msra.mxu0 0.0
      %562 = vmatprep.subr.mxu0 0.0
      %563 = vmatpush1.msra.mxu0 0.0
      %564 = vmatprep.subr.mxu0 0.0
      %565 = vmatpush1.msra.mxu0 0.0
      %566 = vmatprep.subr.mxu0 0.0
      %567 = vmatpush1.msra.mxu0 0.0
      %568 = vmatprep.subr.mxu0 0.0
      %569 = vmatpush1.msra.mxu0 0.0
      %570 = vmatprep.subr.mxu0 0.0
      %571 = vmatpush1.msra.mxu0 0.0
      %572 = vmatprep.subr.mxu0 0.0
      %573 = vmatpush1.msra.mxu0 0.0
      %574 = vmatprep.subr.mxu0 0.0
      %575 = vmatpush1.msra.mxu0 0.0
      %576 = vmatprep.subr.mxu0 0.0
      %577 = vmatpush1.msra.mxu0 0.0
      %578 = vmatprep.mubr.f32.mxu0 0.0
      %579 = vmatmul.mubr.f32.gmra.mrb[0].mxu0 %v272
      %v580 = vpop.f32.mrb[0].mxu0
      %v581 = vadd.f32 0.0, %v580
      %v582 = vpop.f32.mrb[0].mxu0
      %583 = vdwg.mxu0
      %v585 = vsel %vm270, %v503, 0
      %587 = vmatprep.subr.mxu0 0.0
      %588 = vmatpush1.msra.mxu0 %v506
      %589 = vmatprep.subr.mxu0 0.0
      %590 = vmatpush1.msra.mxu0 %v507
      %591 = vmatprep.subr.mxu0 0.0
      %592 = vmatpush1.msra.mxu0 %v508
      %593 = vmatprep.subr.mxu0 0.0
      %594 = vmatpush1.msra.mxu0 %v509
      %595 = vmatprep.subr.mxu0 0.0
      %596 = vmatpush1.msra.mxu0 0.0
      %597 = vmatprep.subr.mxu0 0.0
      %598 = vmatpush1.msra.mxu0 0.0
      %599 = vmatprep.subr.mxu0 0.0
      %600 = vmatpush1.msra.mxu0 0.0
      %601 = vmatprep.subr.mxu0 0.0
      %602 = vmatpush1.msra.mxu0 0.0
      %603 = vmatprep.subr.mxu0 0.0
      %604 = vmatpush1.msra.mxu0 0.0
      %605 = vmatprep.subr.mxu0 0.0
      %606 = vmatpush1.msra.mxu0 0.0
      %607 = vmatprep.subr.mxu0 0.0
      %608 = vmatpush1.msra.mxu0 0.0
      %609 = vmatprep.subr.mxu0 0.0
      %610 = vmatpush1.msra.mxu0 0.0
      %611 = vmatprep.subr.mxu0 0.0
      %612 = vmatpush1.msra.mxu0 0.0
      %613 = vmatprep.subr.mxu0 0.0
      %614 = vmatpush1.msra.mxu0 0.0
      %615 = vmatprep.subr.mxu0 0.0
      %616 = vmatpush1.msra.mxu0 0.0
      %617 = vmatprep.subr.mxu0 0.0
      %618 = vmatpush1.msra.mxu0 0.0
      %619 = vmatprep.subr.mxu0 0.0
      %620 = vmatpush1.msra.mxu0 0.0
      %621 = vmatprep.subr.mxu0 0.0
      %622 = vmatpush1.msra.mxu0 0.0
      %623 = vmatprep.subr.mxu0 0.0
      %624 = vmatpush1.msra.mxu0 0.0
      %625 = vmatprep.subr.mxu0 0.0
      %626 = vmatpush1.msra.mxu0 0.0
      %627 = vmatprep.subr.mxu0 0.0
      %628 = vmatpush1.msra.mxu0 0.0
      %629 = vmatprep.subr.mxu0 0.0
      %630 = vmatpush1.msra.mxu0 0.0
      %631 = vmatprep.subr.mxu0 0.0
      %632 = vmatpush1.msra.mxu0 0.0
      %633 = vmatprep.subr.mxu0 0.0
      %634 = vmatpush1.msra.mxu0 0.0
      %635 = vmatprep.subr.mxu0 0.0
      %636 = vmatpush1.msra.mxu0 0.0
      %637 = vmatprep.subr.mxu0 0.0
      %638 = vmatpush1.msra.mxu0 0.0
      %639 = vmatprep.subr.mxu0 0.0
      %640 = vmatpush1.msra.mxu0 0.0
      %641 = vmatprep.subr.mxu0 0.0
      %642 = vmatpush1.msra.mxu0 0.0
      %643 = vmatprep.subr.mxu0 0.0
      %644 = vmatpush1.msra.mxu0 0.0
      %645 = vmatprep.subr.mxu0 0.0
      %646 = vmatpush1.msra.mxu0 0.0
      %647 = vmatprep.subr.mxu0 0.0
      %648 = vmatpush1.msra.mxu0 0.0
      %649 = vmatprep.subr.mxu0 0.0
      %650 = vmatpush1.msra.mxu0 0.0
      %651 = vmatprep.mubr.f32.mxu0 0.0
      %652 = vmatmul.mubr.f32.gmra.mrb[0].mxu0 %v585
      %v653 = vpop.f32.mrb[0].mxu0
      %v654 = vadd.f32 %v581, %v653
      %v655 = vpop.f32.mrb[0].mxu0
      %656 = vdwg.mxu0
      %v657 = vtanh.pop %v654
      %v658 = vld [vmem:[%s4] sm:$0xff]
      %v659 = vld [vmem:[%s4 + $0x8] sm:$0xff]
      %v660 = vld [vmem:[%s4 + $0x10] sm:$0xff]
      %v661 = vld [vmem:[%s4 + $0x18] sm:$0xff]
      %v662 = vld [vmem:[%s5] sm:$0x1]
      %v664 = vlaneseq
      %v665 = vshrl.u32 %v664, 7
      %v666 = vsub.s32 0, %v665
      %v667 = vrot.slane %v662, %v666
      %v670 = vsel %vm270, %v657, 0
      %672 = vmatprep.subr.mxu0 0.0
      %673 = vmatpush1.msra.mxu0 %v658
      %674 = vmatprep.subr.mxu0 0.0
      %675 = vmatpush1.msra.mxu0 %v659
      %676 = vmatprep.subr.mxu0 0.0
      %677 = vmatpush1.msra.mxu0 %v660
      %678 = vmatprep.subr.mxu0 0.0
      %679 = vmatpush1.msra.mxu0 %v661
      %680 = vmatprep.subr.mxu0 0.0
      %681 = vmatpush1.msra.mxu0 0.0
      %682 = vmatprep.subr.mxu0 0.0
      %683 = vmatpush1.msra.mxu0 0.0
      %684 = vmatprep.subr.mxu0 0.0
      %685 = vmatpush1.msra.mxu0 0.0
      %686 = vmatprep.subr.mxu0 0.0
      %687 = vmatpush1.msra.mxu0 0.0
      %688 = vmatprep.subr.mxu0 0.0
      %689 = vmatpush1.msra.mxu0 0.0
      %690 = vmatprep.subr.mxu0 0.0
      %691 = vmatpush1.msra.mxu0 0.0
      %692 = vmatprep.subr.mxu0 0.0
      %693 = vmatpush1.msra.mxu0 0.0
      %694 = vmatprep.subr.mxu0 0.0
      %695 = vmatpush1.msra.mxu0 0.0
      %696 = vmatprep.subr.mxu0 0.0
      %697 = vmatpush1.msra.mxu0 0.0
      %698 = vmatprep.subr.mxu0 0.0
      %699 = vmatpush1.msra.mxu0 0.0
      %700 = vmatprep.subr.mxu0 0.0
      %701 = vmatpush1.msra.mxu0 0.0
      %702 = vmatprep.subr.mxu0 0.0
      %703 = vmatpush1.msra.mxu0 0.0
      %704 = vmatprep.subr.mxu0 0.0
      %705 = vmatpush1.msra.mxu0 0.0
      %706 = vmatprep.subr.mxu0 0.0
      %707 = vmatpush1.msra.mxu0 0.0
      %708 = vmatprep.subr.mxu0 0.0
      %709 = vmatpush1.msra.mxu0 0.0
      %710 = vmatprep.subr.mxu0 0.0
      %711 = vmatpush1.msra.mxu0 0.0
      %712 = vmatprep.subr.mxu0 0.0
      %713 = vmatpush1.msra.mxu0 0.0
      %714 = vmatprep.subr.mxu0 0.0
      %715 = vmatpush1.msra.mxu0 0.0
      %716 = vmatprep.subr.mxu0 0.0
      %717 = vmatpush1.msra.mxu0 0.0
      %718 = vmatprep.subr.mxu0 0.0
      %719 = vmatpush1.msra.mxu0 0.0
      %720 = vmatprep.subr.mxu0 0.0
      %721 = vmatpush1.msra.mxu0 0.0
      %722 = vmatprep.subr.mxu0 0.0
      %723 = vmatpush1.msra.mxu0 0.0
      %724 = vmatprep.subr.mxu0 0.0
      %725 = vmatpush1.msra.mxu0 0.0
      %726 = vmatprep.subr.mxu0 0.0
      %727 = vmatpush1.msra.mxu0 0.0
      %728 = vmatprep.subr.mxu0 0.0
      %729 = vmatpush1.msra.mxu0 0.0
      %730 = vmatprep.subr.mxu0 0.0
      %731 = vmatpush1.msra.mxu0 0.0
      %732 = vmatprep.subr.mxu0 0.0
      %733 = vmatpush1.msra.mxu0 0.0
      %734 = vmatprep.subr.mxu0 0.0
      %735 = vmatpush1.msra.mxu0 0.0
      %736 = vmatprep.mubr.f32.mxu0 0.0
      %737 = vmatmul.mubr.f32.gmra.mrb[0].mxu0 %v670
      %v738 = vpop.f32.mrb[0].mxu0
      %v739 = vadd.f32 %v667, %v738
      %v740 = vpop.f32.mrb[0].mxu0
      %741 = vdwg.mxu0
      %742 = vst [vmem:[%s263] sm:$0xf] %v739
      %p743 = scmp.lt.s32.totalorder %s17, 1
      %s744 = scalar_select %p743, %s17, 1
      %s745 = smul.addr %s744, 4
      %s746 = scalar_lea.vmem %s6, %s745
      // Predicated region
      $region45: #{forward.7} parent=43 // pred_check
        %p747 = pneg %p171
      $region46: #{forward.7} parent=43 // pred_check_branch
        %749 = sbr.rel (%p747) target = $region48
      $region47: #{forward.7} parent=43 // pred_region
        _
      $region48: #{forward.7} parent=43 // pred_fallthru
        _
    $region44: #{forward.7} parent=5 // pred_fallthru
      _
    %p750 = scmp.le.s32.totalorder 2, %s12
    // Predicated region
    $region49: #{forward.7} parent=5 // pred_check
      %p751 = pneg %p750
    $region50: #{forward.7} parent=5 // pred_check_branch
      %753 = sbr.rel (%p751) target = $region52
    $region51: #{forward.7} parent=5 // pred_region
      %s754 = ssub.s32 %s12, 2
      // Predicated region
      $region53: #{forward.7} parent=51 // pred_check
        %p755 = pneg %p177
      $region54: #{forward.7} parent=51 // pred_check_branch
        %757 = sbr.rel (%p755) target = $region56
      $region55: #{forward.7} parent=51 // pred_region
        %p758 = scmp.lt.s32.totalorder %s18, 1
        %s759 = scalar_select %p758, %s18, 1
        %s760 = smul.addr %s759, 4
        %s761 = scalar_lea.vmem %s6, %s760
      $region56: #{forward.7} parent=51 // pred_fallthru
        _
    $region52: #{forward.7} parent=5 // pred_fallthru
      _
  $region6: #{forward.7} parent=0 // loop_footer
    %s16 = sadd.s32 1, %s12
  $region7: #{forward.7} parent=0 // loop_footer_branch
    %11 = sbr.rel target = $region3
  $region8: #{forward.7} parent=0 // loop_exit
    _

// kernel: forward.6
$region0: #{forward.6}
  #allocation0 [shape = 'u32[]', space=smem, size = 0x4, offset = 0x4, fixed_abs, tag = 'smem constant byte address 0x4 - core index']
  #allocation1 [shape = 'u32[144,128]{1,0:T(1,128)}', space=vmem, size = 0x12000, scoped, tag = 'internal scratch']
  #allocation2 [shape = 'f32[2,4,128]{2,1,0:T(4,128)}', space=vmem, size = 0x1000, scoped, tag = 'scratch operand']
  %s0 = inlined_call_operand.vmem [shape: f32[2,4,32], index: 0, kind: input, shape index: {}]
  %s1 = inlined_call_operand.vmem [shape: f32[2,32], index: 1, kind: input, shape index: {}]
  %s2 = inlined_call_operand.vmem [shape: f32[2,32], index: 2, kind: input, shape index: {}]
  %s3 = inlined_call_operand.vmem [shape: f32[32,128], index: 3, kind: input, shape index: {}]
  %s4 = inlined_call_operand.vmem [shape: f32[32,128], index: 4, kind: input, shape index: {}]
  %s5 = inlined_call_operand.vmem [shape: f32[1,128], index: 5, kind: input, shape index: {}]
  %s6 = inlined_call_operand.vmem [shape: f32[2,4,32], index: 6, kind: output, shape index: {}]
  %s7 = sld [smem:[#allocation0]]
  $region41: #{forward.6} parent=0
    _
  %s9 = ssub.s32 1, %s7
  %s10 = scalar_select 0, %s9, %s7
  // Predicated region
  $region2: #{forward.6} parent=0 // pred_check
    _
  $region3: #{forward.6} parent=0 // pred_check_branch
    %12 = sbr.rel (0) target = $region5
  $region4: #{forward.6} parent=0 // pred_region
    _
  $region5: #{forward.6} parent=0 // pred_fallthru
    _
  // Predicated region
  $region6: #{forward.6} parent=0 // pred_check
    _
  $region7: #{forward.6} parent=0 // pred_check_branch
    %14 = sbr.rel (0) target = $region9
  $region8: #{forward.6} parent=0 // pred_region
    _
  $region9: #{forward.6} parent=0 // pred_fallthru
    _
  // Predicated region
  $region10: #{forward.6} parent=0 // pred_check
    _
  $region11: #{forward.6} parent=0 // pred_check_branch
    %16 = sbr.rel (0) target = $region13
  $region12: #{forward.6} parent=0 // pred_region
    _
  $region13: #{forward.6} parent=0 // pred_fallthru
    _
  // Predicated region
  $region14: #{forward.6} parent=0 // pred_check
    _
  $region15: #{forward.6} parent=0 // pred_check_branch
    %18 = sbr.rel (0) target = $region17
  $region16: #{forward.6} parent=0 // pred_region
    _
  $region17: #{forward.6} parent=0 // pred_fallthru
    _
  // Predicated region
  $region18: #{forward.6} parent=0 // pred_check
    _
  $region19: #{forward.6} parent=0 // pred_check_branch
    %20 = sbr.rel (0) target = $region21
  $region20: #{forward.6} parent=0 // pred_region
    _
  $region21: #{forward.6} parent=0 // pred_fallthru
    _
  // Predicated region
  $region22: #{forward.6} parent=0 // pred_check
    _
  $region23: #{forward.6} parent=0 // pred_check_branch
    %22 = sbr.rel (0) target = $region25
  $region24: #{forward.6} parent=0 // pred_region
    _
  $region25: #{forward.6} parent=0 // pred_fallthru
    _
  %v23 = vld [vmem:[%s3] sm:$0xff]
  %v24 = vld [vmem:[%s3 + $0x8] sm:$0xff]
  %v25 = vld [vmem:[%s3 + $0x10] sm:$0xff]
  %v26 = vld [vmem:[%s3 + $0x18] sm:$0xff]
  %v27 = vld [vmem:[%s4] sm:$0xff]
  %v28 = vld [vmem:[%s4 + $0x8] sm:$0xff]
  %v29 = vld [vmem:[%s4 + $0x10] sm:$0xff]
  %v30 = vld [vmem:[%s4 + $0x18] sm:$0xff]
  %v31 = vld [vmem:[%s5] sm:$0x1]
  %v32 = vld [vmem:[%s0] sm:$0xf]
  %v34 = vlaneseq
  %v35 = vshrl.u32 %v34, 7
  %v36 = vsub.s32 0, %v35
  %v37 = vrot.slane %v31, %v36
  %vm39 = vcmask 261120
  %v41 = vsel %vm39, %v32, 0
  %43 = vmatprep.subr.mxu0 0.0
  %44 = vmatpush1.msra.mxu0 %v23
  %45 = vmatprep.subr.mxu0 0.0
  %46 = vmatpush1.msra.mxu0 %v24
  %47 = vmatprep.subr.mxu0 0.0
  %48 = vmatpush1.msra.mxu0 %v25
  %49 = vmatprep.subr.mxu0 0.0
  %50 = vmatpush1.msra.mxu0 %v26
  %51 = vmatprep.subr.mxu0 0.0
  %52 = vmatpush1.msra.mxu0 0.0
  %53 = vmatprep.subr.mxu0 0.0
  %54 = vmatpush1.msra.mxu0 0.0
  %55 = vmatprep.subr.mxu0 0.0
  %56 = vmatpush1.msra.mxu0 0.0
  %57 = vmatprep.subr.mxu0 0.0
  %58 = vmatpush1.msra.mxu0 0.0
  %59 = vmatprep.subr.mxu0 0.0
  %60 = vmatpush1.msra.mxu0 0.0
  %61 = vmatprep.subr.mxu0 0.0
  %62 = vmatpush1.msra.mxu0 0.0
  %63 = vmatprep.subr.mxu0 0.0
  %64 = vmatpush1.msra.mxu0 0.0
  %65 = vmatprep.subr.mxu0 0.0
  %66 = vmatpush1.msra.mxu0 0.0
  %67 = vmatprep.subr.mxu0 0.0
  %68 = vmatpush1.msra.mxu0 0.0
  %69 = vmatprep.subr.mxu0 0.0
  %70 = vmatpush1.msra.mxu0 0.0
  %71 = vmatprep.subr.mxu0 0.0
  %72 = vmatpush1.msra.mxu0 0.0
  %73 = vmatprep.subr.mxu0 0.0
  %74 = vmatpush1.msra.mxu0 0.0
  %75 = vmatprep.subr.mxu0 0.0
  %76 = vmatpush1.msra.mxu0 0.0
  %77 = vmatprep.subr.mxu0 0.0
  %78 = vmatpush1.msra.mxu0 0.0
  %79 = vmatprep.subr.mxu0 0.0
  %80 = vmatpush1.msra.mxu0 0.0
  %81 = vmatprep.subr.mxu0 0.0
  %82 = vmatpush1.msra.mxu0 0.0
  %83 = vmatprep.subr.mxu0 0.0
  %84 = vmatpush1.msra.mxu0 0.0
  %85 = vmatprep.subr.mxu0 0.0
  %86 = vmatpush1.msra.mxu0 0.0
  %87 = vmatprep.subr.mxu0 0.0
  %88 = vmatpush1.msra.mxu0 0.0
  %89 = vmatprep.subr.mxu0 0.0
  %90 = vmatpush1.msra.mxu0 0.0
  %91 = vmatprep.subr.mxu0 0.0
  %92 = vmatpush1.msra.mxu0 0.0
  %93 = vmatprep.subr.mxu0 0.0
  %94 = vmatpush1.msra.mxu0 0.0
  %95 = vmatprep.subr.mxu0 0.0
  %96 = vmatpush1.msra.mxu0 0.0
  %97 = vmatprep.subr.mxu0 0.0
  %98 = vmatpush1.msra.mxu0 0.0
  %99 = vmatprep.subr.mxu0 0.0
  %100 = vmatpush1.msra.mxu0 0.0
  %101 = vmatprep.subr.mxu0 0.0
  %102 = vmatpush1.msra.mxu0 0.0
  %103 = vmatprep.subr.mxu0 0.0
  %104 = vmatpush1.msra.mxu0 0.0
  %105 = vmatprep.subr.mxu0 0.0
  %106 = vmatpush1.msra.mxu0 0.0
  %107 = vmatprep.mubr.f32.mxu0 0.0
  %108 = vmatmul.mubr.f32.gmra.mrb[0].mxu0 %v41
  %v109 = vpop.f32.mrb[0].mxu0
  %v110 = vadd.f32 %v37, %v109
  %v111 = vpop.f32.mrb[0].mxu0
  %112 = vdwg.mxu0
  %113 = vst [vmem:[#allocation2] sm:$0xf] %v110
  %s114 = scalar_lea.vmem %s0, 4
  %v115 = vld [vmem:[%s114] sm:$0xf]
  %v117 = vsel %vm39, %v115, 0
  %119 = vmatprep.subr.mxu0 0.0
  %120 = vmatpush1.msra.mxu0 %v23
  %121 = vmatprep.subr.mxu0 0.0
  %122 = vmatpush1.msra.mxu0 %v24
  %123 = vmatprep.subr.mxu0 0.0
  %124 = vmatpush1.msra.mxu0 %v25
  %125 = vmatprep.subr.mxu0 0.0
  %126 = vmatpush1.msra.mxu0 %v26
  %127 = vmatprep.subr.mxu0 0.0
  %128 = vmatpush1.msra.mxu0 0.0
  %129 = vmatprep.subr.mxu0 0.0
  %130 = vmatpush1.msra.mxu0 0.0
  %131 = vmatprep.subr.mxu0 0.0
  %132 = vmatpush1.msra.mxu0 0.0
  %133 = vmatprep.subr.mxu0 0.0
  %134 = vmatpush1.msra.mxu0 0.0
  %135 = vmatprep.subr.mxu0 0.0
  %136 = vmatpush1.msra.mxu0 0.0
  %137 = vmatprep.subr.mxu0 0.0
  %138 = vmatpush1.msra.mxu0 0.0
  %139 = vmatprep.subr.mxu0 0.0
  %140 = vmatpush1.msra.mxu0 0.0
  %141 = vmatprep.subr.mxu0 0.0
  %142 = vmatpush1.msra.mxu0 0.0
  %143 = vmatprep.subr.mxu0 0.0
  %144 = vmatpush1.msra.mxu0 0.0
  %145 = vmatprep.subr.mxu0 0.0
  %146 = vmatpush1.msra.mxu0 0.0
  %147 = vmatprep.subr.mxu0 0.0
  %148 = vmatpush1.msra.mxu0 0.0
  %149 = vmatprep.subr.mxu0 0.0
  %150 = vmatpush1.msra.mxu0 0.0
  %151 = vmatprep.subr.mxu0 0.0
  %152 = vmatpush1.msra.mxu0 0.0
  %153 = vmatprep.subr.mxu0 0.0
  %154 = vmatpush1.msra.mxu0 0.0
  %155 = vmatprep.subr.mxu0 0.0
  %156 = vmatpush1.msra.mxu0 0.0
  %157 = vmatprep.subr.mxu0 0.0
  %158 = vmatpush1.msra.mxu0 0.0
  %159 = vmatprep.subr.mxu0 0.0
  %160 = vmatpush1.msra.mxu0 0.0
  %161 = vmatprep.subr.mxu0 0.0
  %162 = vmatpush1.msra.mxu0 0.0
  %163 = vmatprep.subr.mxu0 0.0
  %164 = vmatpush1.msra.mxu0 0.0
  %165 = vmatprep.subr.mxu0 0.0
  %166 = vmatpush1.msra.mxu0 0.0
  %167 = vmatprep.subr.mxu0 0.0
  %168 = vmatpush1.msra.mxu0 0.0
  %169 = vmatprep.subr.mxu0 0.0
  %170 = vmatpush1.msra.mxu0 0.0
  %171 = vmatprep.subr.mxu0 0.0
  %172 = vmatpush1.msra.mxu0 0.0
  %173 = vmatprep.subr.mxu0 0.0
  %174 = vmatpush1.msra.mxu0 0.0
  %175 = vmatprep.subr.mxu0 0.0
  %176 = vmatpush1.msra.mxu0 0.0
  %177 = vmatprep.subr.mxu0 0.0
  %178 = vmatpush1.msra.mxu0 0.0
  %179 = vmatprep.subr.mxu0 0.0
  %180 = vmatpush1.msra.mxu0 0.0
  %181 = vmatprep.subr.mxu0 0.0
  %182 = vmatpush1.msra.mxu0 0.0
  %183 = vmatprep.mubr.f32.mxu0 0.0
  %184 = vmatmul.mubr.f32.gmra.mrb[0].mxu0 %v117
  %v185 = vpop.f32.mrb[0].mxu0
  %v186 = vadd.f32 %v37, %v185
  %v187 = vpop.f32.mrb[0].mxu0
  %188 = vdwg.mxu0
  %s189 = scalar_lea.vmem [#allocation2], 4
  %190 = vst [vmem:[%s189] sm:$0xf] %v186
  %v191 = vld [vmem:[%s1] sm:$0x3]
  %v192 = vld [vmem:[%s2] sm:$0x3]
  loop: start=0, step=1, limit=4
  $region26: #{forward.6} parent=0 // loop_pre_header
    _
  $region27: #{forward.6} parent=0 // loop_header
    %s194 = sphi 0, %s198
    %p195 = scmp.ge.s32.totalorder %s194, 4
    %v199 = vphi %v191, %v355
    %v200 = vphi %v192, %v362
  $region28: #{forward.6} parent=0 // loop_header_branch
    %197 = sbr.rel (%p195) target = $region32
  $region29: #{forward.6} parent=0 // loop_body
    %s201 = scalar_lea.vmem [#allocation2], %s194
    %v202 = vld [vmem:[%s201] sm:$0x1]
    %v203 = vld [vmem:[%s201 + $0x4] sm:$0x1]
    %v205 = vsel %vm39, %v199, 0
    %207 = vmatprep.subr.mxu0 0.0
    %208 = vmatpush1.msra.mxu0 %v27
    %209 = vmatprep.subr.mxu0 0.0
    %210 = vmatpush1.msra.mxu0 %v28
    %211 = vmatprep.subr.mxu0 0.0
    %212 = vmatpush1.msra.mxu0 %v29
    %213 = vmatprep.subr.mxu0 0.0
    %214 = vmatpush1.msra.mxu0 %v30
    %215 = vmatprep.subr.mxu0 0.0
    %216 = vmatpush1.msra.mxu0 0.0
    %217 = vmatprep.subr.mxu0 0.0
    %218 = vmatpush1.msra.mxu0 0.0
    %219 = vmatprep.subr.mxu0 0.0
    %220 = vmatpush1.msra.mxu0 0.0
    %221 = vmatprep.subr.mxu0 0.0
    %222 = vmatpush1.msra.mxu0 0.0
    %223 = vmatprep.subr.mxu0 0.0
    %224 = vmatpush1.msra.mxu0 0.0
    %225 = vmatprep.subr.mxu0 0.0
    %226 = vmatpush1.msra.mxu0 0.0
    %227 = vmatprep.subr.mxu0 0.0
    %228 = vmatpush1.msra.mxu0 0.0
    %229 = vmatprep.subr.mxu0 0.0
    %230 = vmatpush1.msra.mxu0 0.0
    %231 = vmatprep.subr.mxu0 0.0
    %232 = vmatpush1.msra.mxu0 0.0
    %233 = vmatprep.subr.mxu0 0.0
    %234 = vmatpush1.msra.mxu0 0.0
    %235 = vmatprep.subr.mxu0 0.0
    %236 = vmatpush1.msra.mxu0 0.0
    %237 = vmatprep.subr.mxu0 0.0
    %238 = vmatpush1.msra.mxu0 0.0
    %239 = vmatprep.subr.mxu0 0.0
    %240 = vmatpush1.msra.mxu0 0.0
    %241 = vmatprep.subr.mxu0 0.0
    %242 = vmatpush1.msra.mxu0 0.0
    %243 = vmatprep.subr.mxu0 0.0
    %244 = vmatpush1.msra.mxu0 0.0
    %245 = vmatprep.subr.mxu0 0.0
    %246 = vmatpush1.msra.mxu0 0.0
    %247 = vmatprep.subr.mxu0 0.0
    %248 = vmatpush1.msra.mxu0 0.0
    %249 = vmatprep.subr.mxu0 0.0
    %250 = vmatpush1.msra.mxu0 0.0
    %251 = vmatprep.subr.mxu0 0.0
    %252 = vmatpush1.msra.mxu0 0.0
    %253 = vmatprep.subr.mxu0 0.0
    %254 = vmatpush1.msra.mxu0 0.0
    %255 = vmatprep.subr.mxu0 0.0
    %256 = vmatpush1.msra.mxu0 0.0
    %257 = vmatprep.subr.mxu0 0.0
    %258 = vmatpush1.msra.mxu0 0.0
    %259 = vmatprep.subr.mxu0 0.0
    %260 = vmatpush1.msra.mxu0 0.0
    %261 = vmatprep.subr.mxu0 0.0
    %262 = vmatpush1.msra.mxu0 0.0
    %263 = vmatprep.subr.mxu0 0.0
    %264 = vmatpush1.msra.mxu0 0.0
    %265 = vmatprep.subr.mxu0 0.0
    %266 = vmatpush1.msra.mxu0 0.0
    %267 = vmatprep.subr.mxu0 0.0
    %268 = vmatpush1.msra.mxu0 0.0
    %269 = vmatprep.subr.mxu0 0.0
    %270 = vmatpush1.msra.mxu0 0.0
    %271 = vmatprep.mubr.f32.mxu0 0.0
    %272 = vmatmul.mubr.f32.gmra.mrb[0].mxu0 %v205
    %v273 = vpop.f32.mrb[0].mxu0
    %v274 = vadd.f32 0.0, %v273
    %v275 = vpop.f32.mrb[0].mxu0
    %276 = vdwg.mxu0
    %v278 = vrot.slane %v274, 1
    %v281 = vadd.f32 %v202, %v274
    %v282 = vadd.f32 %v203, %v278
    %v283 = vxor.u32 %v281, 2147483648
    %v284 = vxor.u32 %v282, 2147483648
    %v285 = vmul.f32 %v283, 1.442695
    %v286 = vpow.pop %v285
    %v287 = vmul.f32 %v284, 1.442695
    %v288 = vpow.pop %v287
    %v289 = vadd.f32 %v286, 1.0
    %v290 = vadd.f32 %v288, 1.0
    %v291 = vrcp.pop %v289
    %v292 = vmul.f32 1.0, %v291
    %v293 = vrcp.pop %v290
    %v294 = vmul.f32 1.0, %v293
    %v295 = vtanh.pop %v281
    %v296 = vtanh.pop %v282
    %v298 = vrot.slane %v200, 1
    %299 = vrot.lane.b32.xlu0 %v200, 32
    %v300 = vpop.permute.xlu0 %299
    %301 = vrot.lane.b32.xlu0 %v298, 32
    %v302 = vpop.permute.xlu0 %301
    %v305 = vmul.f32 %v292, %v300
    %v306 = vmul.f32 %v294, %v302
    %309 = vrot.lane.b32.xlu0 %v295, 64
    %v310 = vpop.permute.xlu0 %309
    %311 = vrot.lane.b32.xlu0 %v296, 64
    %v312 = vpop.permute.xlu0 %311
    %v315 = vmul.f32 %v292, %v310
    %v316 = vmul.f32 %v294, %v312
    %319 = vrot.lane.b32.xlu0 %v315, 32
    %v320 = vpop.permute.xlu0 %319
    %321 = vrot.lane.b32.xlu0 %v316, 32
    %v322 = vpop.permute.xlu0 %321
    %v325 = vadd.f32 %v305, %v320
    %v326 = vadd.f32 %v306, %v322
    %v327 = vtanh.pop %v325
    %v328 = vtanh.pop %v326
    %331 = vrot.lane.b32.xlu0 %v327, 64
    %v332 = vpop.permute.xlu0 %331
    %333 = vrot.lane.b32.xlu0 %v328, 64
    %v334 = vpop.permute.xlu0 %333
    %v337 = vmul.f32 %v292, %v332
    %v338 = vmul.f32 %v294, %v334
    %341 = vrot.lane.b32.xlu0 %v337, 32
    %v342 = vpop.permute.xlu0 %341
    %343 = vrot.lane.b32.xlu0 %v338, 32
    %v344 = vpop.permute.xlu0 %343
    %s347 = scalar_lea.vmem %s6, %s194
    %vm348 = vcmask 253952
    %349 = vst.msk [vmem:[%s347] sm:$0x1] %vm348, %v342
    %350 = vst.msk [vmem:[%s347 + $0x4] sm:$0x1] %vm348, %v344
    %v351 = vrot.slane %v338, 7
    %vm352 = vcmask 1041409
    %v353 = vsel %vm352, %v351, %v337
    %354 = vrot.lane.b32.xlu0 %v353, 32
    %v355 = vpop.permute.xlu0 %354
    %v359 = vrot.slane %v326, 7
    %v360 = vsel %vm352, %v359, %v325
    %361 = vrot.lane.b32.xlu0 %v360, 96
    %v362 = vpop.permute.xlu0 %361
  $region30: #{forward.6} parent=0 // loop_footer
    %s198 = sadd.s32 1, %s194
  $region31: #{forward.6} parent=0 // loop_footer_branch
    %193 = sbr.rel target = $region27
  $region32: #{forward.6} parent=0 // loop_exit
    _
  // Predicated region
  $region33: #{forward.6} parent=0 // pred_check
    _
  $region34: #{forward.6} parent=0 // pred_check_branch
    %365 = sbr.rel (0) target = $region36
  $region35: #{forward.6} parent=0 // pred_region
    _
  $region36: #{forward.6} parent=0 // pred_fallthru
    _
  // Predicated region
  $region37: #{forward.6} parent=0 // pred_check
    _
  $region38: #{forward.6} parent=0 // pred_check_branch
    %367 = sbr.rel (0) target = $region40
  $region39: #{forward.6} parent=0 // pred_region
    _
  $region40: #{forward.6} parent=0 // pred_fallthru
    _

// kernel: forward.5
$region0: #{forward.5}
  #allocation0 [shape = 'u32[]', space=smem, size = 0x4, offset = 0x4, fixed_abs, tag = 'smem constant byte address 0x4 - core index']
  #allocation1 [shape = 'u32[144,128]{1,0:T(1,128)}', space=vmem, size = 0x12000, scoped, tag = 'internal scratch']
  #allocation2 [shape = 'f32[2,8,64]{2,1,0:T(8,128)}', space=vmem, size = 0x2000, scoped, tag = 'scratch operand']
  %s0 = inlined_call_operand.vmem [shape: f32[2,8,32], index: 0, kind: input, shape index: {}]
  %s1 = inlined_call_operand.vmem [shape: f32[2,32,64], index: 1, kind: input, shape index: {}]
  %s2 = inlined_call_operand.vmem [shape: f32[2,16,64], index: 2, kind: input, shape index: {}]
  %s3 = inlined_call_operand.vmem [shape: f32[2,1,64], index: 3, kind: input, shape index: {}]
  %s4 = inlined_call_operand.vmem [shape: f32[2,2,8,16], index: 4, kind: output, shape index: {0}]
  %s5 = inlined_call_operand.vmem [shape: f32[2,2,16], index: 5, kind: output, shape index: {1}]
  %s6 = inlined_call_operand.vmem [shape: f32[2,2,16], index: 6, kind: output, shape index: {2}]
  %7 = xla_tuple %s4, %s5, %s6
  %s8 = sld [smem:[#allocation0]]
  $region72: #{forward.5} parent=0
    _
  %s10 = ssub.s32 1, %s8
  %s11 = scalar_select 0, %s10, %s8
  loop: start=0, step=1, limit=4
  $region2: #{forward.5} parent=0 // loop_pre_header
    _
  $region3: #{forward.5} parent=0 // loop_header
    %s13 = sphi 0, %s17
    %p14 = scmp.ge.s32.totalorder %s13, 4
    %s21 = sphi 0, %s21
    %s23 = sphi 0, %s21
    %s24 = sphi 0, %s23
    %s38 = sphi 0, %s24
    %s44 = sphi 0, %s46
    %s47 = sphi 0, %s44
    %s48 = sphi 0, %s47
    %s64 = sphi 0, %s48
    %s70 = sphi 0, %s72
    %s73 = sphi 0, %s70
    %s74 = sphi 0, %s73
    %s90 = sphi 0, %s74
    %s96 = sphi 0, %s98
    %s99 = sphi 0, %s96
    %s100 = sphi 0, %s99
    %s116 = sphi 0, %s100
    %s122 = sphi 0, %s124
    %s125 = sphi 0, %s122
    %s126 = sphi 0, %s125
    %s142 = sphi 0, %s126
    %s148 = sphi 0, %s150
    %s151 = sphi 0, %s148
    %s152 = sphi 0, %s151
    %s168 = sphi 0, %s152
    %s174 = sphi 0, %s176
    %s177 = sphi 0, %s174
    %s178 = sphi 0, %s177
    %s194 = sphi 0, %s178
  $region4: #{forward.5} parent=0 // loop_header_branch
    %16 = sbr.rel (%p14) target = $region8
  $region5: #{forward.5} parent=0 // loop_body
    %s18 = ssub.s32 %s13, 1
    %s19 = ssub.s32 %s13, 2
    %s20 = sadd.s32 %s13, 1
    %s22 = sadd.s32 %s21, 1
    %p25 = scmp.eq.s32.totalorder %s13, 1
    %p26 = scmp.ne.s32.totalorder %s21, %s23
    %p27 = scmp.eq.s32.totalorder %s13, 0
    %p28 = por %p26, %p27
    %p29 = scmp.ne.s32.totalorder %s21, %s23
    %p30 = scmp.eq.s32.totalorder %s18, 1
    %p31 = por %p29, %p30
    %p32 = scmp.ne.s32.totalorder %s23, %s24
    %p33 = scmp.eq.s32.totalorder %s18, 0
    %p34 = por %p32, %p33
    %p35 = scmp.ne.s32.totalorder %s23, %s24
    %p36 = scmp.eq.s32.totalorder %s19, 1
    %p37 = por %p35, %p36
    %p39 = scmp.ne.s32.totalorder %s24, %s38
    %p40 = scmp.eq.s32.totalorder %s19, 0
    %p41 = por %p39, %p40
    %s42 = ssub.s32 %s13, %s20
    %p43 = scmp.eq.s32.totalorder %s42, 0
    %s45 = sadd.s32 %s44, 1
    %s46 = scalar_select %p43, %s44, %s45
    %p49 = pneg %p43
    %p50 = scmp.eq.s32.totalorder %s13, 1
    %p51 = por %p49, %p50
    %p52 = scmp.ne.s32.totalorder %s44, %s47
    %p53 = scmp.eq.s32.totalorder %s13, 0
    %p54 = por %p52, %p53
    %p55 = scmp.ne.s32.totalorder %s44, %s47
    %p56 = scmp.eq.s32.totalorder %s18, 1
    %p57 = por %p55, %p56
    %p58 = scmp.ne.s32.totalorder %s47, %s48
    %p59 = scmp.eq.s32.totalorder %s18, 0
    %p60 = por %p58, %p59
    %p61 = scmp.ne.s32.totalorder %s47, %s48
    %p62 = scmp.eq.s32.totalorder %s19, 1
    %p63 = por %p61, %p62
    %p65 = scmp.ne.s32.totalorder %s48, %s64
    %p66 = scmp.eq.s32.totalorder %s19, 0
    %p67 = por %p65, %p66
    %s68 = ssub.s32 %s13, %s20
    %p69 = scmp.eq.s32.totalorder %s68, 0
    %s71 = sadd.s32 %s70, 1
    %s72 = scalar_select %p69, %s70, %s71
    %p75 = pneg %p69
    %p76 = scmp.eq.s32.totalorder %s13, 1
    %p77 = por %p75, %p76
    %p78 = scmp.ne.s32.totalorder %s70, %s73
    %p79 = scmp.eq.s32.totalorder %s13, 0
    %p80 = por %p78, %p79
    %p81 = scmp.ne.s32.totalorder %s70, %s73
    %p82 = scmp.eq.s32.totalorder %s18, 1
    %p83 = por %p81, %p82
    %p84 = scmp.ne.s32.totalorder %s73, %s74
    %p85 = scmp.eq.s32.totalorder %s18, 0
    %p86 = por %p84, %p85
    %p87 = scmp.ne.s32.totalorder %s73, %s74
    %p88 = scmp.eq.s32.totalorder %s19, 1
    %p89 = por %p87, %p88
    %p91 = scmp.ne.s32.totalorder %s74, %s90
    %p92 = scmp.eq.s32.totalorder %s19, 0
    %p93 = por %p91, %p92
    %s94 = ssub.s32 %s13, %s20
    %p95 = scmp.eq.s32.totalorder %s94, 0
    %s97 = sadd.s32 %s96, 1
    %s98 = scalar_select %p95, %s96, %s97
    %p101 = pneg %p95
    %p102 = scmp.eq.s32.totalorder %s13, 1
    %p103 = por %p101, %p102
    %p104 = scmp.ne.s32.totalorder %s96, %s99
    %p105 = scmp.eq.s32.totalorder %s13, 0
    %p106 = por %p104, %p105
    %p107 = scmp.ne.s32.totalorder %s96, %s99
    %p108 = scmp.eq.s32.totalorder %s18, 1
    %p109 = por %p107, %p108
    %p110 = scmp.ne.s32.totalorder %s99, %s100
    %p111 = scmp.eq.s32.totalorder %s18, 0
    %p112 = por %p110, %p111
    %p113 = scmp.ne.s32.totalorder %s99, %s100
    %p114 = scmp.eq.s32.totalorder %s19, 1
    %p115 = por %p113, %p114
    %p117 = scmp.ne.s32.totalorder %s100, %s116
    %p118 = scmp.eq.s32.totalorder %s19, 0
    %p119 = por %p117, %p118
    %s120 = ssub.s32 %s13, %s20
    %p121 = scmp.eq.s32.totalorder %s120, 0
    %s123 = sadd.s32 %s122, 1
    %s124 = scalar_select %p121, %s122, %s123
    %p127 = pneg %p121
    %p128 = scmp.eq.s32.totalorder %s13, 1
    %p129 = por %p127, %p128
    %p130 = scmp.ne.s32.totalorder %s122, %s125
    %p131 = scmp.eq.s32.totalorder %s13, 0
    %p132 = por %p130, %p131
    %p133 = scmp.ne.s32.totalorder %s122, %s125
    %p134 = scmp.eq.s32.totalorder %s18, 1
    %p135 = por %p133, %p134
    %p136 = scmp.ne.s32.totalorder %s125, %s126
    %p137 = scmp.eq.s32.totalorder %s18, 0
    %p138 = por %p136, %p137
    %p139 = scmp.ne.s32.totalorder %s125, %s126
    %p140 = scmp.eq.s32.totalorder %s19, 1
    %p141 = por %p139, %p140
    %p143 = scmp.ne.s32.totalorder %s126, %s142
    %p144 = scmp.eq.s32.totalorder %s19, 0
    %p145 = por %p143, %p144
    %s146 = ssub.s32 %s13, %s20
    %p147 = scmp.eq.s32.totalorder %s146, 0
    %s149 = sadd.s32 %s148, 1
    %s150 = scalar_select %p147, %s148, %s149
    %p153 = pneg %p147
    %p154 = scmp.eq.s32.totalorder %s13, 1
    %p155 = por %p153, %p154
    %p156 = scmp.ne.s32.totalorder %s148, %s151
    %p157 = scmp.eq.s32.totalorder %s13, 0
    %p158 = por %p156, %p157
    %p159 = scmp.ne.s32.totalorder %s148, %s151
    %p160 = scmp.eq.s32.totalorder %s18, 1
    %p161 = por %p159, %p160
    %p162 = scmp.ne.s32.totalorder %s151, %s152
    %p163 = scmp.eq.s32.totalorder %s18, 0
    %p164 = por %p162, %p163
    %p165 = scmp.ne.s32.totalorder %s151, %s152
    %p166 = scmp.eq.s32.totalorder %s19, 1
    %p167 = por %p165, %p166
    %p169 = scmp.ne.s32.totalorder %s152, %s168
    %p170 = scmp.eq.s32.totalorder %s19, 0
    %p171 = por %p169, %p170
    %s172 = ssub.s32 %s13, %s20
    %p173 = scmp.eq.s32.totalorder %s172, 0
    %s175 = sadd.s32 %s174, 1
    %s176 = scalar_select %p173, %s174, %s175
    %p179 = pneg %p173
    %p180 = scmp.eq.s32.totalorder %s13, 1
    %p181 = por %p179, %p180
    %p182 = scmp.ne.s32.totalorder %s174, %s177
    %p183 = scmp.eq.s32.totalorder %s13, 0
    %p184 = por %p182, %p183
    %p185 = scmp.ne.s32.totalorder %s174, %s177
    %p186 = scmp.eq.s32.totalorder %s18, 1
    %p187 = por %p185, %p186
    %p188 = scmp.ne.s32.totalorder %s177, %s178
    %p189 = scmp.eq.s32.totalorder %s18, 0
    %p190 = por %p188, %p189
    %p191 = scmp.ne.s32.totalorder %s177, %s178
    %p192 = scmp.eq.s32.totalorder %s19, 1
    %p193 = por %p191, %p192
    %p195 = scmp.ne.s32.totalorder %s178, %s194
    %p196 = scmp.eq.s32.totalorder %s19, 0
    %p197 = por %p195, %p196
    %p198 = scmp.le.s32.totalorder 1, %s13
    %p199 = scmp.lt.s32.totalorder %s13, 3
    %p200 = pnand %p198, %p199
    %p201 = pneg %p200
    // Predicated region
    $region9: #{forward.5} parent=5 // pred_check
      _
    $region10: #{forward.5} parent=5 // pred_check_branch
      %203 = sbr.rel (%p200) target = $region12
    $region11: #{forward.5} parent=5 // pred_region
      %s204 = ssub.s32 %s13, 1
      // Predicated region
      $region13: #{forward.5} parent=11 // pred_check
        %p205 = pneg %p34
      $region14: #{forward.5} parent=11 // pred_check_branch
        %207 = sbr.rel (%p205) target = $region16
      $region15: #{forward.5} parent=11 // pred_region
        _
      $region16: #{forward.5} parent=11 // pred_fallthru
        _
    $region12: #{forward.5} parent=5 // pred_fallthru
      _
    %p208 = scmp.lt.s32.totalorder %s13, 2
    // Predicated region
    $region17: #{forward.5} parent=5 // pred_check
      %p209 = pneg %p208
    $region18: #{forward.5} parent=5 // pred_check_branch
      %211 = sbr.rel (%p209) target = $region20
    $region19: #{forward.5} parent=5 // pred_region
      // Predicated region
      $region21: #{forward.5} parent=19 // pred_check
        %p212 = pneg %p54
      $region22: #{forward.5} parent=19 // pred_check_branch
        %214 = sbr.rel (%p212) target = $region24
      $region23: #{forward.5} parent=19 // pred_region
        %p215 = scmp.lt.s32.totalorder %s13, 1
        %s216 = scalar_select %p215, %s13, 1
        %s217 = smul.addr %s216, 4
        %s218 = smul.addr %s217, 8
        %s219 = scalar_lea.vmem %s1, %s218
      $region24: #{forward.5} parent=19 // pred_fallthru
        _
      // Predicated region
      $region25: #{forward.5} parent=19 // pred_check
        %p220 = pneg %p80
      $region26: #{forward.5} parent=19 // pred_check_branch
        %222 = sbr.rel (%p220) target = $region28
      $region27: #{forward.5} parent=19 // pred_region
        %p223 = scmp.lt.s32.totalorder %s13, 1
        %s224 = scalar_select %p223, %s13, 1
        %s225 = smul.addr %s224, 2
        %s226 = smul.addr %s225, 8
        %s227 = scalar_lea.vmem %s2, %s226
      $region28: #{forward.5} parent=19 // pred_fallthru
        _
      // Predicated region
      $region29: #{forward.5} parent=19 // pred_check
        %p228 = pneg %p106
      $region30: #{forward.5} parent=19 // pred_check_branch
        %230 = sbr.rel (%p228) target = $region32
      $region31: #{forward.5} parent=19 // pred_region
        %p231 = scmp.lt.s32.totalorder %s13, 1
        %s232 = scalar_select %p231, %s13, 1
        %s233 = scalar_lea.vmem %s3, %s232
      $region32: #{forward.5} parent=19 // pred_fallthru
        _
    $region20: #{forward.5} parent=5 // pred_fallthru
      _
    %p234 = scmp.le.s32.totalorder 1, %s13
    %p235 = scmp.lt.s32.totalorder %s13, 3
    %p236 = pnand %p234, %p235
    %p237 = pneg %p236
    // Predicated region
    $region33: #{forward.5} parent=5 // pred_check
      _
    $region34: #{forward.5} parent=5 // pred_check_branch
      %239 = sbr.rel (%p236) target = $region36
    $region35: #{forward.5} parent=5 // pred_region
      %s240 = ssub.s32 %s13, 1
      %p241 = pneg %p34
      %p242 = pneg %p31
      %p243 = scmp.lt.s32.totalorder %s18, 1
      %s244 = scalar_select %p243, %s18, 1
      %s245 = smul.addr %s244, 4
      %s246 = smul.addr %s245, 8
      %s247 = scalar_lea.vmem %s1, %s246
      %p248 = pneg %p60
      %p249 = pneg %p57
      %p250 = scmp.lt.s32.totalorder %s18, 1
      %s251 = scalar_select %p250, %s18, 1
      %s252 = smul.addr %s251, 2
      %s253 = smul.addr %s252, 8
      %s254 = scalar_lea.vmem %s2, %s253
      %p255 = pneg %p86
      %p256 = pneg %p83
      %p257 = scmp.lt.s32.totalorder %s18, 1
      %s258 = scalar_select %p257, %s18, 1
      %s259 = scalar_lea.vmem %s3, %s258
      %p260 = pneg %p112
      %p261 = pneg %p109
      %p262 = pneg %p138
      %p263 = pneg %p135
      %p264 = scmp.lt.s32.totalorder %s18, 1
      %s265 = scalar_select %p264, %s18, 1
      %s266 = smul.addr %s265, 2
      %s267 = smul.addr %s266, 8
      %s268 = scalar_lea.vmem %s4, %s267
      %p269 = pneg %p164
      %p270 = pneg %p161
      %p271 = scmp.lt.s32.totalorder %s18, 1
      %s272 = scalar_select %p271, %s18, 1
      %s273 = smul.addr %s272, 2
      %s274 = scalar_lea.vmem %s5, %s273
      %p275 = pneg %p190
      %p276 = pneg %p187
      %p277 = scmp.lt.s32.totalorder %s18, 1
      %s278 = scalar_select %p277, %s18, 1
      %s279 = smul.addr %s278, 2
      %s280 = scalar_lea.vmem %s6, %s279
      %p281 = scmp.lt.s32.totalorder %s18, 1
      %s282 = scalar_select %p281, %s18, 1
      %s283 = smul.addr %s282, 4
      %s284 = smul.addr %s283, 8
      %s285 = scalar_lea.vmem %s1, %s284
      %p286 = scmp.lt.s32.totalorder %s18, 1
      %s287 = scalar_select %p286, %s18, 1
      %s288 = smul.addr %s287, 2
      %s289 = smul.addr %s288, 8
      %s290 = scalar_lea.vmem %s2, %s289
      %p291 = scmp.lt.s32.totalorder %s18, 1
      %s292 = scalar_select %p291, %s18, 1
      %s293 = scalar_lea.vmem %s3, %s292
      %p294 = scmp.lt.s32.totalorder %s18, 1
      %s295 = scalar_select %p294, %s18, 1
      %s296 = smul.addr %s295, 2
      %s297 = smul.addr %s296, 8
      %s298 = scalar_lea.vmem %s4, %s297
      %p299 = scmp.lt.s32.totalorder %s18, 1
      %s300 = scalar_select %p299, %s18, 1
      %s301 = smul.addr %s300, 2
      %s302 = scalar_lea.vmem %s5, %s301
      %p303 = scmp.lt.s32.totalorder %s18, 1
      %s304 = scalar_select %p303, %s18, 1
      %s305 = smul.addr %s304, 2
      %s306 = scalar_lea.vmem %s6, %s305
      %v307 = vld [vmem:[%s285] sm:$0xff]
      %v308 = vld [vmem:[%s285 + $0x8] sm:$0xff]
      %v309 = vld [vmem:[%s285 + $0x10] sm:$0xff]
      %v310 = vld [vmem:[%s285 + $0x18] sm:$0xff]
      %v311 = vld [vmem:[%s290] sm:$0xff]
      %v312 = vld [vmem:[%s290 + $0x8] sm:$0xff]
      %v313 = vld [vmem:[%s293] sm:$0x1]
      %v314 = vld [vmem:[%s0] sm:$0xff]
      %v316 = vlaneseq
      %v317 = vshrl.u32 %v316, 7
      %v318 = vsub.s32 0, %v317
      %v319 = vrot.slane %v313, %v318
      %vm321 = vcmask 261120
      %v323 = vsel %vm321, %v314, 0
      %325 = vmatprep.subr.mxu0 0.0
      %326 = vmatpush1.msra.mxu0 %v307
      %327 = vmatprep.subr.mxu0 0.0
      %328 = vmatpush1.msra.mxu0 %v308
      %329 = vmatprep.subr.mxu0 0.0
      %330 = vmatpush1.msra.mxu0 %v309
      %331 = vmatprep.subr.mxu0 0.0
      %332 = vmatpush1.msra.mxu0 %v310
      %333 = vmatprep.subr.mxu0 0.0
      %334 = vmatpush1.msra.mxu0 0.0
      %335 = vmatprep.subr.mxu0 0.0
      %336 = vmatpush1.msra.mxu0 0.0
      %337 = vmatprep.subr.mxu0 0.0
      %338 = vmatpush1.msra.mxu0 0.0
      %339 = vmatprep.subr.mxu0 0.0
      %340 = vmatpush1.msra.mxu0 0.0
      %341 = vmatprep.subr.mxu0 0.0
      %342 = vmatpush1.msra.mxu0 0.0
      %343 = vmatprep.subr.mxu0 0.0
      %344 = vmatpush1.msra.mxu0 0.0
      %345 = vmatprep.subr.mxu0 0.0
      %346 = vmatpush1.msra.mxu0 0.0
      %347 = vmatprep.subr.mxu0 0.0
      %348 = vmatpush1.msra.mxu0 0.0
      %349 = vmatprep.subr.mxu0 0.0
      %350 = vmatpush1.msra.mxu0 0.0
      %351 = vmatprep.subr.mxu0 0.0
      %352 = vmatpush1.msra.mxu0 0.0
      %353 = vmatprep.subr.mxu0 0.0
      %354 = vmatpush1.msra.mxu0 0.0
      %355 = vmatprep.subr.mxu0 0.0
      %356 = vmatpush1.msra.mxu0 0.0
      %357 = vmatprep.subr.mxu0 0.0
      %358 = vmatpush1.msra.mxu0 0.0
      %359 = vmatprep.subr.mxu0 0.0
      %360 = vmatpush1.msra.mxu0 0.0
      %361 = vmatprep.subr.mxu0 0.0
      %362 = vmatpush1.msra.mxu0 0.0
      %363 = vmatprep.subr.mxu0 0.0
      %364 = vmatpush1.msra.mxu0 0.0
      %365 = vmatprep.subr.mxu0 0.0
      %366 = vmatpush1.msra.mxu0 0.0
      %367 = vmatprep.subr.mxu0 0.0
      %368 = vmatpush1.msra.mxu0 0.0
      %369 = vmatprep.subr.mxu0 0.0
      %370 = vmatpush1.msra.mxu0 0.0
      %371 = vmatprep.subr.mxu0 0.0
      %372 = vmatpush1.msra.mxu0 0.0
      %373 = vmatprep.subr.mxu0 0.0
      %374 = vmatpush1.msra.mxu0 0.0
      %375 = vmatprep.subr.mxu0 0.0
      %376 = vmatpush1.msra.mxu0 0.0
      %377 = vmatprep.subr.mxu0 0.0
      %378 = vmatpush1.msra.mxu0 0.0
      %379 = vmatprep.subr.mxu0 0.0
      %380 = vmatpush1.msra.mxu0 0.0
      %381 = vmatprep.subr.mxu0 0.0
      %382 = vmatpush1.msra.mxu0 0.0
      %383 = vmatprep.subr.mxu0 0.0
      %384 = vmatpush1.msra.mxu0 0.0
      %385 = vmatprep.subr.mxu0 0.0
      %386 = vmatpush1.msra.mxu0 0.0
      %387 = vmatprep.subr.mxu0 0.0
      %388 = vmatpush1.msra.mxu0 0.0
      %389 = vmatprep.mubr.f32.mxu0 0.0
      %390 = vmatmul.mubr.f32.gmra.mrb[0].mxu0 %v323
      %v391 = vpop.f32.mrb[0].mxu0
      %v392 = vadd.f32 %v319, %v391
      %v393 = vpop.f32.mrb[0].mxu0
      %394 = vdwg.mxu0
      %vm395 = vcmask 523264
      %396 = vst.msk [vmem:[#allocation2] sm:$0xff] %vm395, %v392
      %s397 = scalar_lea.vmem %s0, 8
      %v398 = vld [vmem:[%s397] sm:$0xff]
      %v400 = vsel %vm321, %v398, 0
      %402 = vmatprep.subr.mxu0 0.0
      %403 = vmatpush1.msra.mxu0 %v307
      %404 = vmatprep.subr.mxu0 0.0
      %405 = vmatpush1.msra.mxu0 %v308
      %406 = vmatprep.subr.mxu0 0.0
      %407 = vmatpush1.msra.mxu0 %v309
      %408 = vmatprep.subr.mxu0 0.0
      %409 = vmatpush1.msra.mxu0 %v310
      %410 = vmatprep.subr.mxu0 0.0
      %411 = vmatpush1.msra.mxu0 0.0
      %412 = vmatprep.subr.mxu0 0.0
      %413 = vmatpush1.msra.mxu0 0.0
      %414 = vmatprep.subr.mxu0 0.0
      %415 = vmatpush1.msra.mxu0 0.0
      %416 = vmatprep.subr.mxu0 0.0
      %417 = vmatpush1.msra.mxu0 0.0
      %418 = vmatprep.subr.mxu0 0.0
      %419 = vmatpush1.msra.mxu0 0.0
      %420 = vmatprep.subr.mxu0 0.0
      %421 = vmatpush1.msra.mxu0 0.0
      %422 = vmatprep.subr.mxu0 0.0
      %423 = vmatpush1.msra.mxu0 0.0
      %424 = vmatprep.subr.mxu0 0.0
      %425 = vmatpush1.msra.mxu0 0.0
      %426 = vmatprep.subr.mxu0 0.0
      %427 = vmatpush1.msra.mxu0 0.0
      %428 = vmatprep.subr.mxu0 0.0
      %429 = vmatpush1.msra.mxu0 0.0
      %430 = vmatprep.subr.mxu0 0.0
      %431 = vmatpush1.msra.mxu0 0.0
      %432 = vmatprep.subr.mxu0 0.0
      %433 = vmatpush1.msra.mxu0 0.0
      %434 = vmatprep.subr.mxu0 0.0
      %435 = vmatpush1.msra.mxu0 0.0
      %436 = vmatprep.subr.mxu0 0.0
      %437 = vmatpush1.msra.mxu0 0.0
      %438 = vmatprep.subr.mxu0 0.0
      %439 = vmatpush1.msra.mxu0 0.0
      %440 = vmatprep.subr.mxu0 0.0
      %441 = vmatpush1.msra.mxu0 0.0
      %442 = vmatprep.subr.mxu0 0.0
      %443 = vmatpush1.msra.mxu0 0.0
      %444 = vmatprep.subr.mxu0 0.0
      %445 = vmatpush1.msra.mxu0 0.0
      %446 = vmatprep.subr.mxu0 0.0
      %447 = vmatpush1.msra.mxu0 0.0
      %448 = vmatprep.subr.mxu0 0.0
      %449 = vmatpush1.msra.mxu0 0.0
      %450 = vmatprep.subr.mxu0 0.0
      %451 = vmatpush1.msra.mxu0 0.0
      %452 = vmatprep.subr.mxu0 0.0
      %453 = vmatpush1.msra.mxu0 0.0
      %454 = vmatprep.subr.mxu0 0.0
      %455 = vmatpush1.msra.mxu0 0.0
      %456 = vmatprep.subr.mxu0 0.0
      %457 = vmatpush1.msra.mxu0 0.0
      %458 = vmatprep.subr.mxu0 0.0
      %459 = vmatpush1.msra.mxu0 0.0
      %460 = vmatprep.subr.mxu0 0.0
      %461 = vmatpush1.msra.mxu0 0.0
      %462 = vmatprep.subr.mxu0 0.0
      %463 = vmatpush1.msra.mxu0 0.0
      %464 = vmatprep.subr.mxu0 0.0
      %465 = vmatpush1.msra.mxu0 0.0
      %466 = vmatprep.mubr.f32.mxu0 0.0
      %467 = vmatmul.mubr.f32.gmra.mrb[0].mxu0 %v400
      %v468 = vpop.f32.mrb[0].mxu0
      %v469 = vadd.f32 %v319, %v468
      %v470 = vpop.f32.mrb[0].mxu0
      %471 = vdwg.mxu0
      %s472 = scalar_lea.vmem [#allocation2], 8
      %473 = vst.msk [vmem:[%s472] sm:$0xff] %vm395, %v469
      loop: start=0, step=1, limit=8
      $region37: #{forward.5} parent=35 // loop_pre_header
        _
      $region38: #{forward.5} parent=35 // loop_header
        %s475 = sphi 0, %s479
        %p476 = scmp.ge.s32.totalorder %s475, 8
        %v480 = vphi 0.0, %v623
        %v481 = vphi 0.0, %v624
        %v482 = vphi 0.0, %v611
        %v483 = vphi 0.0, %v612
      $region39: #{forward.5} parent=35 // loop_header_branch
        %478 = sbr.rel (%p476) target = $region43
      $region40: #{forward.5} parent=35 // loop_body
        %s484 = smul.u32 %s475, 2
        %s485 = ssub.s32 7, %s484
        %s486 = smul.u32 %s18, %s485
        %s487 = sadd.s32 %s475, %s486
        %s488 = scalar_lea.vmem [#allocation2], %s487
        %v489 = vld [vmem:[%s488] sm:$0x1]
        %v490 = vld [vmem:[%s488 + $0x8] sm:$0x1]
        %v493 = vrot.slane %v481, 7
        %vm494 = vcmask 1041409
        %v495 = vsel %vm494, %v493, %v480
        %496 = vrot.lane.b32.xlu0 %v495, 80
        %v497 = vpop.permute.xlu0 %496
        %vm498 = vcmask 130048
        %v499 = vsel %vm498, %v497, 0
        %501 = vmatprep.subr.mxu0 0.0
        %502 = vmatpush1.msra.mxu0 %v311
        %503 = vmatprep.subr.mxu0 0.0
        %504 = vmatpush1.msra.mxu0 %v312
        %505 = vmatprep.subr.mxu0 0.0
        %506 = vmatpush1.msra.mxu0 0.0
        %507 = vmatprep.subr.mxu0 0.0
        %508 = vmatpush1.msra.mxu0 0.0
        %509 = vmatprep.subr.mxu0 0.0
        %510 = vmatpush1.msra.mxu0 0.0
        %511 = vmatprep.subr.mxu0 0.0
        %512 = vmatpush1.msra.mxu0 0.0
        %513 = vmatprep.subr.mxu0 0.0
        %514 = vmatpush1.msra.mxu0 0.0
        %515 = vmatprep.subr.mxu0 0.0
        %516 = vmatpush1.msra.mxu0 0.0
        %517 = vmatprep.subr.mxu0 0.0
        %518 = vmatpush1.msra.mxu0 0.0
        %519 = vmatprep.subr.mxu0 0.0
        %520 = vmatpush1.msra.mxu0 0.0
        %521 = vmatprep.subr.mxu0 0.0
        %522 = vmatpush1.msra.mxu0 0.0
        %523 = vmatprep.subr.mxu0 0.0
        %524 = vmatpush1.msra.mxu0 0.0
        %525 = vmatprep.subr.mxu0 0.0
        %526 = vmatpush1.msra.mxu0 0.0
        %527 = vmatprep.subr.mxu0 0.0
        %528 = vmatpush1.msra.mxu0 0.0
        %529 = vmatprep.subr.mxu0 0.0
        %530 = vmatpush1.msra.mxu0 0.0
        %531 = vmatprep.subr.mxu0 0.0
        %532 = vmatpush1.msra.mxu0 0.0
        %533 = vmatprep.subr.mxu0 0.0
        %534 = vmatpush1.msra.mxu0 0.0
        %535 = vmatprep.subr.mxu0 0.0
        %536 = vmatpush1.msra.mxu0 0.0
        %537 = vmatprep.subr.mxu0 0.0
        %538 = vmatpush1.msra.mxu0 0.0
        %539 = vmatprep.subr.mxu0 0.0
        %540 = vmatpush1.msra.mxu0 0.0
        %541 = vmatprep.subr.mxu0 0.0
        %542 = vmatpush1.msra.mxu0 0.0
        %543 = vmatprep.subr.mxu0 0.0
        %544 = vmatpush1.msra.mxu0 0.0
        %545 = vmatprep.subr.mxu0 0.0
        %546 = vmatpush1.msra.mxu0 0.0
        %547 = vmatprep.subr.mxu0 0.0
        %548 = vmatpush1.msra.mxu0 0.0
        %549 = vmatprep.subr.mxu0 0.0
        %550 = vmatpush1.msra.mxu0 0.0
        %551 = vmatprep.subr.mxu0 0.0
        %552 = vmatpush1.msra.mxu0 0.0
        %553 = vmatprep.subr.mxu0 0.0
        %554 = vmatpush1.msra.mxu0 0.0
        %555 = vmatprep.subr.mxu0 0.0
        %556 = vmatpush1.msra.mxu0 0.0
        %557 = vmatprep.subr.mxu0 0.0
        %558 = vmatpush1.msra.mxu0 0.0
        %559 = vmatprep.subr.mxu0 0.0
        %560 = vmatpush1.msra.mxu0 0.0
        %561 = vmatprep.subr.mxu0 0.0
        %562 = vmatpush1.msra.mxu0 0.0
        %563 = vmatprep.subr.mxu0 0.0
        %564 = vmatpush1.msra.mxu0 0.0
        %565 = vmatprep.mubr.f32.mxu0 0.0
        %566 = vmatmul.mubr.f32.gmra.mrb[0].mxu0 %v499
        %v567 = vpop.f32.mrb[0].mxu0
        %v568 = vadd.f32 0.0, %v567
        %v569 = vpop.f32.mrb[0].mxu0
        %570 = vdwg.mxu0
        %v572 = vrot.slane %v568, 1
        %v575 = vadd.f32 %v489, %v568
        %v576 = vadd.f32 %v490, %v572
        %v577 = vxor.u32 %v575, 2147483648
        %v578 = vxor.u32 %v576, 2147483648
        %v579 = vmul.f32 %v577, 1.442695
        %v580 = vpow.pop %v579
        %v581 = vmul.f32 %v578, 1.442695
        %v582 = vpow.pop %v581
        %v583 = vadd.f32 %v580, 1.0
        %v584 = vadd.f32 %v582, 1.0
        %v585 = vrcp.pop %v583
        %v586 = vmul.f32 1.0, %v585
        %v587 = vrcp.pop %v584
        %v588 = vmul.f32 1.0, %v587
        %v589 = vtanh.pop %v575
        %v590 = vtanh.pop %v576
        %v591 = vmul.f32 %v586, %v482
        %v592 = vmul.f32 %v588, %v483
        %595 = vrot.lane.b32.xlu0 %v589, 96
        %v596 = vpop.permute.xlu0 %595
        %597 = vrot.lane.b32.xlu0 %v590, 96
        %v598 = vpop.permute.xlu0 %597
        %v601 = vmul.f32 %v586, %v596
        %v602 = vmul.f32 %v588, %v598
        %605 = vrot.lane.b32.xlu0 %v601, 16
        %v606 = vpop.permute.xlu0 %605
        %607 = vrot.lane.b32.xlu0 %v602, 16
        %v608 = vpop.permute.xlu0 %607
        %v611 = vadd.f32 %v591, %v606
        %v612 = vadd.f32 %v592, %v608
        %v613 = vtanh.pop %v611
        %v614 = vtanh.pop %v612
        %617 = vrot.lane.b32.xlu0 %v613, 32
        %v618 = vpop.permute.xlu0 %617
        %619 = vrot.lane.b32.xlu0 %v614, 32
        %v620 = vpop.permute.xlu0 %619
        %v623 = vmul.f32 %v586, %v618
        %v624 = vmul.f32 %v588, %v620
        %627 = vrot.lane.b32.xlu0 %v623, 80
        %v628 = vpop.permute.xlu0 %627
        %629 = vrot.lane.b32.xlu0 %v624, 80
        %v630 = vpop.permute.xlu0 %629
        %s633 = scalar_lea.vmem %s298, %s487
        %vm634 = vcmask 122880
        %635 = vst.msk [vmem:[%s633] sm:$0x1] %vm634, %v628
        %636 = vst.msk [vmem:[%s633 + $0x8] sm:$0x1] %vm634, %v630
      $region41: #{forward.5} parent=35 // loop_footer
        %s479 = sadd.s32 1, %s475
      $region42: #{forward.5} parent=35 // loop_footer_branch
        %474 = sbr.rel target = $region38
      $region43: #{forward.5} parent=35 // loop_exit
        _
      %v639 = vrot.slane %v481, 7
      %vm640 = vcmask 1041409
      %v641 = vsel %vm640, %v639, %v480
      %642 = vrot.lane.b32.xlu0 %v641, 80
      %v643 = vpop.permute.xlu0 %642
      %vm645 = vcmask 123904
      %646 = vst.msk [vmem:[%s302] sm:$0x3] %vm645, %v643
      %v649 = vrot.slane %v483, 7
      %v650 = vsel %vm640, %v649, %v482
      %651 = vrot.lane.b32.xlu0 %v650, 112
      %v652 = vpop.permute.xlu0 %651
      %654 = vst.msk [vmem:[%s306] sm:$0x3] %vm645, %v652
      %p655 = scmp.lt.s32.totalorder %s18, 1
      %s656 = scalar_select %p655, %s18, 1
      %s657 = smul.addr %s656, 2
      %s658 = smul.addr %s657, 8
      %s659 = scalar_lea.vmem %s4, %s658
      %p660 = scmp.lt.s32.totalorder %s18, 1
      %s661 = scalar_select %p660, %s18, 1
      %s662 = smul.addr %s661, 2
      %s663 = scalar_lea.vmem %s5, %s662
      %p664 = scmp.lt.s32.totalorder %s18, 1
      %s665 = scalar_select %p664, %s18, 1
      %s666 = smul.addr %s665, 2
      %s667 = scalar_lea.vmem %s6, %s666
      // Predicated region
      $region44: #{forward.5} parent=35 // pred_check
        %p668 = pneg %p135
      $region45: #{forward.5} parent=35 // pred_check_branch
        %670 = sbr.rel (%p668) target = $region47
      $region46: #{forward.5} parent=35 // pred_region
        _
      $region47: #{forward.5} parent=35 // pred_fallthru
        _
      // Predicated region
      $region48: #{forward.5} parent=35 // pred_check
        %p671 = pneg %p161
      $region49: #{forward.5} parent=35 // pred_check_branch
        %673 = sbr.rel (%p671) target = $region51
      $region50: #{forward.5} parent=35 // pred_region
        _
      $region51: #{forward.5} parent=35 // pred_fallthru
        _
      // Predicated region
      $region52: #{forward.5} parent=35 // pred_check
        %p674 = pneg %p187
      $region53: #{forward.5} parent=35 // pred_check_branch
        %676 = sbr.rel (%p674) target = $region55
      $region54: #{forward.5} parent=35 // pred_region
        _
      $region55: #{forward.5} parent=35 // pred_fallthru
        _
    $region36: #{forward.5} parent=5 // pred_fallthru
      _
    %p677 = scmp.le.s32.totalorder 2, %s13
    // Predicated region
    $region56: #{forward.5} parent=5 // pred_check
      %p678 = pneg %p677
    $region57: #{forward.5} parent=5 // pred_check_branch
      %680 = sbr.rel (%p678) target = $region59
    $region58: #{forward.5} parent=5 // pred_region
      %s681 = ssub.s32 %s13, 2
      // Predicated region
      $region60: #{forward.5} parent=58 // pred_check
        %p682 = pneg %p141
      $region61: #{forward.5} parent=58 // pred_check_branch
        %684 = sbr.rel (%p682) target = $region63
      $region62: #{forward.5} parent=58 // pred_region
        %p685 = scmp.lt.s32.totalorder %s19, 1
        %s686 = scalar_select %p685, %s19, 1
        %s687 = smul.addr %s686, 2
        %s688 = smul.addr %s687, 8
        %s689 = scalar_lea.vmem %s4, %s688
      $region63: #{forward.5} parent=58 // pred_fallthru
        _
      // Predicated region
      $region64: #{forward.5} parent=58 // pred_check
        %p690 = pneg %p167
      $region65: #{forward.5} parent=58 // pred_check_branch
        %692 = sbr.rel (%p690) target = $region67
      $region66: #{forward.5} parent=58 // pred_region
        %p693 = scmp.lt.s32.totalorder %s19, 1
        %s694 = scalar_select %p693, %s19, 1
        %s695 = smul.addr %s694, 2
        %s696 = scalar_lea.vmem %s5, %s695
      $region67: #{forward.5} parent=58 // pred_fallthru
        _
      // Predicated region
      $region68: #{forward.5} parent=58 // pred_check
        %p697 = pneg %p193
      $region69: #{forward.5} parent=58 // pred_check_branch
        %699 = sbr.rel (%p697) target = $region71
      $region70: #{forward.5} parent=58 // pred_region
        %p700 = scmp.lt.s32.totalorder %s19, 1
        %s701 = scalar_select %p700, %s19, 1
        %s702 = smul.addr %s701, 2
        %s703 = scalar_lea.vmem %s6, %s702
      $region71: #{forward.5} parent=58 // pred_fallthru
        _
    $region59: #{forward.5} parent=5 // pred_fallthru
      _
  $region6: #{forward.5} parent=0 // loop_footer
    %s17 = sadd.s32 1, %s13
  $region7: #{forward.5} parent=0 // loop_footer_branch
    %12 = sbr.rel target = $region3
  $region8: #{forward.5} parent=0 // loop_exit
    _

// kernel: forward.9
$region0: #{forward.9}
  #allocation0 [shape = 'u32[]', space=smem, size = 0x4, offset = 0x4, fixed_abs, tag = 'smem constant byte address 0x4 - core index']
  #allocation1 [shape = 'u32[144,128]{1,0:T(1,128)}', space=vmem, size = 0x12000, scoped, tag = 'internal scratch']
  #allocation2 [shape = 'f32[2,5,128]{2,1,0:T(8,128)}', space=vmem, size = 0x2000, scoped, tag = 'scratch operand']
  %s0 = inlined_call_operand.vmem [shape: f32[2,5,32], index: 0, kind: input, shape index: {}]
  %s1 = inlined_call_operand.vmem [shape: f32[2,4,32], index: 1, kind: input, shape index: {}]
  %s2 = inlined_call_operand.vmem [shape: f32[1,2,32], index: 2, kind: input, shape index: {}]
  %s3 = inlined_call_operand.vmem [shape: f32[1,2,32], index: 3, kind: input, shape index: {}]
  %s4 = inlined_call_operand.vmem [shape: f32[64,128], index: 4, kind: input, shape index: {}]
  %s5 = inlined_call_operand.vmem [shape: f32[32,128], index: 5, kind: input, shape index: {}]
  %s6 = inlined_call_operand.vmem [shape: f32[1,128], index: 6, kind: input, shape index: {}]
  %s7 = inlined_call_operand.vmem [shape: f32[32,32], index: 7, kind: input, shape index: {}]
  %s8 = inlined_call_operand.vmem [shape: f32[64,32], index: 8, kind: input, shape index: {}]
  %s9 = inlined_call_operand.vmem [shape: f32[32,128], index: 9, kind: input, shape index: {}]
  %s10 = inlined_call_operand.vmem [shape: f32[1,128], index: 10, kind: input, shape index: {}]
  %s11 = inlined_call_operand.vmem [shape: f32[2,5,128], index: 11, kind: output, shape index: {}]
  %s12 = sld [smem:[#allocation0]]
  $region61: #{forward.9} parent=0
    _
  %s14 = ssub.s32 1, %s12
  %s15 = scalar_select 0, %s14, %s12
  // Predicated region
  $region2: #{forward.9} parent=0 // pred_check
    _
  $region3: #{forward.9} parent=0 // pred_check_branch
    %17 = sbr.rel (0) target = $region5
  $region4: #{forward.9} parent=0 // pred_region
    _
  $region5: #{forward.9} parent=0 // pred_fallthru
    _
  // Predicated region
  $region6: #{forward.9} parent=0 // pred_check
    _
  $region7: #{forward.9} parent=0 // pred_check_branch
    %19 = sbr.rel (0) target = $region9
  $region8: #{forward.9} parent=0 // pred_region
    _
  $region9: #{forward.9} parent=0 // pred_fallthru
    _
  // Predicated region
  $region10: #{forward.9} parent=0 // pred_check
    _
  $region11: #{forward.9} parent=0 // pred_check_branch
    %21 = sbr.rel (0) target = $region13
  $region12: #{forward.9} parent=0 // pred_region
    _
  $region13: #{forward.9} parent=0 // pred_fallthru
    _
  // Predicated region
  $region14: #{forward.9} parent=0 // pred_check
    _
  $region15: #{forward.9} parent=0 // pred_check_branch
    %23 = sbr.rel (0) target = $region17
  $region16: #{forward.9} parent=0 // pred_region
    _
  $region17: #{forward.9} parent=0 // pred_fallthru
    _
  // Predicated region
  $region18: #{forward.9} parent=0 // pred_check
    _
  $region19: #{forward.9} parent=0 // pred_check_branch
    %25 = sbr.rel (0) target = $region21
  $region20: #{forward.9} parent=0 // pred_region
    _
  $region21: #{forward.9} parent=0 // pred_fallthru
    _
  // Predicated region
  $region22: #{forward.9} parent=0 // pred_check
    _
  $region23: #{forward.9} parent=0 // pred_check_branch
    %27 = sbr.rel (0) target = $region25
  $region24: #{forward.9} parent=0 // pred_region
    _
  $region25: #{forward.9} parent=0 // pred_fallthru
    _
  // Predicated region
  $region26: #{forward.9} parent=0 // pred_check
    _
  $region27: #{forward.9} parent=0 // pred_check_branch
    %29 = sbr.rel (0) target = $region29
  $region28: #{forward.9} parent=0 // pred_region
    _
  $region29: #{forward.9} parent=0 // pred_fallthru
    _
  // Predicated region
  $region30: #{forward.9} parent=0 // pred_check
    _
  $region31: #{forward.9} parent=0 // pred_check_branch
    %31 = sbr.rel (0) target = $region33
  $region32: #{forward.9} parent=0 // pred_region
    _
  $region33: #{forward.9} parent=0 // pred_fallthru
    _
  // Predicated region
  $region34: #{forward.9} parent=0 // pred_check
    _
  $region35: #{forward.9} parent=0 // pred_check_branch
    %33 = sbr.rel (0) target = $region37
  $region36: #{forward.9} parent=0 // pred_region
    _
  $region37: #{forward.9} parent=0 // pred_fallthru
    _
  // Predicated region
  $region38: #{forward.9} parent=0 // pred_check
    _
  $region39: #{forward.9} parent=0 // pred_check_branch
    %35 = sbr.rel (0) target = $region41
  $region40: #{forward.9} parent=0 // pred_region
    _
  $region41: #{forward.9} parent=0 // pred_fallthru
    _
  // Predicated region
  $region42: #{forward.9} parent=0 // pred_check
    _
  $region43: #{forward.9} parent=0 // pred_check_branch
    %37 = sbr.rel (0) target = $region45
  $region44: #{forward.9} parent=0 // pred_region
    _
  $region45: #{forward.9} parent=0 // pred_fallthru
    _
  %v38 = vld [vmem:[%s4] sm:$0xff]
  %v39 = vld [vmem:[%s4 + $0x8] sm:$0xff]
  %v40 = vld [vmem:[%s4 + $0x10] sm:$0xff]
  %v41 = vld [vmem:[%s4 + $0x18] sm:$0xff]
  %v42 = vld [vmem:[%s4 + $0x20] sm:$0xff]
  %v43 = vld [vmem:[%s4 + $0x28] sm:$0xff]
  %v44 = vld [vmem:[%s4 + $0x30] sm:$0xff]
  %v45 = vld [vmem:[%s4 + $0x38] sm:$0xff]
  %v46 = vld [vmem:[%s5] sm:$0xff]
  %v47 = vld [vmem:[%s5 + $0x8] sm:$0xff]
  %v48 = vld [vmem:[%s5 + $0x10] sm:$0xff]
  %v49 = vld [vmem:[%s5 + $0x18] sm:$0xff]
  %v50 = vld [vmem:[%s6] sm:$0x1]
  %v51 = vld [vmem:[%s1] sm:$0xf]
  %v52 = vld [vmem:[%s1 + $0x4] sm:$0xf]
  %v53 = vld [vmem:[%s7] sm:$0xff]
  %v54 = vld [vmem:[%s7 + $0x8] sm:$0xff]
  %v55 = vld [vmem:[%s7 + $0x10] sm:$0xff]
  %v56 = vld [vmem:[%s7 + $0x18] sm:$0xff]
  %v57 = vld [vmem:[%s8] sm:$0xff]
  %v58 = vld [vmem:[%s8 + $0x8] sm:$0xff]
  %v59 = vld [vmem:[%s8 + $0x10] sm:$0xff]
  %v60 = vld [vmem:[%s8 + $0x18] sm:$0xff]
  %v61 = vld [vmem:[%s8 + $0x20] sm:$0xff]
  %v62 = vld [vmem:[%s8 + $0x28] sm:$0xff]
  %v63 = vld [vmem:[%s8 + $0x30] sm:$0xff]
  %v64 = vld [vmem:[%s8 + $0x38] sm:$0xff]
  %v65 = vld [vmem:[%s9] sm:$0xff]
  %v66 = vld [vmem:[%s9 + $0x8] sm:$0xff]
  %v67 = vld [vmem:[%s9 + $0x10] sm:$0xff]
  %v68 = vld [vmem:[%s9 + $0x18] sm:$0xff]
  %v69 = vld [vmem:[%s10] sm:$0x1]
  %v70 = vld [vmem:[%s0] sm:$0x1f]
  %v72 = vlaneseq
  %v73 = vshrl.u32 %v72, 7
  %v74 = vsub.s32 0, %v73
  %v75 = vrot.slane %v50, %v74
  %vm77 = vcmask 261120
  %v79 = vsel %vm77, %v70, 0
  %81 = vmatprep.subr.mxu0 0.0
  %82 = vmatpush1.msra.mxu0 %v38
  %83 = vmatprep.subr.mxu0 0.0
  %84 = vmatpush1.msra.mxu0 %v39
  %85 = vmatprep.subr.mxu0 0.0
  %86 = vmatpush1.msra.mxu0 %v40
  %87 = vmatprep.subr.mxu0 0.0
  %88 = vmatpush1.msra.mxu0 %v41
  %89 = vmatprep.subr.mxu0 0.0
  %90 = vmatpush1.msra.mxu0 0.0
  %91 = vmatprep.subr.mxu0 0.0
  %92 = vmatpush1.msra.mxu0 0.0
  %93 = vmatprep.subr.mxu0 0.0
  %94 = vmatpush1.msra.mxu0 0.0
  %95 = vmatprep.subr.mxu0 0.0
  %96 = vmatpush1.msra.mxu0 0.0
  %97 = vmatprep.subr.mxu0 0.0
  %98 = vmatpush1.msra.mxu0 0.0
  %99 = vmatprep.subr.mxu0 0.0
  %100 = vmatpush1.msra.mxu0 0.0
  %101 = vmatprep.subr.mxu0 0.0
  %102 = vmatpush1.msra.mxu0 0.0
  %103 = vmatprep.subr.mxu0 0.0
  %104 = vmatpush1.msra.mxu0 0.0
  %105 = vmatprep.subr.mxu0 0.0
  %106 = vmatpush1.msra.mxu0 0.0
  %107 = vmatprep.subr.mxu0 0.0
  %108 = vmatpush1.msra.mxu0 0.0
  %109 = vmatprep.subr.mxu0 0.0
  %110 = vmatpush1.msra.mxu0 0.0
  %111 = vmatprep.subr.mxu0 0.0
  %112 = vmatpush1.msra.mxu0 0.0
  %113 = vmatprep.subr.mxu0 0.0
  %114 = vmatpush1.msra.mxu0 0.0
  %115 = vmatprep.subr.mxu0 0.0
  %116 = vmatpush1.msra.mxu0 0.0
  %117 = vmatprep.subr.mxu0 0.0
  %118 = vmatpush1.msra.mxu0 0.0
  %119 = vmatprep.subr.mxu0 0.0
  %120 = vmatpush1.msra.mxu0 0.0
  %121 = vmatprep.subr.mxu0 0.0
  %122 = vmatpush1.msra.mxu0 0.0
  %123 = vmatprep.subr.mxu0 0.0
  %124 = vmatpush1.msra.mxu0 0.0
  %125 = vmatprep.subr.mxu0 0.0
  %126 = vmatpush1.msra.mxu0 0.0
  %127 = vmatprep.subr.mxu0 0.0
  %128 = vmatpush1.msra.mxu0 0.0
  %129 = vmatprep.subr.mxu0 0.0
  %130 = vmatpush1.msra.mxu0 0.0
  %131 = vmatprep.subr.mxu0 0.0
  %132 = vmatpush1.msra.mxu0 0.0
  %133 = vmatprep.subr.mxu0 0.0
  %134 = vmatpush1.msra.mxu0 0.0
  %135 = vmatprep.subr.mxu0 0.0
  %136 = vmatpush1.msra.mxu0 0.0
  %137 = vmatprep.subr.mxu0 0.0
  %138 = vmatpush1.msra.mxu0 0.0
  %139 = vmatprep.subr.mxu0 0.0
  %140 = vmatpush1.msra.mxu0 0.0
  %141 = vmatprep.subr.mxu0 0.0
  %142 = vmatpush1.msra.mxu0 0.0
  %143 = vmatprep.subr.mxu0 0.0
  %144 = vmatpush1.msra.mxu0 0.0
  %145 = vmatprep.mubr.f32.mxu0 0.0
  %146 = vmatmul.mubr.f32.gmra.mrb[0].mxu0 %v79
  %v147 = vpop.f32.mrb[0].mxu0
  %v148 = vadd.f32 %v75, %v147
  %v149 = vpop.f32.mrb[0].mxu0
  %150 = vdwg.mxu0
  %151 = vst [vmem:[#allocation2] sm:$0x1f] %v148
  %s152 = scalar_lea.vmem %s0, 8
  %v153 = vld [vmem:[%s152] sm:$0x1f]
  %v155 = vsel %vm77, %v153, 0
  %157 = vmatprep.subr.mxu0 0.0
  %158 = vmatpush1.msra.mxu0 %v38
  %159 = vmatprep.subr.mxu0 0.0
  %160 = vmatpush1.msra.mxu0 %v39
  %161 = vmatprep.subr.mxu0 0.0
  %162 = vmatpush1.msra.mxu0 %v40
  %163 = vmatprep.subr.mxu0 0.0
  %164 = vmatpush1.msra.mxu0 %v41
  %165 = vmatprep.subr.mxu0 0.0
  %166 = vmatpush1.msra.mxu0 0.0
  %167 = vmatprep.subr.mxu0 0.0
  %168 = vmatpush1.msra.mxu0 0.0
  %169 = vmatprep.subr.mxu0 0.0
  %170 = vmatpush1.msra.mxu0 0.0
  %171 = vmatprep.subr.mxu0 0.0
  %172 = vmatpush1.msra.mxu0 0.0
  %173 = vmatprep.subr.mxu0 0.0
  %174 = vmatpush1.msra.mxu0 0.0
  %175 = vmatprep.subr.mxu0 0.0
  %176 = vmatpush1.msra.mxu0 0.0
  %177 = vmatprep.subr.mxu0 0.0
  %178 = vmatpush1.msra.mxu0 0.0
  %179 = vmatprep.subr.mxu0 0.0
  %180 = vmatpush1.msra.mxu0 0.0
  %181 = vmatprep.subr.mxu0 0.0
  %182 = vmatpush1.msra.mxu0 0.0
  %183 = vmatprep.subr.mxu0 0.0
  %184 = vmatpush1.msra.mxu0 0.0
  %185 = vmatprep.subr.mxu0 0.0
  %186 = vmatpush1.msra.mxu0 0.0
  %187 = vmatprep.subr.mxu0 0.0
  %188 = vmatpush1.msra.mxu0 0.0
  %189 = vmatprep.subr.mxu0 0.0
  %190 = vmatpush1.msra.mxu0 0.0
  %191 = vmatprep.subr.mxu0 0.0
  %192 = vmatpush1.msra.mxu0 0.0
  %193 = vmatprep.subr.mxu0 0.0
  %194 = vmatpush1.msra.mxu0 0.0
  %195 = vmatprep.subr.mxu0 0.0
  %196 = vmatpush1.msra.mxu0 0.0
  %197 = vmatprep.subr.mxu0 0.0
  %198 = vmatpush1.msra.mxu0 0.0
  %199 = vmatprep.subr.mxu0 0.0
  %200 = vmatpush1.msra.mxu0 0.0
  %201 = vmatprep.subr.mxu0 0.0
  %202 = vmatpush1.msra.mxu0 0.0
  %203 = vmatprep.subr.mxu0 0.0
  %204 = vmatpush1.msra.mxu0 0.0
  %205 = vmatprep.subr.mxu0 0.0
  %206 = vmatpush1.msra.mxu0 0.0
  %207 = vmatprep.subr.mxu0 0.0
  %208 = vmatpush1.msra.mxu0 0.0
  %209 = vmatprep.subr.mxu0 0.0
  %210 = vmatpush1.msra.mxu0 0.0
  %211 = vmatprep.subr.mxu0 0.0
  %212 = vmatpush1.msra.mxu0 0.0
  %213 = vmatprep.subr.mxu0 0.0
  %214 = vmatpush1.msra.mxu0 0.0
  %215 = vmatprep.subr.mxu0 0.0
  %216 = vmatpush1.msra.mxu0 0.0
  %217 = vmatprep.subr.mxu0 0.0
  %218 = vmatpush1.msra.mxu0 0.0
  %219 = vmatprep.subr.mxu0 0.0
  %220 = vmatpush1.msra.mxu0 0.0
  %221 = vmatprep.mubr.f32.mxu0 0.0
  %222 = vmatmul.mubr.f32.gmra.mrb[0].mxu0 %v155
  %v223 = vpop.f32.mrb[0].mxu0
  %v224 = vadd.f32 %v75, %v223
  %v225 = vpop.f32.mrb[0].mxu0
  %226 = vdwg.mxu0
  %s227 = scalar_lea.vmem [#allocation2], 8
  %228 = vst [vmem:[%s227] sm:$0x1f] %v224
  %v229 = vld [vmem:[%s2] sm:$0x3]
  %v230 = vld [vmem:[%s3] sm:$0x3]
  loop: start=0, step=1, limit=5
  $region46: #{forward.9} parent=0 // loop_pre_header
    _
  $region47: #{forward.9} parent=0 // loop_header
    %s232 = sphi 0, %s236
    %p233 = scmp.ge.s32.totalorder %s232, 5
    %v237 = vphi %v229, %v463
    %v238 = vphi %v230, %v1144
    %v239 = vphi 0.0, %v1030
  $region48: #{forward.9} parent=0 // loop_header_branch
    %235 = sbr.rel (%p233) target = $region52
  $region49: #{forward.9} parent=0 // loop_body
    %s240 = scalar_lea.vmem [#allocation2], %s232
    %v241 = vld [vmem:[%s240] sm:$0x1]
    %v242 = vld [vmem:[%s240 + $0x8] sm:$0x1]
    %v244 = vsel %vm77, %v239, 0
    %246 = vmatprep.subr.mxu0 0.0
    %247 = vmatpush1.msra.mxu0 %v42
    %248 = vmatprep.subr.mxu0 0.0
    %249 = vmatpush1.msra.mxu0 %v43
    %250 = vmatprep.subr.mxu0 0.0
    %251 = vmatpush1.msra.mxu0 %v44
    %252 = vmatprep.subr.mxu0 0.0
    %253 = vmatpush1.msra.mxu0 %v45
    %254 = vmatprep.subr.mxu0 0.0
    %255 = vmatpush1.msra.mxu0 0.0
    %256 = vmatprep.subr.mxu0 0.0
    %257 = vmatpush1.msra.mxu0 0.0
    %258 = vmatprep.subr.mxu0 0.0
    %259 = vmatpush1.msra.mxu0 0.0
    %260 = vmatprep.subr.mxu0 0.0
    %261 = vmatpush1.msra.mxu0 0.0
    %262 = vmatprep.subr.mxu0 0.0
    %263 = vmatpush1.msra.mxu0 0.0
    %264 = vmatprep.subr.mxu0 0.0
    %265 = vmatpush1.msra.mxu0 0.0
    %266 = vmatprep.subr.mxu0 0.0
    %267 = vmatpush1.msra.mxu0 0.0
    %268 = vmatprep.subr.mxu0 0.0
    %269 = vmatpush1.msra.mxu0 0.0
    %270 = vmatprep.subr.mxu0 0.0
    %271 = vmatpush1.msra.mxu0 0.0
    %272 = vmatprep.subr.mxu0 0.0
    %273 = vmatpush1.msra.mxu0 0.0
    %274 = vmatprep.subr.mxu0 0.0
    %275 = vmatpush1.msra.mxu0 0.0
    %276 = vmatprep.subr.mxu0 0.0
    %277 = vmatpush1.msra.mxu0 0.0
    %278 = vmatprep.subr.mxu0 0.0
    %279 = vmatpush1.msra.mxu0 0.0
    %280 = vmatprep.subr.mxu0 0.0
    %281 = vmatpush1.msra.mxu0 0.0
    %282 = vmatprep.subr.mxu0 0.0
    %283 = vmatpush1.msra.mxu0 0.0
    %284 = vmatprep.subr.mxu0 0.0
    %285 = vmatpush1.msra.mxu0 0.0
    %286 = vmatprep.subr.mxu0 0.0
    %287 = vmatpush1.msra.mxu0 0.0
    %288 = vmatprep.subr.mxu0 0.0
    %289 = vmatpush1.msra.mxu0 0.0
    %290 = vmatprep.subr.mxu0 0.0
    %291 = vmatpush1.msra.mxu0 0.0
    %292 = vmatprep.subr.mxu0 0.0
    %293 = vmatpush1.msra.mxu0 0.0
    %294 = vmatprep.subr.mxu0 0.0
    %295 = vmatpush1.msra.mxu0 0.0
    %296 = vmatprep.subr.mxu0 0.0
    %297 = vmatpush1.msra.mxu0 0.0
    %298 = vmatprep.subr.mxu0 0.0
    %299 = vmatpush1.msra.mxu0 0.0
    %300 = vmatprep.subr.mxu0 0.0
    %301 = vmatpush1.msra.mxu0 0.0
    %302 = vmatprep.subr.mxu0 0.0
    %303 = vmatpush1.msra.mxu0 0.0
    %304 = vmatprep.subr.mxu0 0.0
    %305 = vmatpush1.msra.mxu0 0.0
    %306 = vmatprep.subr.mxu0 0.0
    %307 = vmatpush1.msra.mxu0 0.0
    %308 = vmatprep.subr.mxu0 0.0
    %309 = vmatpush1.msra.mxu0 0.0
    %310 = vmatprep.mubr.f32.mxu0 0.0
    %311 = vmatmul.mubr.f32.gmra.mrb[0].mxu0 %v244
    %v312 = vpop.f32.mrb[0].mxu0
    %v313 = vadd.f32 0.0, %v312
    %v314 = vpop.f32.mrb[0].mxu0
    %315 = vdwg.mxu0
    %v317 = vrot.slane %v313, 1
    %v320 = vadd.f32 %v241, %v313
    %v321 = vadd.f32 %v242, %v317
    %v323 = vsel %vm77, %v237, 0
    %325 = vmatprep.subr.mxu0 0.0
    %326 = vmatpush1.msra.mxu0 %v46
    %327 = vmatprep.subr.mxu0 0.0
    %328 = vmatpush1.msra.mxu0 %v47
    %329 = vmatprep.subr.mxu0 0.0
    %330 = vmatpush1.msra.mxu0 %v48
    %331 = vmatprep.subr.mxu0 0.0
    %332 = vmatpush1.msra.mxu0 %v49
    %333 = vmatprep.subr.mxu0 0.0
    %334 = vmatpush1.msra.mxu0 0.0
    %335 = vmatprep.subr.mxu0 0.0
    %336 = vmatpush1.msra.mxu0 0.0
    %337 = vmatprep.subr.mxu0 0.0
    %338 = vmatpush1.msra.mxu0 0.0
    %339 = vmatprep.subr.mxu0 0.0
    %340 = vmatpush1.msra.mxu0 0.0
    %341 = vmatprep.subr.mxu0 0.0
    %342 = vmatpush1.msra.mxu0 0.0
    %343 = vmatprep.subr.mxu0 0.0
    %344 = vmatpush1.msra.mxu0 0.0
    %345 = vmatprep.subr.mxu0 0.0
    %346 = vmatpush1.msra.mxu0 0.0
    %347 = vmatprep.subr.mxu0 0.0
    %348 = vmatpush1.msra.mxu0 0.0
    %349 = vmatprep.subr.mxu0 0.0
    %350 = vmatpush1.msra.mxu0 0.0
    %351 = vmatprep.subr.mxu0 0.0
    %352 = vmatpush1.msra.mxu0 0.0
    %353 = vmatprep.subr.mxu0 0.0
    %354 = vmatpush1.msra.mxu0 0.0
    %355 = vmatprep.subr.mxu0 0.0
    %356 = vmatpush1.msra.mxu0 0.0
    %357 = vmatprep.subr.mxu0 0.0
    %358 = vmatpush1.msra.mxu0 0.0
    %359 = vmatprep.subr.mxu0 0.0
    %360 = vmatpush1.msra.mxu0 0.0
    %361 = vmatprep.subr.mxu0 0.0
    %362 = vmatpush1.msra.mxu0 0.0
    %363 = vmatprep.subr.mxu0 0.0
    %364 = vmatpush1.msra.mxu0 0.0
    %365 = vmatprep.subr.mxu0 0.0
    %366 = vmatpush1.msra.mxu0 0.0
    %367 = vmatprep.subr.mxu0 0.0
    %368 = vmatpush1.msra.mxu0 0.0
    %369 = vmatprep.subr.mxu0 0.0
    %370 = vmatpush1.msra.mxu0 0.0
    %371 = vmatprep.subr.mxu0 0.0
    %372 = vmatpush1.msra.mxu0 0.0
    %373 = vmatprep.subr.mxu0 0.0
    %374 = vmatpush1.msra.mxu0 0.0
    %375 = vmatprep.subr.mxu0 0.0
    %376 = vmatpush1.msra.mxu0 0.0
    %377 = vmatprep.subr.mxu0 0.0
    %378 = vmatpush1.msra.mxu0 0.0
    %379 = vmatprep.subr.mxu0 0.0
    %380 = vmatpush1.msra.mxu0 0.0
    %381 = vmatprep.subr.mxu0 0.0
    %382 = vmatpush1.msra.mxu0 0.0
    %383 = vmatprep.subr.mxu0 0.0
    %384 = vmatpush1.msra.mxu0 0.0
    %385 = vmatprep.subr.mxu0 0.0
    %386 = vmatpush1.msra.mxu0 0.0
    %387 = vmatprep.subr.mxu0 0.0
    %388 = vmatpush1.msra.mxu0 0.0
    %389 = vmatprep.mubr.f32.mxu0 0.0
    %390 = vmatmul.mubr.f32.gmra.mrb[0].mxu0 %v323
    %v391 = vpop.f32.mrb[0].mxu0
    %v392 = vadd.f32 0.0, %v391
    %v393 = vpop.f32.mrb[0].mxu0
    %394 = vdwg.mxu0
    %v396 = vrot.slane %v392, 1
    %v399 = vadd.f32 %v320, %v392
    %v400 = vadd.f32 %v321, %v396
    %v401 = vxor.u32 %v399, 2147483648
    %v402 = vxor.u32 %v400, 2147483648
    %v403 = vmul.f32 %v401, 1.442695
    %v404 = vpow.pop %v403
    %v405 = vmul.f32 %v402, 1.442695
    %v406 = vpow.pop %v405
    %v407 = vadd.f32 %v404, 1.0
    %v408 = vadd.f32 %v406, 1.0
    %v409 = vrcp.pop %v407
    %v410 = vmul.f32 1.0, %v409
    %v411 = vrcp.pop %v408
    %v412 = vmul.f32 1.0, %v411
    %v413 = vtanh.pop %v399
    %v414 = vtanh.pop %v400
    %v416 = vrot.slane %v238, 1
    %417 = vrot.lane.b32.xlu0 %v238, 32
    %v418 = vpop.permute.xlu0 %417
    %419 = vrot.lane.b32.xlu0 %v416, 32
    %v420 = vpop.permute.xlu0 %419
    %v423 = vmul.f32 %v410, %v418
    %v424 = vmul.f32 %v412, %v420
    %427 = vrot.lane.b32.xlu0 %v413, 64
    %v428 = vpop.permute.xlu0 %427
    %429 = vrot.lane.b32.xlu0 %v414, 64
    %v430 = vpop.permute.xlu0 %429
    %v433 = vmul.f32 %v410, %v428
    %v434 = vmul.f32 %v412, %v430
    %437 = vrot.lane.b32.xlu0 %v433, 32
    %v438 = vpop.permute.xlu0 %437
    %439 = vrot.lane.b32.xlu0 %v434, 32
    %v440 = vpop.permute.xlu0 %439
    %v443 = vadd.f32 %v423, %v438
    %v444 = vadd.f32 %v424, %v440
    %v445 = vtanh.pop %v443
    %v446 = vtanh.pop %v444
    %449 = vrot.lane.b32.xlu0 %v445, 64
    %v450 = vpop.permute.xlu0 %449
    %451 = vrot.lane.b32.xlu0 %v446, 64
    %v452 = vpop.permute.xlu0 %451
    %v455 = vmul.f32 %v410, %v450
    %v456 = vmul.f32 %v412, %v452
    %v459 = vrot.slane %v456, 7
    %vm460 = vcmask 1041409
    %v461 = vsel %vm460, %v459, %v455
    %462 = vrot.lane.b32.xlu0 %v461, 32
    %v463 = vpop.permute.xlu0 %462
    %v464 = vsel %vm77, %v463, 0
    %466 = vmatprep.subr.mxu0 0.0
    %467 = vmatpush1.msra.mxu0 %v53
    %468 = vmatprep.subr.mxu0 0.0
    %469 = vmatpush1.msra.mxu0 %v54
    %470 = vmatprep.subr.mxu0 0.0
    %471 = vmatpush1.msra.mxu0 %v55
    %472 = vmatprep.subr.mxu0 0.0
    %473 = vmatpush1.msra.mxu0 %v56
    %474 = vmatprep.subr.mxu0 0.0
    %475 = vmatpush1.msra.mxu0 0.0
    %476 = vmatprep.subr.mxu0 0.0
    %477 = vmatpush1.msra.mxu0 0.0
    %478 = vmatprep.subr.mxu0 0.0
    %479 = vmatpush1.msra.mxu0 0.0
    %480 = vmatprep.subr.mxu0 0.0
    %481 = vmatpush1.msra.mxu0 0.0
    %482 = vmatprep.subr.mxu0 0.0
    %483 = vmatpush1.msra.mxu0 0.0
    %484 = vmatprep.subr.mxu0 0.0
    %485 = vmatpush1.msra.mxu0 0.0
    %486 = vmatprep.subr.mxu0 0.0
    %487 = vmatpush1.msra.mxu0 0.0
    %488 = vmatprep.subr.mxu0 0.0
    %489 = vmatpush1.msra.mxu0 0.0
    %490 = vmatprep.subr.mxu0 0.0
    %491 = vmatpush1.msra.mxu0 0.0
    %492 = vmatprep.subr.mxu0 0.0
    %493 = vmatpush1.msra.mxu0 0.0
    %494 = vmatprep.subr.mxu0 0.0
    %495 = vmatpush1.msra.mxu0 0.0
    %496 = vmatprep.subr.mxu0 0.0
    %497 = vmatpush1.msra.mxu0 0.0
    %498 = vmatprep.subr.mxu0 0.0
    %499 = vmatpush1.msra.mxu0 0.0
    %500 = vmatprep.subr.mxu0 0.0
    %501 = vmatpush1.msra.mxu0 0.0
    %502 = vmatprep.subr.mxu0 0.0
    %503 = vmatpush1.msra.mxu0 0.0
    %504 = vmatprep.subr.mxu0 0.0
    %505 = vmatpush1.msra.mxu0 0.0
    %506 = vmatprep.subr.mxu0 0.0
    %507 = vmatpush1.msra.mxu0 0.0
    %508 = vmatprep.subr.mxu0 0.0
    %509 = vmatpush1.msra.mxu0 0.0
    %510 = vmatprep.subr.mxu0 0.0
    %511 = vmatpush1.msra.mxu0 0.0
    %512 = vmatprep.subr.mxu0 0.0
    %513 = vmatpush1.msra.mxu0 0.0
    %514 = vmatprep.subr.mxu0 0.0
    %515 = vmatpush1.msra.mxu0 0.0
    %516 = vmatprep.subr.mxu0 0.0
    %517 = vmatpush1.msra.mxu0 0.0
    %518 = vmatprep.subr.mxu0 0.0
    %519 = vmatpush1.msra.mxu0 0.0
    %520 = vmatprep.subr.mxu0 0.0
    %521 = vmatpush1.msra.mxu0 0.0
    %522 = vmatprep.subr.mxu0 0.0
    %523 = vmatpush1.msra.mxu0 0.0
    %524 = vmatprep.subr.mxu0 0.0
    %525 = vmatpush1.msra.mxu0 0.0
    %526 = vmatprep.subr.mxu0 0.0
    %527 = vmatpush1.msra.mxu0 0.0
    %528 = vmatprep.subr.mxu0 0.0
    %529 = vmatpush1.msra.mxu0 0.0
    %530 = vmatprep.mubr.f32.mxu0 0.0
    %531 = vmatmul.mubr.f32.gmra.mrb[0].mxu0 %v464
    %v532 = vpop.f32.mrb[0].mxu0
    %v533 = vadd.f32 0.0, %v532
    %v534 = vpop.f32.mrb[0].mxu0
    %535 = vdwg.mxu0
    %v538 = vunpack.c.l.s4 1966171168
    %v539 = vunpack.c.0.s8 %v538
    %v540 = vlaneseq
    %v541 = vshrl.u32 %v540, 7
    %v542 = vsub.s32 %v539, %v541
    %v543 = vrot.slane %v533, %v542
    %v544 = vcombine.high %v543, %v543
    %v546 = vunpack.c.l.s4 1966171168
    %v547 = vunpack.c.0.s8 %v546
    %v548 = vlaneseq
    %v549 = vshrl.u32 %v548, 7
    %v550 = vsub.s32 %v547, %v549
    %v551 = vrot.slane %v543, %v550
    %v553 = vunpack.c.l.s4 1966171168
    %v554 = vunpack.c.0.s8 %v553
    %v555 = vlaneseq
    %v556 = vshrl.u32 %v555, 7
    %v557 = vsub.s32 %v554, %v556
    %v558 = vrot.slane %v544, %v557
    %v559 = vsel %vm77, %v551, 0
    %v562 = vsel %vm77, %v51, 0
    %564 = vmatprep.subr.mxu0 0.0
    %565 = vmatpush1.xpose.msra.mxu0 %v562
    %566 = vmatprep.subr.mxu0 0.0
    %567 = vmatpush1.xpose.msra.mxu0 0.0
    %568 = vmatprep.subr.mxu0 0.0
    %569 = vmatpush1.xpose.msra.mxu0 0.0
    %570 = vmatprep.subr.mxu0 0.0
    %571 = vmatpush1.xpose.msra.mxu0 0.0
    %572 = vmatprep.subr.mxu0 0.0
    %573 = vmatpush1.xpose.msra.mxu0 0.0
    %574 = vmatprep.subr.mxu0 0.0
    %575 = vmatpush1.xpose.msra.mxu0 0.0
    %576 = vmatprep.subr.mxu0 0.0
    %577 = vmatpush1.xpose.msra.mxu0 0.0
    %578 = vmatprep.subr.mxu0 0.0
    %579 = vmatpush1.xpose.msra.mxu0 0.0
    %580 = vmatprep.subr.mxu0 0.0
    %581 = vmatpush1.xpose.msra.mxu0 0.0
    %582 = vmatprep.subr.mxu0 0.0
    %583 = vmatpush1.xpose.msra.mxu0 0.0
    %584 = vmatprep.subr.mxu0 0.0
    %585 = vmatpush1.xpose.msra.mxu0 0.0
    %586 = vmatprep.subr.mxu0 0.0
    %587 = vmatpush1.xpose.msra.mxu0 0.0
    %588 = vmatprep.subr.mxu0 0.0
    %589 = vmatpush1.xpose.msra.mxu0 0.0
    %590 = vmatprep.subr.mxu0 0.0
    %591 = vmatpush1.xpose.msra.mxu0 0.0
    %592 = vmatprep.subr.mxu0 0.0
    %593 = vmatpush1.xpose.msra.mxu0 0.0
    %594 = vmatprep.subr.mxu0 0.0
    %595 = vmatpush1.xpose.msra.mxu0 0.0
    %596 = vmatprep.subr.mxu0 0.0
    %597 = vmatpush1.xpose.msra.mxu0 0.0
    %598 = vmatprep.subr.mxu0 0.0
    %599 = vmatpush1.xpose.msra.mxu0 0.0
    %600 = vmatprep.subr.mxu0 0.0
    %601 = vmatpush1.xpose.msra.mxu0 0.0
    %602 = vmatprep.subr.mxu0 0.0
    %603 = vmatpush1.xpose.msra.mxu0 0.0
    %604 = vmatprep.subr.mxu0 0.0
    %605 = vmatpush1.xpose.msra.mxu0 0.0
    %606 = vmatprep.subr.mxu0 0.0
    %607 = vmatpush1.xpose.msra.mxu0 0.0
    %608 = vmatprep.subr.mxu0 0.0
    %609 = vmatpush1.xpose.msra.mxu0 0.0
    %610 = vmatprep.subr.mxu0 0.0
    %611 = vmatpush1.xpose.msra.mxu0 0.0
    %612 = vmatprep.subr.mxu0 0.0
    %613 = vmatpush1.xpose.msra.mxu0 0.0
    %614 = vmatprep.subr.mxu0 0.0
    %615 = vmatpush1.xpose.msra.mxu0 0.0
    %616 = vmatprep.subr.mxu0 0.0
    %617 = vmatpush1.xpose.msra.mxu0 0.0
    %618 = vmatprep.subr.mxu0 0.0
    %619 = vmatpush1.xpose.msra.mxu0 0.0
    %620 = vmatprep.subr.mxu0 0.0
    %621 = vmatpush1.xpose.msra.mxu0 0.0
    %622 = vmatprep.subr.mxu0 0.0
    %623 = vmatpush1.xpose.msra.mxu0 0.0
    %624 = vmatprep.subr.mxu0 0.0
    %625 = vmatpush1.xpose.msra.mxu0 0.0
    %626 = vmatprep.subr.mxu0 0.0
    %627 = vmatpush1.xpose.msra.mxu0 0.0
    %628 = vmatprep.mubr.f32.mxu0 0.0
    %629 = vmatmul.mubr.f32.gmra.mrb[0].mxu0 %v559
    %v630 = vpop.f32.mrb[0].mxu0
    %v631 = vadd.f32 0.0, %v630
    %v632 = vpop.f32.mrb[0].mxu0
    %633 = vdwg.mxu0
    %v634 = vsel %vm77, %v558, 0
    %v637 = vsel %vm77, %v52, 0
    %639 = vmatprep.subr.mxu0 0.0
    %640 = vmatpush1.xpose.msra.mxu0 %v637
    %641 = vmatprep.subr.mxu0 0.0
    %642 = vmatpush1.xpose.msra.mxu0 0.0
    %643 = vmatprep.subr.mxu0 0.0
    %644 = vmatpush1.xpose.msra.mxu0 0.0
    %645 = vmatprep.subr.mxu0 0.0
    %646 = vmatpush1.xpose.msra.mxu0 0.0
    %647 = vmatprep.subr.mxu0 0.0
    %648 = vmatpush1.xpose.msra.mxu0 0.0
    %649 = vmatprep.subr.mxu0 0.0
    %650 = vmatpush1.xpose.msra.mxu0 0.0
    %651 = vmatprep.subr.mxu0 0.0
    %652 = vmatpush1.xpose.msra.mxu0 0.0
    %653 = vmatprep.subr.mxu0 0.0
    %654 = vmatpush1.xpose.msra.mxu0 0.0
    %655 = vmatprep.subr.mxu0 0.0
    %656 = vmatpush1.xpose.msra.mxu0 0.0
    %657 = vmatprep.subr.mxu0 0.0
    %658 = vmatpush1.xpose.msra.mxu0 0.0
    %659 = vmatprep.subr.mxu0 0.0
    %660 = vmatpush1.xpose.msra.mxu0 0.0
    %661 = vmatprep.subr.mxu0 0.0
    %662 = vmatpush1.xpose.msra.mxu0 0.0
    %663 = vmatprep.subr.mxu0 0.0
    %664 = vmatpush1.xpose.msra.mxu0 0.0
    %665 = vmatprep.subr.mxu0 0.0
    %666 = vmatpush1.xpose.msra.mxu0 0.0
    %667 = vmatprep.subr.mxu0 0.0
    %668 = vmatpush1.xpose.msra.mxu0 0.0
    %669 = vmatprep.subr.mxu0 0.0
    %670 = vmatpush1.xpose.msra.mxu0 0.0
    %671 = vmatprep.subr.mxu0 0.0
    %672 = vmatpush1.xpose.msra.mxu0 0.0
    %673 = vmatprep.subr.mxu0 0.0
    %674 = vmatpush1.xpose.msra.mxu0 0.0
    %675 = vmatprep.subr.mxu0 0.0
    %676 = vmatpush1.xpose.msra.mxu0 0.0
    %677 = vmatprep.subr.mxu0 0.0
    %678 = vmatpush1.xpose.msra.mxu0 0.0
    %679 = vmatprep.subr.mxu0 0.0
    %680 = vmatpush1.xpose.msra.mxu0 0.0
    %681 = vmatprep.subr.mxu0 0.0
    %682 = vmatpush1.xpose.msra.mxu0 0.0
    %683 = vmatprep.subr.mxu0 0.0
    %684 = vmatpush1.xpose.msra.mxu0 0.0
    %685 = vmatprep.subr.mxu0 0.0
    %686 = vmatpush1.xpose.msra.mxu0 0.0
    %687 = vmatprep.subr.mxu0 0.0
    %688 = vmatpush1.xpose.msra.mxu0 0.0
    %689 = vmatprep.subr.mxu0 0.0
    %690 = vmatpush1.xpose.msra.mxu0 0.0
    %691 = vmatprep.subr.mxu0 0.0
    %692 = vmatpush1.xpose.msra.mxu0 0.0
    %693 = vmatprep.subr.mxu0 0.0
    %694 = vmatpush1.xpose.msra.mxu0 0.0
    %695 = vmatprep.subr.mxu0 0.0
    %696 = vmatpush1.xpose.msra.mxu0 0.0
    %697 = vmatprep.subr.mxu0 0.0
    %698 = vmatpush1.xpose.msra.mxu0 0.0
    %699 = vmatprep.subr.mxu0 0.0
    %700 = vmatpush1.xpose.msra.mxu0 0.0
    %701 = vmatprep.subr.mxu0 0.0
    %702 = vmatpush1.xpose.msra.mxu0 0.0
    %703 = vmatprep.mubr.f32.mxu0 0.0
    %704 = vmatmul.mubr.f32.gmra.mrb[0].mxu0 %v634
    %v705 = vpop.f32.mrb[0].mxu0
    %v706 = vadd.f32 0.0, %v705
    %v707 = vpop.f32.mrb[0].mxu0
    %708 = vdwg.mxu0
    %vm709 = vcmask 24576
    %v710 = vsel %vm709, %v631, -inf
    %711 = vmax.xlane.f32.xlu0 %v710
    %v712 = vpop.xlane.xlu0 %711
    %v713 = vsel %vm709, %v706, -inf
    %714 = vmax.xlane.f32.xlu0 %v713
    %v715 = vpop.xlane.xlu0 %714
    %v716 = vsub.f32 %v631, %v712
    %v717 = vsub.f32 %v706, %v715
    %v718 = vmul.f32 %v716, 1.442695
    %v719 = vpow.pop %v718
    %v720 = vmul.f32 %v717, 1.442695
    %v721 = vpow.pop %v720
    %v722 = vsel %vm709, %v719, 0.0
    %723 = vadd.xlane.f32.xlu0 %v722
    %v724 = vpop.xlane.xlu0 %723
    %v725 = vsel %vm709, %v721, 0.0
    %726 = vadd.xlane.f32.xlu0 %v725
    %v727 = vpop.xlane.xlu0 %726
    %v728 = vrcp.pop %v724
    %v729 = vrcp.pop %v727
    %v730 = vmul.f32 %v719, %v728
    %v731 = vmul.f32 %v721, %v729
    %vm732 = vcmask 31744
    %v734 = vsel %vm732, %v730, 0
    %vm736 = vcmask 1043456
    %v737 = vsel %vm736, %v51, 0
    %739 = vmatprep.subr.mxu0 0.0
    %740 = vmatpush1.msra.mxu0 %v737
    %741 = vmatprep.subr.mxu0 0.0
    %742 = vmatpush1.msra.mxu0 0.0
    %743 = vmatprep.subr.mxu0 0.0
    %744 = vmatpush1.msra.mxu0 0.0
    %745 = vmatprep.subr.mxu0 0.0
    %746 = vmatpush1.msra.mxu0 0.0
    %747 = vmatprep.subr.mxu0 0.0
    %748 = vmatpush1.msra.mxu0 0.0
    %749 = vmatprep.subr.mxu0 0.0
    %750 = vmatpush1.msra.mxu0 0.0
    %751 = vmatprep.subr.mxu0 0.0
    %752 = vmatpush1.msra.mxu0 0.0
    %753 = vmatprep.subr.mxu0 0.0
    %754 = vmatpush1.msra.mxu0 0.0
    %755 = vmatprep.subr.mxu0 0.0
    %756 = vmatpush1.msra.mxu0 0.0
    %757 = vmatprep.subr.mxu0 0.0
    %758 = vmatpush1.msra.mxu0 0.0
    %759 = vmatprep.subr.mxu0 0.0
    %760 = vmatpush1.msra.mxu0 0.0
    %761 = vmatprep.subr.mxu0 0.0
    %762 = vmatpush1.msra.mxu0 0.0
    %763 = vmatprep.subr.mxu0 0.0
    %764 = vmatpush1.msra.mxu0 0.0
    %765 = vmatprep.subr.mxu0 0.0
    %766 = vmatpush1.msra.mxu0 0.0
    %767 = vmatprep.subr.mxu0 0.0
    %768 = vmatpush1.msra.mxu0 0.0
    %769 = vmatprep.subr.mxu0 0.0
    %770 = vmatpush1.msra.mxu0 0.0
    %771 = vmatprep.subr.mxu0 0.0
    %772 = vmatpush1.msra.mxu0 0.0
    %773 = vmatprep.subr.mxu0 0.0
    %774 = vmatpush1.msra.mxu0 0.0
    %775 = vmatprep.subr.mxu0 0.0
    %776 = vmatpush1.msra.mxu0 0.0
    %777 = vmatprep.subr.mxu0 0.0
    %778 = vmatpush1.msra.mxu0 0.0
    %779 = vmatprep.subr.mxu0 0.0
    %780 = vmatpush1.msra.mxu0 0.0
    %781 = vmatprep.subr.mxu0 0.0
    %782 = vmatpush1.msra.mxu0 0.0
    %783 = vmatprep.subr.mxu0 0.0
    %784 = vmatpush1.msra.mxu0 0.0
    %785 = vmatprep.subr.mxu0 0.0
    %786 = vmatpush1.msra.mxu0 0.0
    %787 = vmatprep.subr.mxu0 0.0
    %788 = vmatpush1.msra.mxu0 0.0
    %789 = vmatprep.subr.mxu0 0.0
    %790 = vmatpush1.msra.mxu0 0.0
    %791 = vmatprep.subr.mxu0 0.0
    %792 = vmatpush1.msra.mxu0 0.0
    %793 = vmatprep.subr.mxu0 0.0
    %794 = vmatpush1.msra.mxu0 0.0
    %795 = vmatprep.subr.mxu0 0.0
    %796 = vmatpush1.msra.mxu0 0.0
    %797 = vmatprep.subr.mxu0 0.0
    %798 = vmatpush1.msra.mxu0 0.0
    %799 = vmatprep.subr.mxu0 0.0
    %800 = vmatpush1.msra.mxu0 0.0
    %801 = vmatprep.subr.mxu0 0.0
    %802 = vmatpush1.msra.mxu0 0.0
    %803 = vmatprep.mubr.f32.mxu0 0.0
    %804 = vmatmul.mubr.f32.gmra.mrb[0].mxu0 %v734
    %v805 = vpop.f32.mrb[0].mxu0
    %v806 = vadd.f32 0.0, %v805
    %v807 = vpop.f32.mrb[0].mxu0
    %808 = vdwg.mxu0
    %v810 = vsel %vm732, %v731, 0
    %v812 = vsel %vm736, %v52, 0
    %814 = vmatprep.subr.mxu0 0.0
    %815 = vmatpush1.msra.mxu0 %v812
    %816 = vmatprep.subr.mxu0 0.0
    %817 = vmatpush1.msra.mxu0 0.0
    %818 = vmatprep.subr.mxu0 0.0
    %819 = vmatpush1.msra.mxu0 0.0
    %820 = vmatprep.subr.mxu0 0.0
    %821 = vmatpush1.msra.mxu0 0.0
    %822 = vmatprep.subr.mxu0 0.0
    %823 = vmatpush1.msra.mxu0 0.0
    %824 = vmatprep.subr.mxu0 0.0
    %825 = vmatpush1.msra.mxu0 0.0
    %826 = vmatprep.subr.mxu0 0.0
    %827 = vmatpush1.msra.mxu0 0.0
    %828 = vmatprep.subr.mxu0 0.0
    %829 = vmatpush1.msra.mxu0 0.0
    %830 = vmatprep.subr.mxu0 0.0
    %831 = vmatpush1.msra.mxu0 0.0
    %832 = vmatprep.subr.mxu0 0.0
    %833 = vmatpush1.msra.mxu0 0.0
    %834 = vmatprep.subr.mxu0 0.0
    %835 = vmatpush1.msra.mxu0 0.0
    %836 = vmatprep.subr.mxu0 0.0
    %837 = vmatpush1.msra.mxu0 0.0
    %838 = vmatprep.subr.mxu0 0.0
    %839 = vmatpush1.msra.mxu0 0.0
    %840 = vmatprep.subr.mxu0 0.0
    %841 = vmatpush1.msra.mxu0 0.0
    %842 = vmatprep.subr.mxu0 0.0
    %843 = vmatpush1.msra.mxu0 0.0
    %844 = vmatprep.subr.mxu0 0.0
    %845 = vmatpush1.msra.mxu0 0.0
    %846 = vmatprep.subr.mxu0 0.0
    %847 = vmatpush1.msra.mxu0 0.0
    %848 = vmatprep.subr.mxu0 0.0
    %849 = vmatpush1.msra.mxu0 0.0
    %850 = vmatprep.subr.mxu0 0.0
    %851 = vmatpush1.msra.mxu0 0.0
    %852 = vmatprep.subr.mxu0 0.0
    %853 = vmatpush1.msra.mxu0 0.0
    %854 = vmatprep.subr.mxu0 0.0
    %855 = vmatpush1.msra.mxu0 0.0
    %856 = vmatprep.subr.mxu0 0.0
    %857 = vmatpush1.msra.mxu0 0.0
    %858 = vmatprep.subr.mxu0 0.0
    %859 = vmatpush1.msra.mxu0 0.0
    %860 = vmatprep.subr.mxu0 0.0
    %861 = vmatpush1.msra.mxu0 0.0
    %862 = vmatprep.subr.mxu0 0.0
    %863 = vmatpush1.msra.mxu0 0.0
    %864 = vmatprep.subr.mxu0 0.0
    %865 = vmatpush1.msra.mxu0 0.0
    %866 = vmatprep.subr.mxu0 0.0
    %867 = vmatpush1.msra.mxu0 0.0
    %868 = vmatprep.subr.mxu0 0.0
    %869 = vmatpush1.msra.mxu0 0.0
    %870 = vmatprep.subr.mxu0 0.0
    %871 = vmatpush1.msra.mxu0 0.0
    %872 = vmatprep.subr.mxu0 0.0
    %873 = vmatpush1.msra.mxu0 0.0
    %874 = vmatprep.subr.mxu0 0.0
    %875 = vmatpush1.msra.mxu0 0.0
    %876 = vmatprep.subr.mxu0 0.0
    %877 = vmatpush1.msra.mxu0 0.0
    %878 = vmatprep.mubr.f32.mxu0 0.0
    %879 = vmatmul.mubr.f32.gmra.mrb[0].mxu0 %v810
    %v880 = vpop.f32.mrb[0].mxu0
    %v881 = vadd.f32 0.0, %v880
    %v882 = vpop.f32.mrb[0].mxu0
    %883 = vdwg.mxu0
    %v886 = vrot.slane %v881, 7
    %v887 = vsel %vm460, %v886, %v806
    %v888 = vsel %vm77, %v887, 0
    %890 = vmatprep.subr.mxu0 0.0
    %891 = vmatpush1.msra.mxu0 %v61
    %892 = vmatprep.subr.mxu0 0.0
    %893 = vmatpush1.msra.mxu0 %v62
    %894 = vmatprep.subr.mxu0 0.0
    %895 = vmatpush1.msra.mxu0 %v63
    %896 = vmatprep.subr.mxu0 0.0
    %897 = vmatpush1.msra.mxu0 %v64
    %898 = vmatprep.subr.mxu0 0.0
    %899 = vmatpush1.msra.mxu0 0.0
    %900 = vmatprep.subr.mxu0 0.0
    %901 = vmatpush1.msra.mxu0 0.0
    %902 = vmatprep.subr.mxu0 0.0
    %903 = vmatpush1.msra.mxu0 0.0
    %904 = vmatprep.subr.mxu0 0.0
    %905 = vmatpush1.msra.mxu0 0.0
    %906 = vmatprep.subr.mxu0 0.0
    %907 = vmatpush1.msra.mxu0 0.0
    %908 = vmatprep.subr.mxu0 0.0
    %909 = vmatpush1.msra.mxu0 0.0
    %910 = vmatprep.subr.mxu0 0.0
    %911 = vmatpush1.msra.mxu0 0.0
    %912 = vmatprep.subr.mxu0 0.0
    %913 = vmatpush1.msra.mxu0 0.0
    %914 = vmatprep.subr.mxu0 0.0
    %915 = vmatpush1.msra.mxu0 0.0
    %916 = vmatprep.subr.mxu0 0.0
    %917 = vmatpush1.msra.mxu0 0.0
    %918 = vmatprep.subr.mxu0 0.0
    %919 = vmatpush1.msra.mxu0 0.0
    %920 = vmatprep.subr.mxu0 0.0
    %921 = vmatpush1.msra.mxu0 0.0
    %922 = vmatprep.subr.mxu0 0.0
    %923 = vmatpush1.msra.mxu0 0.0
    %924 = vmatprep.subr.mxu0 0.0
    %925 = vmatpush1.msra.mxu0 0.0
    %926 = vmatprep.subr.mxu0 0.0
    %927 = vmatpush1.msra.mxu0 0.0
    %928 = vmatprep.subr.mxu0 0.0
    %929 = vmatpush1.msra.mxu0 0.0
    %930 = vmatprep.subr.mxu0 0.0
    %931 = vmatpush1.msra.mxu0 0.0
    %932 = vmatprep.subr.mxu0 0.0
    %933 = vmatpush1.msra.mxu0 0.0
    %934 = vmatprep.subr.mxu0 0.0
    %935 = vmatpush1.msra.mxu0 0.0
    %936 = vmatprep.subr.mxu0 0.0
    %937 = vmatpush1.msra.mxu0 0.0
    %938 = vmatprep.subr.mxu0 0.0
    %939 = vmatpush1.msra.mxu0 0.0
    %940 = vmatprep.subr.mxu0 0.0
    %941 = vmatpush1.msra.mxu0 0.0
    %942 = vmatprep.subr.mxu0 0.0
    %943 = vmatpush1.msra.mxu0 0.0
    %944 = vmatprep.subr.mxu0 0.0
    %945 = vmatpush1.msra.mxu0 0.0
    %946 = vmatprep.subr.mxu0 0.0
    %947 = vmatpush1.msra.mxu0 0.0
    %948 = vmatprep.subr.mxu0 0.0
    %949 = vmatpush1.msra.mxu0 0.0
    %950 = vmatprep.subr.mxu0 0.0
    %951 = vmatpush1.msra.mxu0 0.0
    %952 = vmatprep.subr.mxu0 0.0
    %953 = vmatpush1.msra.mxu0 0.0
    %954 = vmatprep.mubr.f32.mxu0 0.0
    %955 = vmatmul.mubr.f32.gmra.mrb[0].mxu0 %v888
    %v956 = vpop.f32.mrb[0].mxu0
    %v957 = vadd.f32 0.0, %v956
    %v958 = vpop.f32.mrb[0].mxu0
    %959 = vdwg.mxu0
    %960 = vmatprep.subr.mxu0 0.0
    %961 = vmatpush1.msra.mxu0 %v57
    %962 = vmatprep.subr.mxu0 0.0
    %963 = vmatpush1.msra.mxu0 %v58
    %964 = vmatprep.subr.mxu0 0.0
    %965 = vmatpush1.msra.mxu0 %v59
    %966 = vmatprep.subr.mxu0 0.0
    %967 = vmatpush1.msra.mxu0 %v60
    %968 = vmatprep.subr.mxu0 0.0
    %969 = vmatpush1.msra.mxu0 0.0
    %970 = vmatprep.subr.mxu0 0.0
    %971 = vmatpush1.msra.mxu0 0.0
    %972 = vmatprep.subr.mxu0 0.0
    %973 = vmatpush1.msra.mxu0 0.0
    %974 = vmatprep.subr.mxu0 0.0
    %975 = vmatpush1.msra.mxu0 0.0
    %976 = vmatprep.subr.mxu0 0.0
    %977 = vmatpush1.msra.mxu0 0.0
    %978 = vmatprep.subr.mxu0 0.0
    %979 = vmatpush1.msra.mxu0 0.0
    %980 = vmatprep.subr.mxu0 0.0
    %981 = vmatpush1.msra.mxu0 0.0
    %982 = vmatprep.subr.mxu0 0.0
    %983 = vmatpush1.msra.mxu0 0.0
    %984 = vmatprep.subr.mxu0 0.0
    %985 = vmatpush1.msra.mxu0 0.0
    %986 = vmatprep.subr.mxu0 0.0
    %987 = vmatpush1.msra.mxu0 0.0
    %988 = vmatprep.subr.mxu0 0.0
    %989 = vmatpush1.msra.mxu0 0.0
    %990 = vmatprep.subr.mxu0 0.0
    %991 = vmatpush1.msra.mxu0 0.0
    %992 = vmatprep.subr.mxu0 0.0
    %993 = vmatpush1.msra.mxu0 0.0
    %994 = vmatprep.subr.mxu0 0.0
    %995 = vmatpush1.msra.mxu0 0.0
    %996 = vmatprep.subr.mxu0 0.0
    %997 = vmatpush1.msra.mxu0 0.0
    %998 = vmatprep.subr.mxu0 0.0
    %999 = vmatpush1.msra.mxu0 0.0
    %1000 = vmatprep.subr.mxu0 0.0
    %1001 = vmatpush1.msra.mxu0 0.0
    %1002 = vmatprep.subr.mxu0 0.0
    %1003 = vmatpush1.msra.mxu0 0.0
    %1004 = vmatprep.subr.mxu0 0.0
    %1005 = vmatpush1.msra.mxu0 0.0
    %1006 = vmatprep.subr.mxu0 0.0
    %1007 = vmatpush1.msra.mxu0 0.0
    %1008 = vmatprep.subr.mxu0 0.0
    %1009 = vmatpush1.msra.mxu0 0.0
    %1010 = vmatprep.subr.mxu0 0.0
    %1011 = vmatpush1.msra.mxu0 0.0
    %1012 = vmatprep.subr.mxu0 0.0
    %1013 = vmatpush1.msra.mxu0 0.0
    %1014 = vmatprep.subr.mxu0 0.0
    %1015 = vmatpush1.msra.mxu0 0.0
    %1016 = vmatprep.subr.mxu0 0.0
    %1017 = vmatpush1.msra.mxu0 0.0
    %1018 = vmatprep.subr.mxu0 0.0
    %1019 = vmatpush1.msra.mxu0 0.0
    %1020 = vmatprep.subr.mxu0 0.0
    %1021 = vmatpush1.msra.mxu0 0.0
    %1022 = vmatprep.subr.mxu0 0.0
    %1023 = vmatpush1.msra.mxu0 0.0
    %1024 = vmatprep.mubr.f32.mxu0 0.0
    %1025 = vmatmul.mubr.f32.gmra.mrb[0].mxu0 %v464
    %v1026 = vpop.f32.mrb[0].mxu0
    %v1027 = vadd.f32 %v957, %v1026
    %v1028 = vpop.f32.mrb[0].mxu0
    %1029 = vdwg.mxu0
    %v1030 = vtanh.pop %v1027
    %v1032 = vlaneseq
    %v1033 = vshrl.u32 %v1032, 7
    %v1034 = vsub.s32 0, %v1033
    %v1035 = vrot.slane %v69, %v1034
    %v1038 = vsel %vm77, %v1030, 0
    %1040 = vmatprep.subr.mxu0 0.0
    %1041 = vmatpush1.msra.mxu0 %v65
    %1042 = vmatprep.subr.mxu0 0.0
    %1043 = vmatpush1.msra.mxu0 %v66
    %1044 = vmatprep.subr.mxu0 0.0
    %1045 = vmatpush1.msra.mxu0 %v67
    %1046 = vmatprep.subr.mxu0 0.0
    %1047 = vmatpush1.msra.mxu0 %v68
    %1048 = vmatprep.subr.mxu0 0.0
    %1049 = vmatpush1.msra.mxu0 0.0
    %1050 = vmatprep.subr.mxu0 0.0
    %1051 = vmatpush1.msra.mxu0 0.0
    %1052 = vmatprep.subr.mxu0 0.0
    %1053 = vmatpush1.msra.mxu0 0.0
    %1054 = vmatprep.subr.mxu0 0.0
    %1055 = vmatpush1.msra.mxu0 0.0
    %1056 = vmatprep.subr.mxu0 0.0
    %1057 = vmatpush1.msra.mxu0 0.0
    %1058 = vmatprep.subr.mxu0 0.0
    %1059 = vmatpush1.msra.mxu0 0.0
    %1060 = vmatprep.subr.mxu0 0.0
    %1061 = vmatpush1.msra.mxu0 0.0
    %1062 = vmatprep.subr.mxu0 0.0
    %1063 = vmatpush1.msra.mxu0 0.0
    %1064 = vmatprep.subr.mxu0 0.0
    %1065 = vmatpush1.msra.mxu0 0.0
    %1066 = vmatprep.subr.mxu0 0.0
    %1067 = vmatpush1.msra.mxu0 0.0
    %1068 = vmatprep.subr.mxu0 0.0
    %1069 = vmatpush1.msra.mxu0 0.0
    %1070 = vmatprep.subr.mxu0 0.0
    %1071 = vmatpush1.msra.mxu0 0.0
    %1072 = vmatprep.subr.mxu0 0.0
    %1073 = vmatpush1.msra.mxu0 0.0
    %1074 = vmatprep.subr.mxu0 0.0
    %1075 = vmatpush1.msra.mxu0 0.0
    %1076 = vmatprep.subr.mxu0 0.0
    %1077 = vmatpush1.msra.mxu0 0.0
    %1078 = vmatprep.subr.mxu0 0.0
    %1079 = vmatpush1.msra.mxu0 0.0
    %1080 = vmatprep.subr.mxu0 0.0
    %1081 = vmatpush1.msra.mxu0 0.0
    %1082 = vmatprep.subr.mxu0 0.0
    %1083 = vmatpush1.msra.mxu0 0.0
    %1084 = vmatprep.subr.mxu0 0.0
    %1085 = vmatpush1.msra.mxu0 0.0
    %1086 = vmatprep.subr.mxu0 0.0
    %1087 = vmatpush1.msra.mxu0 0.0
    %1088 = vmatprep.subr.mxu0 0.0
    %1089 = vmatpush1.msra.mxu0 0.0
    %1090 = vmatprep.subr.mxu0 0.0
    %1091 = vmatpush1.msra.mxu0 0.0
    %1092 = vmatprep.subr.mxu0 0.0
    %1093 = vmatpush1.msra.mxu0 0.0
    %1094 = vmatprep.subr.mxu0 0.0
    %1095 = vmatpush1.msra.mxu0 0.0
    %1096 = vmatprep.subr.mxu0 0.0
    %1097 = vmatpush1.msra.mxu0 0.0
    %1098 = vmatprep.subr.mxu0 0.0
    %1099 = vmatpush1.msra.mxu0 0.0
    %1100 = vmatprep.subr.mxu0 0.0
    %1101 = vmatpush1.msra.mxu0 0.0
    %1102 = vmatprep.subr.mxu0 0.0
    %1103 = vmatpush1.msra.mxu0 0.0
    %1104 = vmatprep.mubr.f32.mxu0 0.0
    %1105 = vmatmul.mubr.f32.gmra.mrb[0].mxu0 %v1038
    %v1106 = vpop.f32.mrb[0].mxu0
    %v1107 = vadd.f32 %v1035, %v1106
    %v1108 = vpop.f32.mrb[0].mxu0
    %1109 = vdwg.mxu0
    %v1112 = vunpack.c.l.s4 1966171168
    %v1113 = vunpack.c.0.s8 %v1112
    %v1114 = vlaneseq
    %v1115 = vshrl.u32 %v1114, 7
    %v1116 = vsub.s32 %v1113, %v1115
    %v1117 = vrot.slane %v1107, %v1116
    %v1118 = vcombine.high %v1117, %v1117
    %v1120 = vunpack.c.l.s4 1966171168
    %v1121 = vunpack.c.0.s8 %v1120
    %v1122 = vlaneseq
    %v1123 = vshrl.u32 %v1122, 7
    %v1124 = vsub.s32 %v1121, %v1123
    %v1125 = vrot.slane %v1117, %v1124
    %v1127 = vunpack.c.l.s4 1966171168
    %v1128 = vunpack.c.0.s8 %v1127
    %v1129 = vlaneseq
    %v1130 = vshrl.u32 %v1129, 7
    %v1131 = vsub.s32 %v1128, %v1130
    %v1132 = vrot.slane %v1118, %v1131
    %s1135 = scalar_lea.vmem %s11, %s232
    %1136 = vst [vmem:[%s1135] sm:$0x1] %v1125
    %1137 = vst [vmem:[%s1135 + $0x8] sm:$0x1] %v1132
    %v1141 = vrot.slane %v444, 7
    %v1142 = vsel %vm460, %v1141, %v443
    %1143 = vrot.lane.b32.xlu0 %v1142, 96
    %v1144 = vpop.permute.xlu0 %1143
  $region50: #{forward.9} parent=0 // loop_footer
    %s236 = sadd.s32 1, %s232
  $region51: #{forward.9} parent=0 // loop_footer_branch
    %231 = sbr.rel target = $region47
  $region52: #{forward.9} parent=0 // loop_exit
    _
  // Predicated region
  $region53: #{forward.9} parent=0 // pred_check
    _
  $region54: #{forward.9} parent=0 // pred_check_branch
    %1147 = sbr.rel (0) target = $region56
  $region55: #{forward.9} parent=0 // pred_region
    _
  $region56: #{forward.9} parent=0 // pred_fallthru
    _
  // Predicated region
  $region57: #{forward.9} parent=0 // pred_check
    _
  $region58: #{forward.9} parent=0 // pred_check_branch
    %1149 = sbr.rel (0) target = $region60
  $region59: #{forward.9} parent=0 // pred_region
    _
  $region60: #{forward.9} parent=0 // pred_fallthru
    _

</llo_original>
